<compile_context>
chip_gen: v5e
topology: v5e:2x2
jax: 0.10.0
libtpu: 0.0.40
codegen_flags: <defaults>
</compile_context>

<pallas_src>
import functools

import jax
import jax.numpy as jnp
from jax.experimental import pallas as pl
from jax.experimental.pallas import tpu as pltpu


def _conv_out(n, k=3, s=2):
    return (n - k) // s + 1


def _fused_conv_kernel(xd_ref, w1_ref, w2_ref, o_ref, p1_ref, y1_ref, p2_ref, *,
                       Hh, Wh, Cin, dim, Ho1, Wo1, Ho2, Wo2):
    """One batch element per grid step.

    xd_ref : (1, 4*Hh, Wh, Cin) bf16 space-to-depth input; row ((p*2+q)*Hh + hh)
             holds x[2*hh + p, 2*wh + q, :].
    w1_ref : (9*Cin, dim) bf16, VMEM-resident across grid steps.
    w2_ref : (9*dim, dim) bf16, VMEM-resident across grid steps.
    o_ref  : (1, Ho2*Wo2, dim) f32.
    p1_ref : (Ho1*Wo1, 9*Cin) bf16 scratch  (conv1 patches, VMEM only).
    y1_ref : (Ho1*Wo1, dim)   bf16 scratch  (layer-1 activation, VMEM only).
    p2_ref : (Ho2*Wo2, 9*dim) bf16 scratch  (conv2 patches, VMEM only).
    """
    # ---- conv1 im2col: static contiguous slices out of the space-to-depth input ----
    for oh in range(Ho1):
        for i in range(3):
            for j in range(3):
                t = i * 3 + j
                r = ((i & 1) * 2 + (j & 1)) * Hh + (oh + i // 2)
                # slab[ow, c] == x[2*oh + i, 2*ow + j, c]  for ow in [0, Wo1)
                p1_ref[oh * Wo1:(oh + 1) * Wo1, t * Cin:(t + 1) * Cin] = (
                    xd_ref[0, r, j // 2:j // 2 + Wo1, :])

    # ---- conv1 matmul on the MXU (bf16 x bf16 -> f32 accumulate) ----
    y1_ref[...] = jnp.dot(
        p1_ref[...], w1_ref[...], preferred_element_type=jnp.float32
    ).astype(jnp.bfloat16)

    # ---- conv2 im2col: 3x3 / stride-2 gather from the VMEM-resident y1 ----
    for oh2 in range(Ho2):
        for ow2 in range(Wo2):
            m = oh2 * Wo2 + ow2
            for i in range(3):
                for j in range(3):
                    t = i * 3 + j
                    r = (2 * oh2 + i) * Wo1 + (2 * ow2 + j)
                    p2_ref[m:m + 1, t * dim:(t + 1) * dim] = y1_ref[r:r + 1, :]

    # ---- conv2 matmul; f32 result written once (model output boundary) ----
    o_ref[0] = jnp.dot(
        p2_ref[...], w2_ref[...], preferred_element_type=jnp.float32
    ).astype(o_ref.dtype)


def fused_conv2x(x_nchw, w1_mat, w2_mat, dim):
    B, Cin, H, W = x_nchw.shape
    Ho1, Wo1 = _conv_out(H), _conv_out(W)
    Ho2, Wo2 = _conv_out(Ho1), _conv_out(Wo1)
    Hh, Wh = (H + 1) // 2, (W + 1) // 2
    M2 = Ho2 * Wo2

    # Single NCHW->NHWC transpose + bf16 cast + stride-2 space-to-depth permutation.
    # Pure layout work on the raw input (same byte count as x), fused by XLA into one
    # copy; NO im2col blow-up ever hits HBM.
    x = jnp.transpose(x_nchw, (0, 2, 3, 1)).astype(jnp.bfloat16)
    x = jnp.pad(x, ((0, 0), (0, 2 * Hh - H), (0, 2 * Wh - W), (0, 0)))
    xd = x.reshape(B, Hh, 2, Wh, 2, Cin).transpose(0, 2, 4, 1, 3, 5)
    xd = xd.reshape(B, 4 * Hh, Wh, Cin)

    kernel = functools.partial(
        _fused_conv_kernel, Hh=Hh, Wh=Wh, Cin=Cin, dim=dim,
        Ho1=Ho1, Wo1=Wo1, Ho2=Ho2, Wo2=Wo2)

    flops = 2 * B * (Ho1 * Wo1 * 9 * Cin * dim + M2 * 9 * dim * dim)
    bytes_accessed = (xd.size * 2 + w1_mat.size * 2 + w2_mat.size * 2
                      + B * M2 * dim * 4)

    out = pl.pallas_call(
        kernel,
        out_shape=jax.ShapeDtypeStruct((B, M2, dim), jnp.float32),
        grid_spec=pltpu.PrefetchScalarGridSpec(
            num_scalar_prefetch=0,
            grid=(B,),  # >= 2 steps -> megacore sharding on v7x
            in_specs=[
                pl.BlockSpec((1, 4 * Hh, Wh, Cin), lambda b: (b, 0, 0, 0)),
                pl.BlockSpec((9 * Cin, dim), lambda b: (0, 0)),   # resident weights
                pl.BlockSpec((9 * dim, dim), lambda b: (0, 0)),   # resident weights
            ],
            out_specs=pl.BlockSpec((1, M2, dim), lambda b: (b, 0, 0)),
            scratch_shapes=[
                pltpu.VMEM((Ho1 * Wo1, 9 * Cin), jnp.bfloat16),   # conv1 patches
                pltpu.VMEM((Ho1 * Wo1, dim), jnp.bfloat16),       # resident y1
                pltpu.VMEM((M2, 9 * dim), jnp.bfloat16),          # conv2 patches
            ],
        ),
        compiler_params=pltpu.CompilerParams(
            dimension_semantics=("parallel",),
            vmem_limit_bytes=32 * 1024 * 1024,  # headroom on v5e (16 MiB scoped default)
        ),
        cost_estimate=pl.CostEstimate(
            flops=flops, transcendentals=0, bytes_accessed=bytes_accessed),
    )(xd, w1_mat, w2_mat)

    # [B, Ho2*Wo2, dim] -> NCHW. Tiny final transpose at the model boundary.
    return jnp.transpose(out.reshape(B, Ho2, Wo2, dim), (0, 3, 1, 2))


class MyModelConv2dPallas:
    def __init__(self, dim=32, key=jax.random.PRNGKey(42)):
        k1, k2 = jax.random.split(key)
        self.dim = dim
        # Deterministic synthetic weights (PyTorch OIHW layout), no bias. f32 originals
        # kept for the reference check; bf16 [K, Cout] matmul weights built once, in
        # (kh, kw, cin) row order matching the in-kernel patch layout. No K padding:
        # the patch matrices live only in VMEM scratch.
        self.w1 = jax.random.normal(k1, (dim, 3, 3, 3), dtype=jnp.float32) * 0.1
        self.w2 = jax.random.normal(k2, (dim, dim, 3, 3), dtype=jnp.float32) * 0.05
        self.w1_mat = jnp.transpose(self.w1, (2, 3, 1, 0)).reshape(
            9 * 3, dim).astype(jnp.bfloat16)
        self.w2_mat = jnp.transpose(self.w2, (2, 3, 1, 0)).reshape(
            9 * dim, dim).astype(jnp.bfloat16)

    @functools.partial(jax.jit, static_argnums=0)
    def __call__(self, x_nchw):
        # torch._dynamo.graph_break() in the original is a compile-time hint only —
        # no runtime effect, so the two convs are legal to fuse.
        return fused_conv2x(x_nchw, self.w1_mat, self.w2_mat, self.dim)


def _reference(x, w1, w2):
    dn = jax.lax.conv_dimension_numbers(x.shape, w1.shape, ("NCHW", "OIHW", "NCHW"))
    y = jax.lax.conv_general_dilated(x, w1, (2, 2), "VALID", dimension_numbers=dn)
    dn2 = jax.lax.conv_dimension_numbers(y.shape, w2.shape, ("NCHW", "OIHW", "NCHW"))
    return jax.lax.conv_general_dilated(y, w2, (2, 2), "VALID", dimension_numbers=dn2)


if __name__ == "__main__":
    key = jax.random.PRNGKey(0)
    # Small shapes consistent with the module: NCHW, 3 input channels, dim=32.
    x = jax.random.normal(key, (2, 3, 16, 16), dtype=jnp.float32)

    model = MyModelConv2dPallas(dim=32)
    out = model(x)
    out = jax.block_until_ready(out)

    # Sanity check against the f32 XLA reference convs (bf16 MXU inputs -> looser tol).
    ref = _reference(x, model.w1, model.w2)
    assert out.shape == (2, 32, 3, 3), out.shape
    assert jnp.allclose(out, ref, atol=5e-2, rtol=5e-2), float(
        jnp.max(jnp.abs(out - ref))
    )

    print("KERNEL_OK")
</pallas_src>

<mosaic_0001>
module attributes {stable_mosaic.version = 11 : i64} {
  func.func @_fused_conv_kernel(%arg0: i32, %arg1: memref<1x32x8x3xbf16, #tpu.memory_space<vmem>>, %arg2: memref<27x32xbf16, #tpu.memory_space<vmem>>, %arg3: memref<288x32xbf16, #tpu.memory_space<vmem>>, %arg4: memref<1x9x32xf32, #tpu.memory_space<vmem>>, %arg5: memref<49x27xbf16, #tpu.memory_space<vmem>>, %arg6: memref<49x32xbf16, #tpu.memory_space<vmem>>, %arg7: memref<9x288xbf16, #tpu.memory_space<vmem>>) attributes {dimension_semantics = [#tpu.dimension_semantics<parallel>], iteration_bounds = array<i64: 2>, scalar_prefetch = 0 : i64, scratch_operands = 3 : i64, tpu.core_type = #tpu.core_type<tc>, window_params = [{transform_indices = @transform_0, window_bounds = array<i64: 1, 32, 8, 3>}, {pipeline_mode = #tpu.pipeline_mode<synchronous>, transform_indices = @transform_1, window_bounds = array<i64: 27, 32>}, {pipeline_mode = #tpu.pipeline_mode<synchronous>, transform_indices = @transform_2, window_bounds = array<i64: 288, 32>}, {transform_indices = @transform_3, window_bounds = array<i64: 1, 9, 32>}]} {
    %c0 = arith.constant 0 : index
    %c0_0 = arith.constant 0 : index
    %c0_1 = arith.constant 0 : index
    %c0_2 = arith.constant 0 : index
    %0 = vector.load %arg1[%c0, %c0_0, %c0_1, %c0_2] : memref<1x32x8x3xbf16, #tpu.memory_space<vmem>>, vector<1x1x7x3xbf16>
    %1 = vector.shape_cast %0 : vector<1x1x7x3xbf16> to vector<7x3xbf16>
    %c0_3 = arith.constant 0 : index
    %c0_4 = arith.constant 0 : index
    %2 = vector.load %arg5[%c0_3, %c0_4] : memref<49x27xbf16, #tpu.memory_space<vmem>>, vector<7x3xbf16>
    tpu.vector_store %arg5[%c0_3, %c0_4], %1 {strides = array<i32>} : memref<49x27xbf16, #tpu.memory_space<vmem>>, vector<7x3xbf16>,
    %c0_5 = arith.constant 0 : index
    %c8 = arith.constant 8 : index
    %c0_6 = arith.constant 0 : index
    %c0_7 = arith.constant 0 : index
    %3 = vector.load %arg1[%c0_5, %c8, %c0_6, %c0_7] : memref<1x32x8x3xbf16, #tpu.memory_space<vmem>>, vector<1x1x7x3xbf16>
    %4 = vector.shape_cast %3 : vector<1x1x7x3xbf16> to vector<7x3xbf16>
    %c0_8 = arith.constant 0 : index
    %c3 = arith.constant 3 : index
    %5 = vector.load %arg5[%c0_8, %c3] : memref<49x27xbf16, #tpu.memory_space<vmem>>, vector<7x3xbf16>
    tpu.vector_store %arg5[%c0_8, %c3], %4 {strides = array<i32>} : memref<49x27xbf16, #tpu.memory_space<vmem>>, vector<7x3xbf16>,
    %c0_9 = arith.constant 0 : index
    %c0_10 = arith.constant 0 : index
    %c1 = arith.constant 1 : index
    %c0_11 = arith.constant 0 : index
    %6 = vector.load %arg1[%c0_9, %c0_10, %c1, %c0_11] : memref<1x32x8x3xbf16, #tpu.memory_space<vmem>>, vector<1x1x7x3xbf16>
    %7 = vector.shape_cast %6 : vector<1x1x7x3xbf16> to vector<7x3xbf16>
    %c0_12 = arith.constant 0 : index
    %c6 = arith.constant 6 : index
    %8 = vector.load %arg5[%c0_12, %c6] : memref<49x27xbf16, #tpu.memory_space<vmem>>, vector<7x3xbf16>
    tpu.vector_store %arg5[%c0_12, %c6], %7 {strides = array<i32>} : memref<49x27xbf16, #tpu.memory_space<vmem>>, vector<7x3xbf16>,
    %c0_13 = arith.constant 0 : index
    %c16 = arith.constant 16 : index
    %c0_14 = arith.constant 0 : index
    %c0_15 = arith.constant 0 : index
    %9 = vector.load %arg1[%c0_13, %c16, %c0_14, %c0_15] : memref<1x32x8x3xbf16, #tpu.memory_space<vmem>>, vector<1x1x7x3xbf16>
    %10 = vector.shape_cast %9 : vector<1x1x7x3xbf16> to vector<7x3xbf16>
    %c0_16 = arith.constant 0 : index
    %c9 = arith.constant 9 : index
    %11 = vector.load %arg5[%c0_16, %c9] : memref<49x27xbf16, #tpu.memory_space<vmem>>, vector<7x3xbf16>
    tpu.vector_store %arg5[%c0_16, %c9], %10 {strides = array<i32>} : memref<49x27xbf16, #tpu.memory_space<vmem>>, vector<7x3xbf16>,
    %c0_17 = arith.constant 0 : index
    %c24 = arith.constant 24 : index
    %c0_18 = arith.constant 0 : index
    %c0_19 = arith.constant 0 : index
    %12 = vector.load %arg1[%c0_17, %c24, %c0_18, %c0_19] : memref<1x32x8x3xbf16, #tpu.memory_space<vmem>>, vector<1x1x7x3xbf16>
    %13 = vector.shape_cast %12 : vector<1x1x7x3xbf16> to vector<7x3xbf16>
    %c0_20 = arith.constant 0 : index
    %c12 = arith.constant 12 : index
    %14 = vector.load %arg5[%c0_20, %c12] : memref<49x27xbf16, #tpu.memory_space<vmem>>, vector<7x3xbf16>
    tpu.vector_store %arg5[%c0_20, %c12], %13 {strides = array<i32>} : memref<49x27xbf16, #tpu.memory_space<vmem>>, vector<7x3xbf16>,
    %c0_21 = arith.constant 0 : index
    %c16_22 = arith.constant 16 : index
    %c1_23 = arith.constant 1 : index
    %c0_24 = arith.constant 0 : index
    %15 = vector.load %arg1[%c0_21, %c16_22, %c1_23, %c0_24] : memref<1x32x8x3xbf16, #tpu.memory_space<vmem>>, vector<1x1x7x3xbf16>
    %16 = vector.shape_cast %15 : vector<1x1x7x3xbf16> to vector<7x3xbf16>
    %c0_25 = arith.constant 0 : index
    %c15 = arith.constant 15 : index
    %17 = vector.load %arg5[%c0_25, %c15] : memref<49x27xbf16, #tpu.memory_space<vmem>>, vector<7x3xbf16>
    tpu.vector_store %arg5[%c0_25, %c15], %16 {strides = array<i32>} : memref<49x27xbf16, #tpu.memory_space<vmem>>, vector<7x3xbf16>,
    %c0_26 = arith.constant 0 : index
    %c1_27 = arith.constant 1 : index
    %c0_28 = arith.constant 0 : index
    %c0_29 = arith.constant 0 : index
    %18 = vector.load %arg1[%c0_26, %c1_27, %c0_28, %c0_29] : memref<1x32x8x3xbf16, #tpu.memory_space<vmem>>, vector<1x1x7x3xbf16>
    %19 = vector.shape_cast %18 : vector<1x1x7x3xbf16> to vector<7x3xbf16>
    %c0_30 = arith.constant 0 : index
    %c18 = arith.constant 18 : index
    %20 = vector.load %arg5[%c0_30, %c18] : memref<49x27xbf16, #tpu.memory_space<vmem>>, vector<7x3xbf16>
    tpu.vector_store %arg5[%c0_30, %c18], %19 {strides = array<i32>} : memref<49x27xbf16, #tpu.memory_space<vmem>>, vector<7x3xbf16>,
    %c0_31 = arith.constant 0 : index
    %c9_32 = arith.constant 9 : index
    %c0_33 = arith.constant 0 : index
    %c0_34 = arith.constant 0 : index
    %21 = vector.load %arg1[%c0_31, %c9_32, %c0_33, %c0_34] : memref<1x32x8x3xbf16, #tpu.memory_space<vmem>>, vector<1x1x7x3xbf16>
    %22 = vector.shape_cast %21 : vector<1x1x7x3xbf16> to vector<7x3xbf16>
    %c0_35 = arith.constant 0 : index
    %c21 = arith.constant 21 : index
    %23 = vector.load %arg5[%c0_35, %c21] : memref<49x27xbf16, #tpu.memory_space<vmem>>, vector<7x3xbf16>
    tpu.vector_store %arg5[%c0_35, %c21], %22 {strides = array<i32>} : memref<49x27xbf16, #tpu.memory_space<vmem>>, vector<7x3xbf16>,
    %c0_36 = arith.constant 0 : index
    %c1_37 = arith.constant 1 : index
    %c1_38 = arith.constant 1 : index
    %c0_39 = arith.constant 0 : index
    %24 = vector.load %arg1[%c0_36, %c1_37, %c1_38, %c0_39] : memref<1x32x8x3xbf16, #tpu.memory_space<vmem>>, vector<1x1x7x3xbf16>
    %25 = vector.shape_cast %24 : vector<1x1x7x3xbf16> to vector<7x3xbf16>
    %c0_40 = arith.constant 0 : index
    %c24_41 = arith.constant 24 : index
    %26 = vector.load %arg5[%c0_40, %c24_41] : memref<49x27xbf16, #tpu.memory_space<vmem>>, vector<7x3xbf16>
    tpu.vector_store %arg5[%c0_40, %c24_41], %25 {strides = array<i32>} : memref<49x27xbf16, #tpu.memory_space<vmem>>, vector<7x3xbf16>,
    %c0_42 = arith.constant 0 : index
    %c1_43 = arith.constant 1 : index
    %c0_44 = arith.constant 0 : index
    %c0_45 = arith.constant 0 : index
    %27 = vector.load %arg1[%c0_42, %c1_43, %c0_44, %c0_45] : memref<1x32x8x3xbf16, #tpu.memory_space<vmem>>, vector<1x1x7x3xbf16>
    %28 = vector.shape_cast %27 : vector<1x1x7x3xbf16> to vector<7x3xbf16>
    %c7 = arith.constant 7 : index
    %c0_46 = arith.constant 0 : index
    %29 = vector.load %arg5[%c7, %c0_46] : memref<49x27xbf16, #tpu.memory_space<vmem>>, vector<7x3xbf16>
    tpu.vector_store %arg5[%c7, %c0_46], %28 {strides = array<i32>} : memref<49x27xbf16, #tpu.memory_space<vmem>>, vector<7x3xbf16>,
    %c0_47 = arith.constant 0 : index
    %c9_48 = arith.constant 9 : index
    %c0_49 = arith.constant 0 : index
    %c0_50 = arith.constant 0 : index
    %30 = vector.load %arg1[%c0_47, %c9_48, %c0_49, %c0_50] : memref<1x32x8x3xbf16, #tpu.memory_space<vmem>>, vector<1x1x7x3xbf16>
    %31 = vector.shape_cast %30 : vector<1x1x7x3xbf16> to vector<7x3xbf16>
    %c7_51 = arith.constant 7 : index
    %c3_52 = arith.constant 3 : index
    %32 = vector.load %arg5[%c7_51, %c3_52] : memref<49x27xbf16, #tpu.memory_space<vmem>>, vector<7x3xbf16>
    tpu.vector_store %arg5[%c7_51, %c3_52], %31 {strides = array<i32>} : memref<49x27xbf16, #tpu.memory_space<vmem>>, vector<7x3xbf16>,
    %c0_53 = arith.constant 0 : index
    %c1_54 = arith.constant 1 : index
    %c1_55 = arith.constant 1 : index
    %c0_56 = arith.constant 0 : index
    %33 = vector.load %arg1[%c0_53, %c1_54, %c1_55, %c0_56] : memref<1x32x8x3xbf16, #tpu.memory_space<vmem>>, vector<1x1x7x3xbf16>
    %34 = vector.shape_cast %33 : vector<1x1x7x3xbf16> to vector<7x3xbf16>
    %c7_57 = arith.constant 7 : index
    %c6_58 = arith.constant 6 : index
    %35 = vector.load %arg5[%c7_57, %c6_58] : memref<49x27xbf16, #tpu.memory_space<vmem>>, vector<7x3xbf16>
    tpu.vector_store %arg5[%c7_57, %c6_58], %34 {strides = array<i32>} : memref<49x27xbf16, #tpu.memory_space<vmem>>, vector<7x3xbf16>,
    %c0_59 = arith.constant 0 : index
    %c17 = arith.constant 17 : index
    %c0_60 = arith.constant 0 : index
    %c0_61 = arith.constant 0 : index
    %36 = vector.load %arg1[%c0_59, %c17, %c0_60, %c0_61] : memref<1x32x8x3xbf16, #tpu.memory_space<vmem>>, vector<1x1x7x3xbf16>
    %37 = vector.shape_cast %36 : vector<1x1x7x3xbf16> to vector<7x3xbf16>
    %c7_62 = arith.constant 7 : index
    %c9_63 = arith.constant 9 : index
    %38 = vector.load %arg5[%c7_62, %c9_63] : memref<49x27xbf16, #tpu.memory_space<vmem>>, vector<7x3xbf16>
    tpu.vector_store %arg5[%c7_62, %c9_63], %37 {strides = array<i32>} : memref<49x27xbf16, #tpu.memory_space<vmem>>, vector<7x3xbf16>,
    %c0_64 = arith.constant 0 : index
    %c25 = arith.constant 25 : index
    %c0_65 = arith.constant 0 : index
    %c0_66 = arith.constant 0 : index
    %39 = vector.load %arg1[%c0_64, %c25, %c0_65, %c0_66] : memref<1x32x8x3xbf16, #tpu.memory_space<vmem>>, vector<1x1x7x3xbf16>
    %40 = vector.shape_cast %39 : vector<1x1x7x3xbf16> to vector<7x3xbf16>
    %c7_67 = arith.constant 7 : index
    %c12_68 = arith.constant 12 : index
    %41 = vector.load %arg5[%c7_67, %c12_68] : memref<49x27xbf16, #tpu.memory_space<vmem>>, vector<7x3xbf16>
    tpu.vector_store %arg5[%c7_67, %c12_68], %40 {strides = array<i32>} : memref<49x27xbf16, #tpu.memory_space<vmem>>, vector<7x3xbf16>,
    %c0_69 = arith.constant 0 : index
    %c17_70 = arith.constant 17 : index
    %c1_71 = arith.constant 1 : index
    %c0_72 = arith.constant 0 : index
    %42 = vector.load %arg1[%c0_69, %c17_70, %c1_71, %c0_72] : memref<1x32x8x3xbf16, #tpu.memory_space<vmem>>, vector<1x1x7x3xbf16>
    %43 = vector.shape_cast %42 : vector<1x1x7x3xbf16> to vector<7x3xbf16>
    %c7_73 = arith.constant 7 : index
    %c15_74 = arith.constant 15 : index
    %44 = vector.load %arg5[%c7_73, %c15_74] : memref<49x27xbf16, #tpu.memory_space<vmem>>, vector<7x3xbf16>
    tpu.vector_store %arg5[%c7_73, %c15_74], %43 {strides = array<i32>} : memref<49x27xbf16, #tpu.memory_space<vmem>>, vector<7x3xbf16>,
    %c0_75 = arith.constant 0 : index
    %c2 = arith.constant 2 : index
    %c0_76 = arith.constant 0 : index
    %c0_77 = arith.constant 0 : index
    %45 = vector.load %arg1[%c0_75, %c2, %c0_76, %c0_77] : memref<1x32x8x3xbf16, #tpu.memory_space<vmem>>, vector<1x1x7x3xbf16>
    %46 = vector.shape_cast %45 : vector<1x1x7x3xbf16> to vector<7x3xbf16>
    %c7_78 = arith.constant 7 : index
    %c18_79 = arith.constant 18 : index
    %47 = vector.load %arg5[%c7_78, %c18_79] : memref<49x27xbf16, #tpu.memory_space<vmem>>, vector<7x3xbf16>
    tpu.vector_store %arg5[%c7_78, %c18_79], %46 {strides = array<i32>} : memref<49x27xbf16, #tpu.memory_space<vmem>>, vector<7x3xbf16>,
    %c0_80 = arith.constant 0 : index
    %c10 = arith.constant 10 : index
    %c0_81 = arith.constant 0 : index
    %c0_82 = arith.constant 0 : index
    %48 = vector.load %arg1[%c0_80, %c10, %c0_81, %c0_82] : memref<1x32x8x3xbf16, #tpu.memory_space<vmem>>, vector<1x1x7x3xbf16>
    %49 = vector.shape_cast %48 : vector<1x1x7x3xbf16> to vector<7x3xbf16>
    %c7_83 = arith.constant 7 : index
    %c21_84 = arith.constant 21 : index
    %50 = vector.load %arg5[%c7_83, %c21_84] : memref<49x27xbf16, #tpu.memory_space<vmem>>, vector<7x3xbf16>
    tpu.vector_store %arg5[%c7_83, %c21_84], %49 {strides = array<i32>} : memref<49x27xbf16, #tpu.memory_space<vmem>>, vector<7x3xbf16>,
    %c0_85 = arith.constant 0 : index
    %c2_86 = arith.constant 2 : index
    %c1_87 = arith.constant 1 : index
    %c0_88 = arith.constant 0 : index
    %51 = vector.load %arg1[%c0_85, %c2_86, %c1_87, %c0_88] : memref<1x32x8x3xbf16, #tpu.memory_space<vmem>>, vector<1x1x7x3xbf16>
    %52 = vector.shape_cast %51 : vector<1x1x7x3xbf16> to vector<7x3xbf16>
    %c7_89 = arith.constant 7 : index
    %c24_90 = arith.constant 24 : index
    %53 = vector.load %arg5[%c7_89, %c24_90] : memref<49x27xbf16, #tpu.memory_space<vmem>>, vector<7x3xbf16>
    tpu.vector_store %arg5[%c7_89, %c24_90], %52 {strides = array<i32>} : memref<49x27xbf16, #tpu.memory_space<vmem>>, vector<7x3xbf16>,
    %c0_91 = arith.constant 0 : index
    %c2_92 = arith.constant 2 : index
    %c0_93 = arith.constant 0 : index
    %c0_94 = arith.constant 0 : index
    %54 = vector.load %arg1[%c0_91, %c2_92, %c0_93, %c0_94] : memref<1x32x8x3xbf16, #tpu.memory_space<vmem>>, vector<1x1x7x3xbf16>
    %55 = vector.shape_cast %54 : vector<1x1x7x3xbf16> to vector<7x3xbf16>
    %c14 = arith.constant 14 : index
    %c0_95 = arith.constant 0 : index
    %56 = vector.load %arg5[%c14, %c0_95] : memref<49x27xbf16, #tpu.memory_space<vmem>>, vector<7x3xbf16>
    tpu.vector_store %arg5[%c14, %c0_95], %55 {strides = array<i32>} : memref<49x27xbf16, #tpu.memory_space<vmem>>, vector<7x3xbf16>,
    %c0_96 = arith.constant 0 : index
    %c10_97 = arith.constant 10 : index
    %c0_98 = arith.constant 0 : index
    %c0_99 = arith.constant 0 : index
    %57 = vector.load %arg1[%c0_96, %c10_97, %c0_98, %c0_99] : memref<1x32x8x3xbf16, #tpu.memory_space<vmem>>, vector<1x1x7x3xbf16>
    %58 = vector.shape_cast %57 : vector<1x1x7x3xbf16> to vector<7x3xbf16>
    %c14_100 = arith.constant 14 : index
    %c3_101 = arith.constant 3 : index
    %59 = vector.load %arg5[%c14_100, %c3_101] : memref<49x27xbf16, #tpu.memory_space<vmem>>, vector<7x3xbf16>
    tpu.vector_store %arg5[%c14_100, %c3_101], %58 {strides = array<i32>} : memref<49x27xbf16, #tpu.memory_space<vmem>>, vector<7x3xbf16>,
    %c0_102 = arith.constant 0 : index
    %c2_103 = arith.constant 2 : index
    %c1_104 = arith.constant 1 : index
    %c0_105 = arith.constant 0 : index
    %60 = vector.load %arg1[%c0_102, %c2_103, %c1_104, %c0_105] : memref<1x32x8x3xbf16, #tpu.memory_space<vmem>>, vector<1x1x7x3xbf16>
    %61 = vector.shape_cast %60 : vector<1x1x7x3xbf16> to vector<7x3xbf16>
    %c14_106 = arith.constant 14 : index
    %c6_107 = arith.constant 6 : index
    %62 = vector.load %arg5[%c14_106, %c6_107] : memref<49x27xbf16, #tpu.memory_space<vmem>>, vector<7x3xbf16>
    tpu.vector_store %arg5[%c14_106, %c6_107], %61 {strides = array<i32>} : memref<49x27xbf16, #tpu.memory_space<vmem>>, vector<7x3xbf16>,
    %c0_108 = arith.constant 0 : index
    %c18_109 = arith.constant 18 : index
    %c0_110 = arith.constant 0 : index
    %c0_111 = arith.constant 0 : index
    %63 = vector.load %arg1[%c0_108, %c18_109, %c0_110, %c0_111] : memref<1x32x8x3xbf16, #tpu.memory_space<vmem>>, vector<1x1x7x3xbf16>
    %64 = vector.shape_cast %63 : vector<1x1x7x3xbf16> to vector<7x3xbf16>
    %c14_112 = arith.constant 14 : index
    %c9_113 = arith.constant 9 : index
    %65 = vector.load %arg5[%c14_112, %c9_113] : memref<49x27xbf16, #tpu.memory_space<vmem>>, vector<7x3xbf16>
    tpu.vector_store %arg5[%c14_112, %c9_113], %64 {strides = array<i32>} : memref<49x27xbf16, #tpu.memory_space<vmem>>, vector<7x3xbf16>,
    %c0_114 = arith.constant 0 : index
    %c26 = arith.constant 26 : index
    %c0_115 = arith.constant 0 : index
    %c0_116 = arith.constant 0 : index
    %66 = vector.load %arg1[%c0_114, %c26, %c0_115, %c0_116] : memref<1x32x8x3xbf16, #tpu.memory_space<vmem>>, vector<1x1x7x3xbf16>
    %67 = vector.shape_cast %66 : vector<1x1x7x3xbf16> to vector<7x3xbf16>
    %c14_117 = arith.constant 14 : index
    %c12_118 = arith.constant 12 : index
    %68 = vector.load %arg5[%c14_117, %c12_118] : memref<49x27xbf16, #tpu.memory_space<vmem>>, vector<7x3xbf16>
    tpu.vector_store %arg5[%c14_117, %c12_118], %67 {strides = array<i32>} : memref<49x27xbf16, #tpu.memory_space<vmem>>, vector<7x3xbf16>,
    %c0_119 = arith.constant 0 : index
    %c18_120 = arith.constant 18 : index
    %c1_121 = arith.constant 1 : index
    %c0_122 = arith.constant 0 : index
    %69 = vector.load %arg1[%c0_119, %c18_120, %c1_121, %c0_122] : memref<1x32x8x3xbf16, #tpu.memory_space<vmem>>, vector<1x1x7x3xbf16>
    %70 = vector.shape_cast %69 : vector<1x1x7x3xbf16> to vector<7x3xbf16>
    %c14_123 = arith.constant 14 : index
    %c15_124 = arith.constant 15 : index
    %71 = vector.load %arg5[%c14_123, %c15_124] : memref<49x27xbf16, #tpu.memory_space<vmem>>, vector<7x3xbf16>
    tpu.vector_store %arg5[%c14_123, %c15_124], %70 {strides = array<i32>} : memref<49x27xbf16, #tpu.memory_space<vmem>>, vector<7x3xbf16>,
    %c0_125 = arith.constant 0 : index
    %c3_126 = arith.constant 3 : index
    %c0_127 = arith.constant 0 : index
    %c0_128 = arith.constant 0 : index
    %72 = vector.load %arg1[%c0_125, %c3_126, %c0_127, %c0_128] : memref<1x32x8x3xbf16, #tpu.memory_space<vmem>>, vector<1x1x7x3xbf16>
    %73 = vector.shape_cast %72 : vector<1x1x7x3xbf16> to vector<7x3xbf16>
    %c14_129 = arith.constant 14 : index
    %c18_130 = arith.constant 18 : index
    %74 = vector.load %arg5[%c14_129, %c18_130] : memref<49x27xbf16, #tpu.memory_space<vmem>>, vector<7x3xbf16>
    tpu.vector_store %arg5[%c14_129, %c18_130], %73 {strides = array<i32>} : memref<49x27xbf16, #tpu.memory_space<vmem>>, vector<7x3xbf16>,
    %c0_131 = arith.constant 0 : index
    %c11 = arith.constant 11 : index
    %c0_132 = arith.constant 0 : index
    %c0_133 = arith.constant 0 : index
    %75 = vector.load %arg1[%c0_131, %c11, %c0_132, %c0_133] : memref<1x32x8x3xbf16, #tpu.memory_space<vmem>>, vector<1x1x7x3xbf16>
    %76 = vector.shape_cast %75 : vector<1x1x7x3xbf16> to vector<7x3xbf16>
    %c14_134 = arith.constant 14 : index
    %c21_135 = arith.constant 21 : index
    %77 = vector.load %arg5[%c14_134, %c21_135] : memref<49x27xbf16, #tpu.memory_space<vmem>>, vector<7x3xbf16>
    tpu.vector_store %arg5[%c14_134, %c21_135], %76 {strides = array<i32>} : memref<49x27xbf16, #tpu.memory_space<vmem>>, vector<7x3xbf16>,
    %c0_136 = arith.constant 0 : index
    %c3_137 = arith.constant 3 : index
    %c1_138 = arith.constant 1 : index
    %c0_139 = arith.constant 0 : index
    %78 = vector.load %arg1[%c0_136, %c3_137, %c1_138, %c0_139] : memref<1x32x8x3xbf16, #tpu.memory_space<vmem>>, vector<1x1x7x3xbf16>
    %79 = vector.shape_cast %78 : vector<1x1x7x3xbf16> to vector<7x3xbf16>
    %c14_140 = arith.constant 14 : index
    %c24_141 = arith.constant 24 : index
    %80 = vector.load %arg5[%c14_140, %c24_141] : memref<49x27xbf16, #tpu.memory_space<vmem>>, vector<7x3xbf16>
    tpu.vector_store %arg5[%c14_140, %c24_141], %79 {strides = array<i32>} : memref<49x27xbf16, #tpu.memory_space<vmem>>, vector<7x3xbf16>,
    %c0_142 = arith.constant 0 : index
    %c3_143 = arith.constant 3 : index
    %c0_144 = arith.constant 0 : index
    %c0_145 = arith.constant 0 : index
    %81 = vector.load %arg1[%c0_142, %c3_143, %c0_144, %c0_145] : memref<1x32x8x3xbf16, #tpu.memory_space<vmem>>, vector<1x1x7x3xbf16>
    %82 = vector.shape_cast %81 : vector<1x1x7x3xbf16> to vector<7x3xbf16>
    %c21_146 = arith.constant 21 : index
    %c0_147 = arith.constant 0 : index
    %83 = vector.load %arg5[%c21_146, %c0_147] : memref<49x27xbf16, #tpu.memory_space<vmem>>, vector<7x3xbf16>
    tpu.vector_store %arg5[%c21_146, %c0_147], %82 {strides = array<i32>} : memref<49x27xbf16, #tpu.memory_space<vmem>>, vector<7x3xbf16>,
    %c0_148 = arith.constant 0 : index
    %c11_149 = arith.constant 11 : index
    %c0_150 = arith.constant 0 : index
    %c0_151 = arith.constant 0 : index
    %84 = vector.load %arg1[%c0_148, %c11_149, %c0_150, %c0_151] : memref<1x32x8x3xbf16, #tpu.memory_space<vmem>>, vector<1x1x7x3xbf16>
    %85 = vector.shape_cast %84 : vector<1x1x7x3xbf16> to vector<7x3xbf16>
    %c21_152 = arith.constant 21 : index
    %c3_153 = arith.constant 3 : index
    %86 = vector.load %arg5[%c21_152, %c3_153] : memref<49x27xbf16, #tpu.memory_space<vmem>>, vector<7x3xbf16>
    tpu.vector_store %arg5[%c21_152, %c3_153], %85 {strides = array<i32>} : memref<49x27xbf16, #tpu.memory_space<vmem>>, vector<7x3xbf16>,
    %c0_154 = arith.constant 0 : index
    %c3_155 = arith.constant 3 : index
    %c1_156 = arith.constant 1 : index
    %c0_157 = arith.constant 0 : index
    %87 = vector.load %arg1[%c0_154, %c3_155, %c1_156, %c0_157] : memref<1x32x8x3xbf16, #tpu.memory_space<vmem>>, vector<1x1x7x3xbf16>
    %88 = vector.shape_cast %87 : vector<1x1x7x3xbf16> to vector<7x3xbf16>
    %c21_158 = arith.constant 21 : index
    %c6_159 = arith.constant 6 : index
    %89 = vector.load %arg5[%c21_158, %c6_159] : memref<49x27xbf16, #tpu.memory_space<vmem>>, vector<7x3xbf16>
    tpu.vector_store %arg5[%c21_158, %c6_159], %88 {strides = array<i32>} : memref<49x27xbf16, #tpu.memory_space<vmem>>, vector<7x3xbf16>,
    %c0_160 = arith.constant 0 : index
    %c19 = arith.constant 19 : index
    %c0_161 = arith.constant 0 : index
    %c0_162 = arith.constant 0 : index
    %90 = vector.load %arg1[%c0_160, %c19, %c0_161, %c0_162] : memref<1x32x8x3xbf16, #tpu.memory_space<vmem>>, vector<1x1x7x3xbf16>
    %91 = vector.shape_cast %90 : vector<1x1x7x3xbf16> to vector<7x3xbf16>
    %c21_163 = arith.constant 21 : index
    %c9_164 = arith.constant 9 : index
    %92 = vector.load %arg5[%c21_163, %c9_164] : memref<49x27xbf16, #tpu.memory_space<vmem>>, vector<7x3xbf16>
    tpu.vector_store %arg5[%c21_163, %c9_164], %91 {strides = array<i32>} : memref<49x27xbf16, #tpu.memory_space<vmem>>, vector<7x3xbf16>,
    %c0_165 = arith.constant 0 : index
    %c27 = arith.constant 27 : index
    %c0_166 = arith.constant 0 : index
    %c0_167 = arith.constant 0 : index
    %93 = vector.load %arg1[%c0_165, %c27, %c0_166, %c0_167] : memref<1x32x8x3xbf16, #tpu.memory_space<vmem>>, vector<1x1x7x3xbf16>
    %94 = vector.shape_cast %93 : vector<1x1x7x3xbf16> to vector<7x3xbf16>
    %c21_168 = arith.constant 21 : index
    %c12_169 = arith.constant 12 : index
    %95 = vector.load %arg5[%c21_168, %c12_169] : memref<49x27xbf16, #tpu.memory_space<vmem>>, vector<7x3xbf16>
    tpu.vector_store %arg5[%c21_168, %c12_169], %94 {strides = array<i32>} : memref<49x27xbf16, #tpu.memory_space<vmem>>, vector<7x3xbf16>,
    %c0_170 = arith.constant 0 : index
    %c19_171 = arith.constant 19 : index
    %c1_172 = arith.constant 1 : index
    %c0_173 = arith.constant 0 : index
    %96 = vector.load %arg1[%c0_170, %c19_171, %c1_172, %c0_173] : memref<1x32x8x3xbf16, #tpu.memory_space<vmem>>, vector<1x1x7x3xbf16>
    %97 = vector.shape_cast %96 : vector<1x1x7x3xbf16> to vector<7x3xbf16>
    %c21_174 = arith.constant 21 : index
    %c15_175 = arith.constant 15 : index
    %98 = vector.load %arg5[%c21_174, %c15_175] : memref<49x27xbf16, #tpu.memory_space<vmem>>, vector<7x3xbf16>
    tpu.vector_store %arg5[%c21_174, %c15_175], %97 {strides = array<i32>} : memref<49x27xbf16, #tpu.memory_space<vmem>>, vector<7x3xbf16>,
    %c0_176 = arith.constant 0 : index
    %c4 = arith.constant 4 : index
    %c0_177 = arith.constant 0 : index
    %c0_178 = arith.constant 0 : index
    %99 = vector.load %arg1[%c0_176, %c4, %c0_177, %c0_178] : memref<1x32x8x3xbf16, #tpu.memory_space<vmem>>, vector<1x1x7x3xbf16>
    %100 = vector.shape_cast %99 : vector<1x1x7x3xbf16> to vector<7x3xbf16>
    %c21_179 = arith.constant 21 : index
    %c18_180 = arith.constant 18 : index
    %101 = vector.load %arg5[%c21_179, %c18_180] : memref<49x27xbf16, #tpu.memory_space<vmem>>, vector<7x3xbf16>
    tpu.vector_store %arg5[%c21_179, %c18_180], %100 {strides = array<i32>} : memref<49x27xbf16, #tpu.memory_space<vmem>>, vector<7x3xbf16>,
    %c0_181 = arith.constant 0 : index
    %c12_182 = arith.constant 12 : index
    %c0_183 = arith.constant 0 : index
    %c0_184 = arith.constant 0 : index
    %102 = vector.load %arg1[%c0_181, %c12_182, %c0_183, %c0_184] : memref<1x32x8x3xbf16, #tpu.memory_space<vmem>>, vector<1x1x7x3xbf16>
    %103 = vector.shape_cast %102 : vector<1x1x7x3xbf16> to vector<7x3xbf16>
    %c21_185 = arith.constant 21 : index
    %c21_186 = arith.constant 21 : index
    %104 = vector.load %arg5[%c21_185, %c21_186] : memref<49x27xbf16, #tpu.memory_space<vmem>>, vector<7x3xbf16>
    tpu.vector_store %arg5[%c21_185, %c21_186], %103 {strides = array<i32>} : memref<49x27xbf16, #tpu.memory_space<vmem>>, vector<7x3xbf16>,
    %c0_187 = arith.constant 0 : index
    %c4_188 = arith.constant 4 : index
    %c1_189 = arith.constant 1 : index
    %c0_190 = arith.constant 0 : index
    %105 = vector.load %arg1[%c0_187, %c4_188, %c1_189, %c0_190] : memref<1x32x8x3xbf16, #tpu.memory_space<vmem>>, vector<1x1x7x3xbf16>
    %106 = vector.shape_cast %105 : vector<1x1x7x3xbf16> to vector<7x3xbf16>
    %c21_191 = arith.constant 21 : index
    %c24_192 = arith.constant 24 : index
    %107 = vector.load %arg5[%c21_191, %c24_192] : memref<49x27xbf16, #tpu.memory_space<vmem>>, vector<7x3xbf16>
    tpu.vector_store %arg5[%c21_191, %c24_192], %106 {strides = array<i32>} : memref<49x27xbf16, #tpu.memory_space<vmem>>, vector<7x3xbf16>,
    %c0_193 = arith.constant 0 : index
    %c4_194 = arith.constant 4 : index
    %c0_195 = arith.constant 0 : index
    %c0_196 = arith.constant 0 : index
    %108 = vector.load %arg1[%c0_193, %c4_194, %c0_195, %c0_196] : memref<1x32x8x3xbf16, #tpu.memory_space<vmem>>, vector<1x1x7x3xbf16>
    %109 = vector.shape_cast %108 : vector<1x1x7x3xbf16> to vector<7x3xbf16>
    %c28 = arith.constant 28 : index
    %c0_197 = arith.constant 0 : index
    %110 = vector.load %arg5[%c28, %c0_197] : memref<49x27xbf16, #tpu.memory_space<vmem>>, vector<7x3xbf16>
    tpu.vector_store %arg5[%c28, %c0_197], %109 {strides = array<i32>} : memref<49x27xbf16, #tpu.memory_space<vmem>>, vector<7x3xbf16>,
    %c0_198 = arith.constant 0 : index
    %c12_199 = arith.constant 12 : index
    %c0_200 = arith.constant 0 : index
    %c0_201 = arith.constant 0 : index
    %111 = vector.load %arg1[%c0_198, %c12_199, %c0_200, %c0_201] : memref<1x32x8x3xbf16, #tpu.memory_space<vmem>>, vector<1x1x7x3xbf16>
    %112 = vector.shape_cast %111 : vector<1x1x7x3xbf16> to vector<7x3xbf16>
    %c28_202 = arith.constant 28 : index
    %c3_203 = arith.constant 3 : index
    %113 = vector.load %arg5[%c28_202, %c3_203] : memref<49x27xbf16, #tpu.memory_space<vmem>>, vector<7x3xbf16>
    tpu.vector_store %arg5[%c28_202, %c3_203], %112 {strides = array<i32>} : memref<49x27xbf16, #tpu.memory_space<vmem>>, vector<7x3xbf16>,
    %c0_204 = arith.constant 0 : index
    %c4_205 = arith.constant 4 : index
    %c1_206 = arith.constant 1 : index
    %c0_207 = arith.constant 0 : index
    %114 = vector.load %arg1[%c0_204, %c4_205, %c1_206, %c0_207] : memref<1x32x8x3xbf16, #tpu.memory_space<vmem>>, vector<1x1x7x3xbf16>
    %115 = vector.shape_cast %114 : vector<1x1x7x3xbf16> to vector<7x3xbf16>
    %c28_208 = arith.constant 28 : index
    %c6_209 = arith.constant 6 : index
    %116 = vector.load %arg5[%c28_208, %c6_209] : memref<49x27xbf16, #tpu.memory_space<vmem>>, vector<7x3xbf16>
    tpu.vector_store %arg5[%c28_208, %c6_209], %115 {strides = array<i32>} : memref<49x27xbf16, #tpu.memory_space<vmem>>, vector<7x3xbf16>,
    %c0_210 = arith.constant 0 : index
    %c20 = arith.constant 20 : index
    %c0_211 = arith.constant 0 : index
    %c0_212 = arith.constant 0 : index
    %117 = vector.load %arg1[%c0_210, %c20, %c0_211, %c0_212] : memref<1x32x8x3xbf16, #tpu.memory_space<vmem>>, vector<1x1x7x3xbf16>
    %118 = vector.shape_cast %117 : vector<1x1x7x3xbf16> to vector<7x3xbf16>
    %c28_213 = arith.constant 28 : index
    %c9_214 = arith.constant 9 : index
    %119 = vector.load %arg5[%c28_213, %c9_214] : memref<49x27xbf16, #tpu.memory_space<vmem>>, vector<7x3xbf16>
    tpu.vector_store %arg5[%c28_213, %c9_214], %118 {strides = array<i32>} : memref<49x27xbf16, #tpu.memory_space<vmem>>, vector<7x3xbf16>,
    %c0_215 = arith.constant 0 : index
    %c28_216 = arith.constant 28 : index
    %c0_217 = arith.constant 0 : index
    %c0_218 = arith.constant 0 : index
    %120 = vector.load %arg1[%c0_215, %c28_216, %c0_217, %c0_218] : memref<1x32x8x3xbf16, #tpu.memory_space<vmem>>, vector<1x1x7x3xbf16>
    %121 = vector.shape_cast %120 : vector<1x1x7x3xbf16> to vector<7x3xbf16>
    %c28_219 = arith.constant 28 : index
    %c12_220 = arith.constant 12 : index
    %122 = vector.load %arg5[%c28_219, %c12_220] : memref<49x27xbf16, #tpu.memory_space<vmem>>, vector<7x3xbf16>
    tpu.vector_store %arg5[%c28_219, %c12_220], %121 {strides = array<i32>} : memref<49x27xbf16, #tpu.memory_space<vmem>>, vector<7x3xbf16>,
    %c0_221 = arith.constant 0 : index
    %c20_222 = arith.constant 20 : index
    %c1_223 = arith.constant 1 : index
    %c0_224 = arith.constant 0 : index
    %123 = vector.load %arg1[%c0_221, %c20_222, %c1_223, %c0_224] : memref<1x32x8x3xbf16, #tpu.memory_space<vmem>>, vector<1x1x7x3xbf16>
    %124 = vector.shape_cast %123 : vector<1x1x7x3xbf16> to vector<7x3xbf16>
    %c28_225 = arith.constant 28 : index
    %c15_226 = arith.constant 15 : index
    %125 = vector.load %arg5[%c28_225, %c15_226] : memref<49x27xbf16, #tpu.memory_space<vmem>>, vector<7x3xbf16>
    tpu.vector_store %arg5[%c28_225, %c15_226], %124 {strides = array<i32>} : memref<49x27xbf16, #tpu.memory_space<vmem>>, vector<7x3xbf16>,
    %c0_227 = arith.constant 0 : index
    %c5 = arith.constant 5 : index
    %c0_228 = arith.constant 0 : index
    %c0_229 = arith.constant 0 : index
    %126 = vector.load %arg1[%c0_227, %c5, %c0_228, %c0_229] : memref<1x32x8x3xbf16, #tpu.memory_space<vmem>>, vector<1x1x7x3xbf16>
    %127 = vector.shape_cast %126 : vector<1x1x7x3xbf16> to vector<7x3xbf16>
    %c28_230 = arith.constant 28 : index
    %c18_231 = arith.constant 18 : index
    %128 = vector.load %arg5[%c28_230, %c18_231] : memref<49x27xbf16, #tpu.memory_space<vmem>>, vector<7x3xbf16>
    tpu.vector_store %arg5[%c28_230, %c18_231], %127 {strides = array<i32>} : memref<49x27xbf16, #tpu.memory_space<vmem>>, vector<7x3xbf16>,
    %c0_232 = arith.constant 0 : index
    %c13 = arith.constant 13 : index
    %c0_233 = arith.constant 0 : index
    %c0_234 = arith.constant 0 : index
    %129 = vector.load %arg1[%c0_232, %c13, %c0_233, %c0_234] : memref<1x32x8x3xbf16, #tpu.memory_space<vmem>>, vector<1x1x7x3xbf16>
    %130 = vector.shape_cast %129 : vector<1x1x7x3xbf16> to vector<7x3xbf16>
    %c28_235 = arith.constant 28 : index
    %c21_236 = arith.constant 21 : index
    %131 = vector.load %arg5[%c28_235, %c21_236] : memref<49x27xbf16, #tpu.memory_space<vmem>>, vector<7x3xbf16>
    tpu.vector_store %arg5[%c28_235, %c21_236], %130 {strides = array<i32>} : memref<49x27xbf16, #tpu.memory_space<vmem>>, vector<7x3xbf16>,
    %c0_237 = arith.constant 0 : index
    %c5_238 = arith.constant 5 : index
    %c1_239 = arith.constant 1 : index
    %c0_240 = arith.constant 0 : index
    %132 = vector.load %arg1[%c0_237, %c5_238, %c1_239, %c0_240] : memref<1x32x8x3xbf16, #tpu.memory_space<vmem>>, vector<1x1x7x3xbf16>
    %133 = vector.shape_cast %132 : vector<1x1x7x3xbf16> to vector<7x3xbf16>
    %c28_241 = arith.constant 28 : index
    %c24_242 = arith.constant 24 : index
    %134 = vector.load %arg5[%c28_241, %c24_242] : memref<49x27xbf16, #tpu.memory_space<vmem>>, vector<7x3xbf16>
    tpu.vector_store %arg5[%c28_241, %c24_242], %133 {strides = array<i32>} : memref<49x27xbf16, #tpu.memory_space<vmem>>, vector<7x3xbf16>,
    %c0_243 = arith.constant 0 : index
    %c5_244 = arith.constant 5 : index
    %c0_245 = arith.constant 0 : index
    %c0_246 = arith.constant 0 : index
    %135 = vector.load %arg1[%c0_243, %c5_244, %c0_245, %c0_246] : memref<1x32x8x3xbf16, #tpu.memory_space<vmem>>, vector<1x1x7x3xbf16>
    %136 = vector.shape_cast %135 : vector<1x1x7x3xbf16> to vector<7x3xbf16>
    %c35 = arith.constant 35 : index
    %c0_247 = arith.constant 0 : index
    %137 = vector.load %arg5[%c35, %c0_247] : memref<49x27xbf16, #tpu.memory_space<vmem>>, vector<7x3xbf16>
    tpu.vector_store %arg5[%c35, %c0_247], %136 {strides = array<i32>} : memref<49x27xbf16, #tpu.memory_space<vmem>>, vector<7x3xbf16>,
    %c0_248 = arith.constant 0 : index
    %c13_249 = arith.constant 13 : index
    %c0_250 = arith.constant 0 : index
    %c0_251 = arith.constant 0 : index
    %138 = vector.load %arg1[%c0_248, %c13_249, %c0_250, %c0_251] : memref<1x32x8x3xbf16, #tpu.memory_space<vmem>>, vector<1x1x7x3xbf16>
    %139 = vector.shape_cast %138 : vector<1x1x7x3xbf16> to vector<7x3xbf16>
    %c35_252 = arith.constant 35 : index
    %c3_253 = arith.constant 3 : index
    %140 = vector.load %arg5[%c35_252, %c3_253] : memref<49x27xbf16, #tpu.memory_space<vmem>>, vector<7x3xbf16>
    tpu.vector_store %arg5[%c35_252, %c3_253], %139 {strides = array<i32>} : memref<49x27xbf16, #tpu.memory_space<vmem>>, vector<7x3xbf16>,
    %c0_254 = arith.constant 0 : index
    %c5_255 = arith.constant 5 : index
    %c1_256 = arith.constant 1 : index
    %c0_257 = arith.constant 0 : index
    %141 = vector.load %arg1[%c0_254, %c5_255, %c1_256, %c0_257] : memref<1x32x8x3xbf16, #tpu.memory_space<vmem>>, vector<1x1x7x3xbf16>
    %142 = vector.shape_cast %141 : vector<1x1x7x3xbf16> to vector<7x3xbf16>
    %c35_258 = arith.constant 35 : index
    %c6_259 = arith.constant 6 : index
    %143 = vector.load %arg5[%c35_258, %c6_259] : memref<49x27xbf16, #tpu.memory_space<vmem>>, vector<7x3xbf16>
    tpu.vector_store %arg5[%c35_258, %c6_259], %142 {strides = array<i32>} : memref<49x27xbf16, #tpu.memory_space<vmem>>, vector<7x3xbf16>,
    %c0_260 = arith.constant 0 : index
    %c21_261 = arith.constant 21 : index
    %c0_262 = arith.constant 0 : index
    %c0_263 = arith.constant 0 : index
    %144 = vector.load %arg1[%c0_260, %c21_261, %c0_262, %c0_263] : memref<1x32x8x3xbf16, #tpu.memory_space<vmem>>, vector<1x1x7x3xbf16>
    %145 = vector.shape_cast %144 : vector<1x1x7x3xbf16> to vector<7x3xbf16>
    %c35_264 = arith.constant 35 : index
    %c9_265 = arith.constant 9 : index
    %146 = vector.load %arg5[%c35_264, %c9_265] : memref<49x27xbf16, #tpu.memory_space<vmem>>, vector<7x3xbf16>
    tpu.vector_store %arg5[%c35_264, %c9_265], %145 {strides = array<i32>} : memref<49x27xbf16, #tpu.memory_space<vmem>>, vector<7x3xbf16>,
    %c0_266 = arith.constant 0 : index
    %c29 = arith.constant 29 : index
    %c0_267 = arith.constant 0 : index
    %c0_268 = arith.constant 0 : index
    %147 = vector.load %arg1[%c0_266, %c29, %c0_267, %c0_268] : memref<1x32x8x3xbf16, #tpu.memory_space<vmem>>, vector<1x1x7x3xbf16>
    %148 = vector.shape_cast %147 : vector<1x1x7x3xbf16> to vector<7x3xbf16>
    %c35_269 = arith.constant 35 : index
    %c12_270 = arith.constant 12 : index
    %149 = vector.load %arg5[%c35_269, %c12_270] : memref<49x27xbf16, #tpu.memory_space<vmem>>, vector<7x3xbf16>
    tpu.vector_store %arg5[%c35_269, %c12_270], %148 {strides = array<i32>} : memref<49x27xbf16, #tpu.memory_space<vmem>>, vector<7x3xbf16>,
    %c0_271 = arith.constant 0 : index
    %c21_272 = arith.constant 21 : index
    %c1_273 = arith.constant 1 : index
    %c0_274 = arith.constant 0 : index
    %150 = vector.load %arg1[%c0_271, %c21_272, %c1_273, %c0_274] : memref<1x32x8x3xbf16, #tpu.memory_space<vmem>>, vector<1x1x7x3xbf16>
    %151 = vector.shape_cast %150 : vector<1x1x7x3xbf16> to vector<7x3xbf16>
    %c35_275 = arith.constant 35 : index
    %c15_276 = arith.constant 15 : index
    %152 = vector.load %arg5[%c35_275, %c15_276] : memref<49x27xbf16, #tpu.memory_space<vmem>>, vector<7x3xbf16>
    tpu.vector_store %arg5[%c35_275, %c15_276], %151 {strides = array<i32>} : memref<49x27xbf16, #tpu.memory_space<vmem>>, vector<7x3xbf16>,
    %c0_277 = arith.constant 0 : index
    %c6_278 = arith.constant 6 : index
    %c0_279 = arith.constant 0 : index
    %c0_280 = arith.constant 0 : index
    %153 = vector.load %arg1[%c0_277, %c6_278, %c0_279, %c0_280] : memref<1x32x8x3xbf16, #tpu.memory_space<vmem>>, vector<1x1x7x3xbf16>
    %154 = vector.shape_cast %153 : vector<1x1x7x3xbf16> to vector<7x3xbf16>
    %c35_281 = arith.constant 35 : index
    %c18_282 = arith.constant 18 : index
    %155 = vector.load %arg5[%c35_281, %c18_282] : memref<49x27xbf16, #tpu.memory_space<vmem>>, vector<7x3xbf16>
    tpu.vector_store %arg5[%c35_281, %c18_282], %154 {strides = array<i32>} : memref<49x27xbf16, #tpu.memory_space<vmem>>, vector<7x3xbf16>,
    %c0_283 = arith.constant 0 : index
    %c14_284 = arith.constant 14 : index
    %c0_285 = arith.constant 0 : index
    %c0_286 = arith.constant 0 : index
    %156 = vector.load %arg1[%c0_283, %c14_284, %c0_285, %c0_286] : memref<1x32x8x3xbf16, #tpu.memory_space<vmem>>, vector<1x1x7x3xbf16>
    %157 = vector.shape_cast %156 : vector<1x1x7x3xbf16> to vector<7x3xbf16>
    %c35_287 = arith.constant 35 : index
    %c21_288 = arith.constant 21 : index
    %158 = vector.load %arg5[%c35_287, %c21_288] : memref<49x27xbf16, #tpu.memory_space<vmem>>, vector<7x3xbf16>
    tpu.vector_store %arg5[%c35_287, %c21_288], %157 {strides = array<i32>} : memref<49x27xbf16, #tpu.memory_space<vmem>>, vector<7x3xbf16>,
    %c0_289 = arith.constant 0 : index
    %c6_290 = arith.constant 6 : index
    %c1_291 = arith.constant 1 : index
    %c0_292 = arith.constant 0 : index
    %159 = vector.load %arg1[%c0_289, %c6_290, %c1_291, %c0_292] : memref<1x32x8x3xbf16, #tpu.memory_space<vmem>>, vector<1x1x7x3xbf16>
    %160 = vector.shape_cast %159 : vector<1x1x7x3xbf16> to vector<7x3xbf16>
    %c35_293 = arith.constant 35 : index
    %c24_294 = arith.constant 24 : index
    %161 = vector.load %arg5[%c35_293, %c24_294] : memref<49x27xbf16, #tpu.memory_space<vmem>>, vector<7x3xbf16>
    tpu.vector_store %arg5[%c35_293, %c24_294], %160 {strides = array<i32>} : memref<49x27xbf16, #tpu.memory_space<vmem>>, vector<7x3xbf16>,
    %c0_295 = arith.constant 0 : index
    %c6_296 = arith.constant 6 : index
    %c0_297 = arith.constant 0 : index
    %c0_298 = arith.constant 0 : index
    %162 = vector.load %arg1[%c0_295, %c6_296, %c0_297, %c0_298] : memref<1x32x8x3xbf16, #tpu.memory_space<vmem>>, vector<1x1x7x3xbf16>
    %163 = vector.shape_cast %162 : vector<1x1x7x3xbf16> to vector<7x3xbf16>
    %c42 = arith.constant 42 : index
    %c0_299 = arith.constant 0 : index
    %164 = vector.load %arg5[%c42, %c0_299] : memref<49x27xbf16, #tpu.memory_space<vmem>>, vector<7x3xbf16>
    tpu.vector_store %arg5[%c42, %c0_299], %163 {strides = array<i32>} : memref<49x27xbf16, #tpu.memory_space<vmem>>, vector<7x3xbf16>,
    %c0_300 = arith.constant 0 : index
    %c14_301 = arith.constant 14 : index
    %c0_302 = arith.constant 0 : index
    %c0_303 = arith.constant 0 : index
    %165 = vector.load %arg1[%c0_300, %c14_301, %c0_302, %c0_303] : memref<1x32x8x3xbf16, #tpu.memory_space<vmem>>, vector<1x1x7x3xbf16>
    %166 = vector.shape_cast %165 : vector<1x1x7x3xbf16> to vector<7x3xbf16>
    %c42_304 = arith.constant 42 : index
    %c3_305 = arith.constant 3 : index
    %167 = vector.load %arg5[%c42_304, %c3_305] : memref<49x27xbf16, #tpu.memory_space<vmem>>, vector<7x3xbf16>
    tpu.vector_store %arg5[%c42_304, %c3_305], %166 {strides = array<i32>} : memref<49x27xbf16, #tpu.memory_space<vmem>>, vector<7x3xbf16>,
    %c0_306 = arith.constant 0 : index
    %c6_307 = arith.constant 6 : index
    %c1_308 = arith.constant 1 : index
    %c0_309 = arith.constant 0 : index
    %168 = vector.load %arg1[%c0_306, %c6_307, %c1_308, %c0_309] : memref<1x32x8x3xbf16, #tpu.memory_space<vmem>>, vector<1x1x7x3xbf16>
    %169 = vector.shape_cast %168 : vector<1x1x7x3xbf16> to vector<7x3xbf16>
    %c42_310 = arith.constant 42 : index
    %c6_311 = arith.constant 6 : index
    %170 = vector.load %arg5[%c42_310, %c6_311] : memref<49x27xbf16, #tpu.memory_space<vmem>>, vector<7x3xbf16>
    tpu.vector_store %arg5[%c42_310, %c6_311], %169 {strides = array<i32>} : memref<49x27xbf16, #tpu.memory_space<vmem>>, vector<7x3xbf16>,
    %c0_312 = arith.constant 0 : index
    %c22 = arith.constant 22 : index
    %c0_313 = arith.constant 0 : index
    %c0_314 = arith.constant 0 : index
    %171 = vector.load %arg1[%c0_312, %c22, %c0_313, %c0_314] : memref<1x32x8x3xbf16, #tpu.memory_space<vmem>>, vector<1x1x7x3xbf16>
    %172 = vector.shape_cast %171 : vector<1x1x7x3xbf16> to vector<7x3xbf16>
    %c42_315 = arith.constant 42 : index
    %c9_316 = arith.constant 9 : index
    %173 = vector.load %arg5[%c42_315, %c9_316] : memref<49x27xbf16, #tpu.memory_space<vmem>>, vector<7x3xbf16>
    tpu.vector_store %arg5[%c42_315, %c9_316], %172 {strides = array<i32>} : memref<49x27xbf16, #tpu.memory_space<vmem>>, vector<7x3xbf16>,
    %c0_317 = arith.constant 0 : index
    %c30 = arith.constant 30 : index
    %c0_318 = arith.constant 0 : index
    %c0_319 = arith.constant 0 : index
    %174 = vector.load %arg1[%c0_317, %c30, %c0_318, %c0_319] : memref<1x32x8x3xbf16, #tpu.memory_space<vmem>>, vector<1x1x7x3xbf16>
    %175 = vector.shape_cast %174 : vector<1x1x7x3xbf16> to vector<7x3xbf16>
    %c42_320 = arith.constant 42 : index
    %c12_321 = arith.constant 12 : index
    %176 = vector.load %arg5[%c42_320, %c12_321] : memref<49x27xbf16, #tpu.memory_space<vmem>>, vector<7x3xbf16>
    tpu.vector_store %arg5[%c42_320, %c12_321], %175 {strides = array<i32>} : memref<49x27xbf16, #tpu.memory_space<vmem>>, vector<7x3xbf16>,
    %c0_322 = arith.constant 0 : index
    %c22_323 = arith.constant 22 : index
    %c1_324 = arith.constant 1 : index
    %c0_325 = arith.constant 0 : index
    %177 = vector.load %arg1[%c0_322, %c22_323, %c1_324, %c0_325] : memref<1x32x8x3xbf16, #tpu.memory_space<vmem>>, vector<1x1x7x3xbf16>
    %178 = vector.shape_cast %177 : vector<1x1x7x3xbf16> to vector<7x3xbf16>
    %c42_326 = arith.constant 42 : index
    %c15_327 = arith.constant 15 : index
    %179 = vector.load %arg5[%c42_326, %c15_327] : memref<49x27xbf16, #tpu.memory_space<vmem>>, vector<7x3xbf16>
    tpu.vector_store %arg5[%c42_326, %c15_327], %178 {strides = array<i32>} : memref<49x27xbf16, #tpu.memory_space<vmem>>, vector<7x3xbf16>,
    %c0_328 = arith.constant 0 : index
    %c7_329 = arith.constant 7 : index
    %c0_330 = arith.constant 0 : index
    %c0_331 = arith.constant 0 : index
    %180 = vector.load %arg1[%c0_328, %c7_329, %c0_330, %c0_331] : memref<1x32x8x3xbf16, #tpu.memory_space<vmem>>, vector<1x1x7x3xbf16>
    %181 = vector.shape_cast %180 : vector<1x1x7x3xbf16> to vector<7x3xbf16>
    %c42_332 = arith.constant 42 : index
    %c18_333 = arith.constant 18 : index
    %182 = vector.load %arg5[%c42_332, %c18_333] : memref<49x27xbf16, #tpu.memory_space<vmem>>, vector<7x3xbf16>
    tpu.vector_store %arg5[%c42_332, %c18_333], %181 {strides = array<i32>} : memref<49x27xbf16, #tpu.memory_space<vmem>>, vector<7x3xbf16>,
    %c0_334 = arith.constant 0 : index
    %c15_335 = arith.constant 15 : index
    %c0_336 = arith.constant 0 : index
    %c0_337 = arith.constant 0 : index
    %183 = vector.load %arg1[%c0_334, %c15_335, %c0_336, %c0_337] : memref<1x32x8x3xbf16, #tpu.memory_space<vmem>>, vector<1x1x7x3xbf16>
    %184 = vector.shape_cast %183 : vector<1x1x7x3xbf16> to vector<7x3xbf16>
    %c42_338 = arith.constant 42 : index
    %c21_339 = arith.constant 21 : index
    %185 = vector.load %arg5[%c42_338, %c21_339] : memref<49x27xbf16, #tpu.memory_space<vmem>>, vector<7x3xbf16>
    tpu.vector_store %arg5[%c42_338, %c21_339], %184 {strides = array<i32>} : memref<49x27xbf16, #tpu.memory_space<vmem>>, vector<7x3xbf16>,
    %c0_340 = arith.constant 0 : index
    %c7_341 = arith.constant 7 : index
    %c1_342 = arith.constant 1 : index
    %c0_343 = arith.constant 0 : index
    %186 = vector.load %arg1[%c0_340, %c7_341, %c1_342, %c0_343] : memref<1x32x8x3xbf16, #tpu.memory_space<vmem>>, vector<1x1x7x3xbf16>
    %187 = vector.shape_cast %186 : vector<1x1x7x3xbf16> to vector<7x3xbf16>
    %c42_344 = arith.constant 42 : index
    %c24_345 = arith.constant 24 : index
    %188 = vector.load %arg5[%c42_344, %c24_345] : memref<49x27xbf16, #tpu.memory_space<vmem>>, vector<7x3xbf16>
    tpu.vector_store %arg5[%c42_344, %c24_345], %187 {strides = array<i32>} : memref<49x27xbf16, #tpu.memory_space<vmem>>, vector<7x3xbf16>,
    %c0_346 = arith.constant 0 : index
    %c0_347 = arith.constant 0 : index
    %189 = vector.load %arg5[%c0_346, %c0_347] : memref<49x27xbf16, #tpu.memory_space<vmem>>, vector<49x27xbf16>
    %c0_348 = arith.constant 0 : index
    %c0_349 = arith.constant 0 : index
    %190 = vector.load %arg2[%c0_348, %c0_349] : memref<27x32xbf16, #tpu.memory_space<vmem>>, vector<27x32xbf16>
    %cst = arith.constant dense<0.000000e+00> : vector<49x32xf32>
    %191 = tpu.matmul %189, %190, %cst {dimension_numbers = #tpu.dot_dimension_numbers<[1], [0], [0], [1], [0, 0, 1, 1], [], []>} : vector<49x27xbf16>, vector<27x32xbf16>, vector<49x32xf32> -> vector<49x32xf32>
    %192 = arith.truncf %191 : vector<49x32xf32> to vector<49x32xbf16>
    %c0_350 = arith.constant 0 : index
    %c0_351 = arith.constant 0 : index
    %193 = vector.load %arg6[%c0_350, %c0_351] : memref<49x32xbf16, #tpu.memory_space<vmem>>, vector<49x32xbf16>
    tpu.vector_store %arg6[%c0_350, %c0_351], %192 {strides = array<i32>} : memref<49x32xbf16, #tpu.memory_space<vmem>>, vector<49x32xbf16>,
    %c0_352 = arith.constant 0 : index
    %c0_353 = arith.constant 0 : index
    %194 = vector.load %arg6[%c0_352, %c0_353] : memref<49x32xbf16, #tpu.memory_space<vmem>>, vector<1x32xbf16>
    %c0_354 = arith.constant 0 : index
    %c0_355 = arith.constant 0 : index
    %195 = vector.load %arg7[%c0_354, %c0_355] : memref<9x288xbf16, #tpu.memory_space<vmem>>, vector<1x32xbf16>
    tpu.vector_store %arg7[%c0_354, %c0_355], %194 {strides = array<i32>} : memref<9x288xbf16, #tpu.memory_space<vmem>>, vector<1x32xbf16>,
    %c1_356 = arith.constant 1 : index
    %c0_357 = arith.constant 0 : index
    %196 = vector.load %arg6[%c1_356, %c0_357] : memref<49x32xbf16, #tpu.memory_space<vmem>>, vector<1x32xbf16>
    %c0_358 = arith.constant 0 : index
    %c32 = arith.constant 32 : index
    %197 = vector.load %arg7[%c0_358, %c32] : memref<9x288xbf16, #tpu.memory_space<vmem>>, vector<1x32xbf16>
    tpu.vector_store %arg7[%c0_358, %c32], %196 {strides = array<i32>} : memref<9x288xbf16, #tpu.memory_space<vmem>>, vector<1x32xbf16>,
    %c2_359 = arith.constant 2 : index
    %c0_360 = arith.constant 0 : index
    %198 = vector.load %arg6[%c2_359, %c0_360] : memref<49x32xbf16, #tpu.memory_space<vmem>>, vector<1x32xbf16>
    %c0_361 = arith.constant 0 : index
    %c64 = arith.constant 64 : index
    %199 = vector.load %arg7[%c0_361, %c64] : memref<9x288xbf16, #tpu.memory_space<vmem>>, vector<1x32xbf16>
    tpu.vector_store %arg7[%c0_361, %c64], %198 {strides = array<i32>} : memref<9x288xbf16, #tpu.memory_space<vmem>>, vector<1x32xbf16>,
    %c7_362 = arith.constant 7 : index
    %c0_363 = arith.constant 0 : index
    %200 = vector.load %arg6[%c7_362, %c0_363] : memref<49x32xbf16, #tpu.memory_space<vmem>>, vector<1x32xbf16>
    %c0_364 = arith.constant 0 : index
    %c96 = arith.constant 96 : index
    %201 = vector.load %arg7[%c0_364, %c96] : memref<9x288xbf16, #tpu.memory_space<vmem>>, vector<1x32xbf16>
    tpu.vector_store %arg7[%c0_364, %c96], %200 {strides = array<i32>} : memref<9x288xbf16, #tpu.memory_space<vmem>>, vector<1x32xbf16>,
    %c8_365 = arith.constant 8 : index
    %c0_366 = arith.constant 0 : index
    %202 = vector.load %arg6[%c8_365, %c0_366] : memref<49x32xbf16, #tpu.memory_space<vmem>>, vector<1x32xbf16>
    %c0_367 = arith.constant 0 : index
    %c128 = arith.constant 128 : index
    %203 = vector.load %arg7[%c0_367, %c128] : memref<9x288xbf16, #tpu.memory_space<vmem>>, vector<1x32xbf16>
    tpu.vector_store %arg7[%c0_367, %c128], %202 {strides = array<i32>} : memref<9x288xbf16, #tpu.memory_space<vmem>>, vector<1x32xbf16>,
    %c9_368 = arith.constant 9 : index
    %c0_369 = arith.constant 0 : index
    %204 = vector.load %arg6[%c9_368, %c0_369] : memref<49x32xbf16, #tpu.memory_space<vmem>>, vector<1x32xbf16>
    %c0_370 = arith.constant 0 : index
    %c160 = arith.constant 160 : index
    %205 = vector.load %arg7[%c0_370, %c160] : memref<9x288xbf16, #tpu.memory_space<vmem>>, vector<1x32xbf16>
    tpu.vector_store %arg7[%c0_370, %c160], %204 {strides = array<i32>} : memref<9x288xbf16, #tpu.memory_space<vmem>>, vector<1x32xbf16>,
    %c14_371 = arith.constant 14 : index
    %c0_372 = arith.constant 0 : index
    %206 = vector.load %arg6[%c14_371, %c0_372] : memref<49x32xbf16, #tpu.memory_space<vmem>>, vector<1x32xbf16>
    %c0_373 = arith.constant 0 : index
    %c192 = arith.constant 192 : index
    %207 = vector.load %arg7[%c0_373, %c192] : memref<9x288xbf16, #tpu.memory_space<vmem>>, vector<1x32xbf16>
    tpu.vector_store %arg7[%c0_373, %c192], %206 {strides = array<i32>} : memref<9x288xbf16, #tpu.memory_space<vmem>>, vector<1x32xbf16>,
    %c15_374 = arith.constant 15 : index
    %c0_375 = arith.constant 0 : index
    %208 = vector.load %arg6[%c15_374, %c0_375] : memref<49x32xbf16, #tpu.memory_space<vmem>>, vector<1x32xbf16>
    %c0_376 = arith.constant 0 : index
    %c224 = arith.constant 224 : index
    %209 = vector.load %arg7[%c0_376, %c224] : memref<9x288xbf16, #tpu.memory_space<vmem>>, vector<1x32xbf16>
    tpu.vector_store %arg7[%c0_376, %c224], %208 {strides = array<i32>} : memref<9x288xbf16, #tpu.memory_space<vmem>>, vector<1x32xbf16>,
    %c16_377 = arith.constant 16 : index
    %c0_378 = arith.constant 0 : index
    %210 = vector.load %arg6[%c16_377, %c0_378] : memref<49x32xbf16, #tpu.memory_space<vmem>>, vector<1x32xbf16>
    %c0_379 = arith.constant 0 : index
    %c256 = arith.constant 256 : index
    %211 = vector.load %arg7[%c0_379, %c256] : memref<9x288xbf16, #tpu.memory_space<vmem>>, vector<1x32xbf16>
    tpu.vector_store %arg7[%c0_379, %c256], %210 {strides = array<i32>} : memref<9x288xbf16, #tpu.memory_space<vmem>>, vector<1x32xbf16>,
    %c2_380 = arith.constant 2 : index
    %c0_381 = arith.constant 0 : index
    %212 = vector.load %arg6[%c2_380, %c0_381] : memref<49x32xbf16, #tpu.memory_space<vmem>>, vector<1x32xbf16>
    %c1_382 = arith.constant 1 : index
    %c0_383 = arith.constant 0 : index
    %213 = vector.load %arg7[%c1_382, %c0_383] : memref<9x288xbf16, #tpu.memory_space<vmem>>, vector<1x32xbf16>
    tpu.vector_store %arg7[%c1_382, %c0_383], %212 {strides = array<i32>} : memref<9x288xbf16, #tpu.memory_space<vmem>>, vector<1x32xbf16>,
    %c3_384 = arith.constant 3 : index
    %c0_385 = arith.constant 0 : index
    %214 = vector.load %arg6[%c3_384, %c0_385] : memref<49x32xbf16, #tpu.memory_space<vmem>>, vector<1x32xbf16>
    %c1_386 = arith.constant 1 : index
    %c32_387 = arith.constant 32 : index
    %215 = vector.load %arg7[%c1_386, %c32_387] : memref<9x288xbf16, #tpu.memory_space<vmem>>, vector<1x32xbf16>
    tpu.vector_store %arg7[%c1_386, %c32_387], %214 {strides = array<i32>} : memref<9x288xbf16, #tpu.memory_space<vmem>>, vector<1x32xbf16>,
    %c4_388 = arith.constant 4 : index
    %c0_389 = arith.constant 0 : index
    %216 = vector.load %arg6[%c4_388, %c0_389] : memref<49x32xbf16, #tpu.memory_space<vmem>>, vector<1x32xbf16>
    %c1_390 = arith.constant 1 : index
    %c64_391 = arith.constant 64 : index
    %217 = vector.load %arg7[%c1_390, %c64_391] : memref<9x288xbf16, #tpu.memory_space<vmem>>, vector<1x32xbf16>
    tpu.vector_store %arg7[%c1_390, %c64_391], %216 {strides = array<i32>} : memref<9x288xbf16, #tpu.memory_space<vmem>>, vector<1x32xbf16>,
    %c9_392 = arith.constant 9 : index
    %c0_393 = arith.constant 0 : index
    %218 = vector.load %arg6[%c9_392, %c0_393] : memref<49x32xbf16, #tpu.memory_space<vmem>>, vector<1x32xbf16>
    %c1_394 = arith.constant 1 : index
    %c96_395 = arith.constant 96 : index
    %219 = vector.load %arg7[%c1_394, %c96_395] : memref<9x288xbf16, #tpu.memory_space<vmem>>, vector<1x32xbf16>
    tpu.vector_store %arg7[%c1_394, %c96_395], %218 {strides = array<i32>} : memref<9x288xbf16, #tpu.memory_space<vmem>>, vector<1x32xbf16>,
    %c10_396 = arith.constant 10 : index
    %c0_397 = arith.constant 0 : index
    %220 = vector.load %arg6[%c10_396, %c0_397] : memref<49x32xbf16, #tpu.memory_space<vmem>>, vector<1x32xbf16>
    %c1_398 = arith.constant 1 : index
    %c128_399 = arith.constant 128 : index
    %221 = vector.load %arg7[%c1_398, %c128_399] : memref<9x288xbf16, #tpu.memory_space<vmem>>, vector<1x32xbf16>
    tpu.vector_store %arg7[%c1_398, %c128_399], %220 {strides = array<i32>} : memref<9x288xbf16, #tpu.memory_space<vmem>>, vector<1x32xbf16>,
    %c11_400 = arith.constant 11 : index
    %c0_401 = arith.constant 0 : index
    %222 = vector.load %arg6[%c11_400, %c0_401] : memref<49x32xbf16, #tpu.memory_space<vmem>>, vector<1x32xbf16>
    %c1_402 = arith.constant 1 : index
    %c160_403 = arith.constant 160 : index
    %223 = vector.load %arg7[%c1_402, %c160_403] : memref<9x288xbf16, #tpu.memory_space<vmem>>, vector<1x32xbf16>
    tpu.vector_store %arg7[%c1_402, %c160_403], %222 {strides = array<i32>} : memref<9x288xbf16, #tpu.memory_space<vmem>>, vector<1x32xbf16>,
    %c16_404 = arith.constant 16 : index
    %c0_405 = arith.constant 0 : index
    %224 = vector.load %arg6[%c16_404, %c0_405] : memref<49x32xbf16, #tpu.memory_space<vmem>>, vector<1x32xbf16>
    %c1_406 = arith.constant 1 : index
    %c192_407 = arith.constant 192 : index
    %225 = vector.load %arg7[%c1_406, %c192_407] : memref<9x288xbf16, #tpu.memory_space<vmem>>, vector<1x32xbf16>
    tpu.vector_store %arg7[%c1_406, %c192_407], %224 {strides = array<i32>} : memref<9x288xbf16, #tpu.memory_space<vmem>>, vector<1x32xbf16>,
    %c17_408 = arith.constant 17 : index
    %c0_409 = arith.constant 0 : index
    %226 = vector.load %arg6[%c17_408, %c0_409] : memref<49x32xbf16, #tpu.memory_space<vmem>>, vector<1x32xbf16>
    %c1_410 = arith.constant 1 : index
    %c224_411 = arith.constant 224 : index
    %227 = vector.load %arg7[%c1_410, %c224_411] : memref<9x288xbf16, #tpu.memory_space<vmem>>, vector<1x32xbf16>
    tpu.vector_store %arg7[%c1_410, %c224_411], %226 {strides = array<i32>} : memref<9x288xbf16, #tpu.memory_space<vmem>>, vector<1x32xbf16>,
    %c18_412 = arith.constant 18 : index
    %c0_413 = arith.constant 0 : index
    %228 = vector.load %arg6[%c18_412, %c0_413] : memref<49x32xbf16, #tpu.memory_space<vmem>>, vector<1x32xbf16>
    %c1_414 = arith.constant 1 : index
    %c256_415 = arith.constant 256 : index
    %229 = vector.load %arg7[%c1_414, %c256_415] : memref<9x288xbf16, #tpu.memory_space<vmem>>, vector<1x32xbf16>
    tpu.vector_store %arg7[%c1_414, %c256_415], %228 {strides = array<i32>} : memref<9x288xbf16, #tpu.memory_space<vmem>>, vector<1x32xbf16>,
    %c4_416 = arith.constant 4 : index
    %c0_417 = arith.constant 0 : index
    %230 = vector.load %arg6[%c4_416, %c0_417] : memref<49x32xbf16, #tpu.memory_space<vmem>>, vector<1x32xbf16>
    %c2_418 = arith.constant 2 : index
    %c0_419 = arith.constant 0 : index
    %231 = vector.load %arg7[%c2_418, %c0_419] : memref<9x288xbf16, #tpu.memory_space<vmem>>, vector<1x32xbf16>
    tpu.vector_store %arg7[%c2_418, %c0_419], %230 {strides = array<i32>} : memref<9x288xbf16, #tpu.memory_space<vmem>>, vector<1x32xbf16>,
    %c5_420 = arith.constant 5 : index
    %c0_421 = arith.constant 0 : index
    %232 = vector.load %arg6[%c5_420, %c0_421] : memref<49x32xbf16, #tpu.memory_space<vmem>>, vector<1x32xbf16>
    %c2_422 = arith.constant 2 : index
    %c32_423 = arith.constant 32 : index
    %233 = vector.load %arg7[%c2_422, %c32_423] : memref<9x288xbf16, #tpu.memory_space<vmem>>, vector<1x32xbf16>
    tpu.vector_store %arg7[%c2_422, %c32_423], %232 {strides = array<i32>} : memref<9x288xbf16, #tpu.memory_space<vmem>>, vector<1x32xbf16>,
    %c6_424 = arith.constant 6 : index
    %c0_425 = arith.constant 0 : index
    %234 = vector.load %arg6[%c6_424, %c0_425] : memref<49x32xbf16, #tpu.memory_space<vmem>>, vector<1x32xbf16>
    %c2_426 = arith.constant 2 : index
    %c64_427 = arith.constant 64 : index
    %235 = vector.load %arg7[%c2_426, %c64_427] : memref<9x288xbf16, #tpu.memory_space<vmem>>, vector<1x32xbf16>
    tpu.vector_store %arg7[%c2_426, %c64_427], %234 {strides = array<i32>} : memref<9x288xbf16, #tpu.memory_space<vmem>>, vector<1x32xbf16>,
    %c11_428 = arith.constant 11 : index
    %c0_429 = arith.constant 0 : index
    %236 = vector.load %arg6[%c11_428, %c0_429] : memref<49x32xbf16, #tpu.memory_space<vmem>>, vector<1x32xbf16>
    %c2_430 = arith.constant 2 : index
    %c96_431 = arith.constant 96 : index
    %237 = vector.load %arg7[%c2_430, %c96_431] : memref<9x288xbf16, #tpu.memory_space<vmem>>, vector<1x32xbf16>
    tpu.vector_store %arg7[%c2_430, %c96_431], %236 {strides = array<i32>} : memref<9x288xbf16, #tpu.memory_space<vmem>>, vector<1x32xbf16>,
    %c12_432 = arith.constant 12 : index
    %c0_433 = arith.constant 0 : index
    %238 = vector.load %arg6[%c12_432, %c0_433] : memref<49x32xbf16, #tpu.memory_space<vmem>>, vector<1x32xbf16>
    %c2_434 = arith.constant 2 : index
    %c128_435 = arith.constant 128 : index
    %239 = vector.load %arg7[%c2_434, %c128_435] : memref<9x288xbf16, #tpu.memory_space<vmem>>, vector<1x32xbf16>
    tpu.vector_store %arg7[%c2_434, %c128_435], %238 {strides = array<i32>} : memref<9x288xbf16, #tpu.memory_space<vmem>>, vector<1x32xbf16>,
    %c13_436 = arith.constant 13 : index
    %c0_437 = arith.constant 0 : index
    %240 = vector.load %arg6[%c13_436, %c0_437] : memref<49x32xbf16, #tpu.memory_space<vmem>>, vector<1x32xbf16>
    %c2_438 = arith.constant 2 : index
    %c160_439 = arith.constant 160 : index
    %241 = vector.load %arg7[%c2_438, %c160_439] : memref<9x288xbf16, #tpu.memory_space<vmem>>, vector<1x32xbf16>
    tpu.vector_store %arg7[%c2_438, %c160_439], %240 {strides = array<i32>} : memref<9x288xbf16, #tpu.memory_space<vmem>>, vector<1x32xbf16>,
    %c18_440 = arith.constant 18 : index
    %c0_441 = arith.constant 0 : index
    %242 = vector.load %arg6[%c18_440, %c0_441] : memref<49x32xbf16, #tpu.memory_space<vmem>>, vector<1x32xbf16>
    %c2_442 = arith.constant 2 : index
    %c192_443 = arith.constant 192 : index
    %243 = vector.load %arg7[%c2_442, %c192_443] : memref<9x288xbf16, #tpu.memory_space<vmem>>, vector<1x32xbf16>
    tpu.vector_store %arg7[%c2_442, %c192_443], %242 {strides = array<i32>} : memref<9x288xbf16, #tpu.memory_space<vmem>>, vector<1x32xbf16>,
    %c19_444 = arith.constant 19 : index
    %c0_445 = arith.constant 0 : index
    %244 = vector.load %arg6[%c19_444, %c0_445] : memref<49x32xbf16, #tpu.memory_space<vmem>>, vector<1x32xbf16>
    %c2_446 = arith.constant 2 : index
    %c224_447 = arith.constant 224 : index
    %245 = vector.load %arg7[%c2_446, %c224_447] : memref<9x288xbf16, #tpu.memory_space<vmem>>, vector<1x32xbf16>
    tpu.vector_store %arg7[%c2_446, %c224_447], %244 {strides = array<i32>} : memref<9x288xbf16, #tpu.memory_space<vmem>>, vector<1x32xbf16>,
    %c20_448 = arith.constant 20 : index
    %c0_449 = arith.constant 0 : index
    %246 = vector.load %arg6[%c20_448, %c0_449] : memref<49x32xbf16, #tpu.memory_space<vmem>>, vector<1x32xbf16>
    %c2_450 = arith.constant 2 : index
    %c256_451 = arith.constant 256 : index
    %247 = vector.load %arg7[%c2_450, %c256_451] : memref<9x288xbf16, #tpu.memory_space<vmem>>, vector<1x32xbf16>
    tpu.vector_store %arg7[%c2_450, %c256_451], %246 {strides = array<i32>} : memref<9x288xbf16, #tpu.memory_space<vmem>>, vector<1x32xbf16>,
    %c14_452 = arith.constant 14 : index
    %c0_453 = arith.constant 0 : index
    %248 = vector.load %arg6[%c14_452, %c0_453] : memref<49x32xbf16, #tpu.memory_space<vmem>>, vector<1x32xbf16>
    %c3_454 = arith.constant 3 : index
    %c0_455 = arith.constant 0 : index
    %249 = vector.load %arg7[%c3_454, %c0_455] : memref<9x288xbf16, #tpu.memory_space<vmem>>, vector<1x32xbf16>
    tpu.vector_store %arg7[%c3_454, %c0_455], %248 {strides = array<i32>} : memref<9x288xbf16, #tpu.memory_space<vmem>>, vector<1x32xbf16>,
    %c15_456 = arith.constant 15 : index
    %c0_457 = arith.constant 0 : index
    %250 = vector.load %arg6[%c15_456, %c0_457] : memref<49x32xbf16, #tpu.memory_space<vmem>>, vector<1x32xbf16>
    %c3_458 = arith.constant 3 : index
    %c32_459 = arith.constant 32 : index
    %251 = vector.load %arg7[%c3_458, %c32_459] : memref<9x288xbf16, #tpu.memory_space<vmem>>, vector<1x32xbf16>
    tpu.vector_store %arg7[%c3_458, %c32_459], %250 {strides = array<i32>} : memref<9x288xbf16, #tpu.memory_space<vmem>>, vector<1x32xbf16>,
    %c16_460 = arith.constant 16 : index
    %c0_461 = arith.constant 0 : index
    %252 = vector.load %arg6[%c16_460, %c0_461] : memref<49x32xbf16, #tpu.memory_space<vmem>>, vector<1x32xbf16>
    %c3_462 = arith.constant 3 : index
    %c64_463 = arith.constant 64 : index
    %253 = vector.load %arg7[%c3_462, %c64_463] : memref<9x288xbf16, #tpu.memory_space<vmem>>, vector<1x32xbf16>
    tpu.vector_store %arg7[%c3_462, %c64_463], %252 {strides = array<i32>} : memref<9x288xbf16, #tpu.memory_space<vmem>>, vector<1x32xbf16>,
    %c21_464 = arith.constant 21 : index
    %c0_465 = arith.constant 0 : index
    %254 = vector.load %arg6[%c21_464, %c0_465] : memref<49x32xbf16, #tpu.memory_space<vmem>>, vector<1x32xbf16>
    %c3_466 = arith.constant 3 : index
    %c96_467 = arith.constant 96 : index
    %255 = vector.load %arg7[%c3_466, %c96_467] : memref<9x288xbf16, #tpu.memory_space<vmem>>, vector<1x32xbf16>
    tpu.vector_store %arg7[%c3_466, %c96_467], %254 {strides = array<i32>} : memref<9x288xbf16, #tpu.memory_space<vmem>>, vector<1x32xbf16>,
    %c22_468 = arith.constant 22 : index
    %c0_469 = arith.constant 0 : index
    %256 = vector.load %arg6[%c22_468, %c0_469] : memref<49x32xbf16, #tpu.memory_space<vmem>>, vector<1x32xbf16>
    %c3_470 = arith.constant 3 : index
    %c128_471 = arith.constant 128 : index
    %257 = vector.load %arg7[%c3_470, %c128_471] : memref<9x288xbf16, #tpu.memory_space<vmem>>, vector<1x32xbf16>
    tpu.vector_store %arg7[%c3_470, %c128_471], %256 {strides = array<i32>} : memref<9x288xbf16, #tpu.memory_space<vmem>>, vector<1x32xbf16>,
    %c23 = arith.constant 23 : index
    %c0_472 = arith.constant 0 : index
    %258 = vector.load %arg6[%c23, %c0_472] : memref<49x32xbf16, #tpu.memory_space<vmem>>, vector<1x32xbf16>
    %c3_473 = arith.constant 3 : index
    %c160_474 = arith.constant 160 : index
    %259 = vector.load %arg7[%c3_473, %c160_474] : memref<9x288xbf16, #tpu.memory_space<vmem>>, vector<1x32xbf16>
    tpu.vector_store %arg7[%c3_473, %c160_474], %258 {strides = array<i32>} : memref<9x288xbf16, #tpu.memory_space<vmem>>, vector<1x32xbf16>,
    %c28_475 = arith.constant 28 : index
    %c0_476 = arith.constant 0 : index
    %260 = vector.load %arg6[%c28_475, %c0_476] : memref<49x32xbf16, #tpu.memory_space<vmem>>, vector<1x32xbf16>
    %c3_477 = arith.constant 3 : index
    %c192_478 = arith.constant 192 : index
    %261 = vector.load %arg7[%c3_477, %c192_478] : memref<9x288xbf16, #tpu.memory_space<vmem>>, vector<1x32xbf16>
    tpu.vector_store %arg7[%c3_477, %c192_478], %260 {strides = array<i32>} : memref<9x288xbf16, #tpu.memory_space<vmem>>, vector<1x32xbf16>,
    %c29_479 = arith.constant 29 : index
    %c0_480 = arith.constant 0 : index
    %262 = vector.load %arg6[%c29_479, %c0_480] : memref<49x32xbf16, #tpu.memory_space<vmem>>, vector<1x32xbf16>
    %c3_481 = arith.constant 3 : index
    %c224_482 = arith.constant 224 : index
    %263 = vector.load %arg7[%c3_481, %c224_482] : memref<9x288xbf16, #tpu.memory_space<vmem>>, vector<1x32xbf16>
    tpu.vector_store %arg7[%c3_481, %c224_482], %262 {strides = array<i32>} : memref<9x288xbf16, #tpu.memory_space<vmem>>, vector<1x32xbf16>,
    %c30_483 = arith.constant 30 : index
    %c0_484 = arith.constant 0 : index
    %264 = vector.load %arg6[%c30_483, %c0_484] : memref<49x32xbf16, #tpu.memory_space<vmem>>, vector<1x32xbf16>
    %c3_485 = arith.constant 3 : index
    %c256_486 = arith.constant 256 : index
    %265 = vector.load %arg7[%c3_485, %c256_486] : memref<9x288xbf16, #tpu.memory_space<vmem>>, vector<1x32xbf16>
    tpu.vector_store %arg7[%c3_485, %c256_486], %264 {strides = array<i32>} : memref<9x288xbf16, #tpu.memory_space<vmem>>, vector<1x32xbf16>,
    %c16_487 = arith.constant 16 : index
    %c0_488 = arith.constant 0 : index
    %266 = vector.load %arg6[%c16_487, %c0_488] : memref<49x32xbf16, #tpu.memory_space<vmem>>, vector<1x32xbf16>
    %c4_489 = arith.constant 4 : index
    %c0_490 = arith.constant 0 : index
    %267 = vector.load %arg7[%c4_489, %c0_490] : memref<9x288xbf16, #tpu.memory_space<vmem>>, vector<1x32xbf16>
    tpu.vector_store %arg7[%c4_489, %c0_490], %266 {strides = array<i32>} : memref<9x288xbf16, #tpu.memory_space<vmem>>, vector<1x32xbf16>,
    %c17_491 = arith.constant 17 : index
    %c0_492 = arith.constant 0 : index
    %268 = vector.load %arg6[%c17_491, %c0_492] : memref<49x32xbf16, #tpu.memory_space<vmem>>, vector<1x32xbf16>
    %c4_493 = arith.constant 4 : index
    %c32_494 = arith.constant 32 : index
    %269 = vector.load %arg7[%c4_493, %c32_494] : memref<9x288xbf16, #tpu.memory_space<vmem>>, vector<1x32xbf16>
    tpu.vector_store %arg7[%c4_493, %c32_494], %268 {strides = array<i32>} : memref<9x288xbf16, #tpu.memory_space<vmem>>, vector<1x32xbf16>,
    %c18_495 = arith.constant 18 : index
    %c0_496 = arith.constant 0 : index
    %270 = vector.load %arg6[%c18_495, %c0_496] : memref<49x32xbf16, #tpu.memory_space<vmem>>, vector<1x32xbf16>
    %c4_497 = arith.constant 4 : index
    %c64_498 = arith.constant 64 : index
    %271 = vector.load %arg7[%c4_497, %c64_498] : memref<9x288xbf16, #tpu.memory_space<vmem>>, vector<1x32xbf16>
    tpu.vector_store %arg7[%c4_497, %c64_498], %270 {strides = array<i32>} : memref<9x288xbf16, #tpu.memory_space<vmem>>, vector<1x32xbf16>,
    %c23_499 = arith.constant 23 : index
    %c0_500 = arith.constant 0 : index
    %272 = vector.load %arg6[%c23_499, %c0_500] : memref<49x32xbf16, #tpu.memory_space<vmem>>, vector<1x32xbf16>
    %c4_501 = arith.constant 4 : index
    %c96_502 = arith.constant 96 : index
    %273 = vector.load %arg7[%c4_501, %c96_502] : memref<9x288xbf16, #tpu.memory_space<vmem>>, vector<1x32xbf16>
    tpu.vector_store %arg7[%c4_501, %c96_502], %272 {strides = array<i32>} : memref<9x288xbf16, #tpu.memory_space<vmem>>, vector<1x32xbf16>,
    %c24_503 = arith.constant 24 : index
    %c0_504 = arith.constant 0 : index
    %274 = vector.load %arg6[%c24_503, %c0_504] : memref<49x32xbf16, #tpu.memory_space<vmem>>, vector<1x32xbf16>
    %c4_505 = arith.constant 4 : index
    %c128_506 = arith.constant 128 : index
    %275 = vector.load %arg7[%c4_505, %c128_506] : memref<9x288xbf16, #tpu.memory_space<vmem>>, vector<1x32xbf16>
    tpu.vector_store %arg7[%c4_505, %c128_506], %274 {strides = array<i32>} : memref<9x288xbf16, #tpu.memory_space<vmem>>, vector<1x32xbf16>,
    %c25_507 = arith.constant 25 : index
    %c0_508 = arith.constant 0 : index
    %276 = vector.load %arg6[%c25_507, %c0_508] : memref<49x32xbf16, #tpu.memory_space<vmem>>, vector<1x32xbf16>
    %c4_509 = arith.constant 4 : index
    %c160_510 = arith.constant 160 : index
    %277 = vector.load %arg7[%c4_509, %c160_510] : memref<9x288xbf16, #tpu.memory_space<vmem>>, vector<1x32xbf16>
    tpu.vector_store %arg7[%c4_509, %c160_510], %276 {strides = array<i32>} : memref<9x288xbf16, #tpu.memory_space<vmem>>, vector<1x32xbf16>,
    %c30_511 = arith.constant 30 : index
    %c0_512 = arith.constant 0 : index
    %278 = vector.load %arg6[%c30_511, %c0_512] : memref<49x32xbf16, #tpu.memory_space<vmem>>, vector<1x32xbf16>
    %c4_513 = arith.constant 4 : index
    %c192_514 = arith.constant 192 : index
    %279 = vector.load %arg7[%c4_513, %c192_514] : memref<9x288xbf16, #tpu.memory_space<vmem>>, vector<1x32xbf16>
    tpu.vector_store %arg7[%c4_513, %c192_514], %278 {strides = array<i32>} : memref<9x288xbf16, #tpu.memory_space<vmem>>, vector<1x32xbf16>,
    %c31 = arith.constant 31 : index
    %c0_515 = arith.constant 0 : index
    %280 = vector.load %arg6[%c31, %c0_515] : memref<49x32xbf16, #tpu.memory_space<vmem>>, vector<1x32xbf16>
    %c4_516 = arith.constant 4 : index
    %c224_517 = arith.constant 224 : index
    %281 = vector.load %arg7[%c4_516, %c224_517] : memref<9x288xbf16, #tpu.memory_space<vmem>>, vector<1x32xbf16>
    tpu.vector_store %arg7[%c4_516, %c224_517], %280 {strides = array<i32>} : memref<9x288xbf16, #tpu.memory_space<vmem>>, vector<1x32xbf16>,
    %c32_518 = arith.constant 32 : index
    %c0_519 = arith.constant 0 : index
    %282 = vector.load %arg6[%c32_518, %c0_519] : memref<49x32xbf16, #tpu.memory_space<vmem>>, vector<1x32xbf16>
    %c4_520 = arith.constant 4 : index
    %c256_521 = arith.constant 256 : index
    %283 = vector.load %arg7[%c4_520, %c256_521] : memref<9x288xbf16, #tpu.memory_space<vmem>>, vector<1x32xbf16>
    tpu.vector_store %arg7[%c4_520, %c256_521], %282 {strides = array<i32>} : memref<9x288xbf16, #tpu.memory_space<vmem>>, vector<1x32xbf16>,
    %c18_522 = arith.constant 18 : index
    %c0_523 = arith.constant 0 : index
    %284 = vector.load %arg6[%c18_522, %c0_523] : memref<49x32xbf16, #tpu.memory_space<vmem>>, vector<1x32xbf16>
    %c5_524 = arith.constant 5 : index
    %c0_525 = arith.constant 0 : index
    %285 = vector.load %arg7[%c5_524, %c0_525] : memref<9x288xbf16, #tpu.memory_space<vmem>>, vector<1x32xbf16>
    tpu.vector_store %arg7[%c5_524, %c0_525], %284 {strides = array<i32>} : memref<9x288xbf16, #tpu.memory_space<vmem>>, vector<1x32xbf16>,
    %c19_526 = arith.constant 19 : index
    %c0_527 = arith.constant 0 : index
    %286 = vector.load %arg6[%c19_526, %c0_527] : memref<49x32xbf16, #tpu.memory_space<vmem>>, vector<1x32xbf16>
    %c5_528 = arith.constant 5 : index
    %c32_529 = arith.constant 32 : index
    %287 = vector.load %arg7[%c5_528, %c32_529] : memref<9x288xbf16, #tpu.memory_space<vmem>>, vector<1x32xbf16>
    tpu.vector_store %arg7[%c5_528, %c32_529], %286 {strides = array<i32>} : memref<9x288xbf16, #tpu.memory_space<vmem>>, vector<1x32xbf16>,
    %c20_530 = arith.constant 20 : index
    %c0_531 = arith.constant 0 : index
    %288 = vector.load %arg6[%c20_530, %c0_531] : memref<49x32xbf16, #tpu.memory_space<vmem>>, vector<1x32xbf16>
    %c5_532 = arith.constant 5 : index
    %c64_533 = arith.constant 64 : index
    %289 = vector.load %arg7[%c5_532, %c64_533] : memref<9x288xbf16, #tpu.memory_space<vmem>>, vector<1x32xbf16>
    tpu.vector_store %arg7[%c5_532, %c64_533], %288 {strides = array<i32>} : memref<9x288xbf16, #tpu.memory_space<vmem>>, vector<1x32xbf16>,
    %c25_534 = arith.constant 25 : index
    %c0_535 = arith.constant 0 : index
    %290 = vector.load %arg6[%c25_534, %c0_535] : memref<49x32xbf16, #tpu.memory_space<vmem>>, vector<1x32xbf16>
    %c5_536 = arith.constant 5 : index
    %c96_537 = arith.constant 96 : index
    %291 = vector.load %arg7[%c5_536, %c96_537] : memref<9x288xbf16, #tpu.memory_space<vmem>>, vector<1x32xbf16>
    tpu.vector_store %arg7[%c5_536, %c96_537], %290 {strides = array<i32>} : memref<9x288xbf16, #tpu.memory_space<vmem>>, vector<1x32xbf16>,
    %c26_538 = arith.constant 26 : index
    %c0_539 = arith.constant 0 : index
    %292 = vector.load %arg6[%c26_538, %c0_539] : memref<49x32xbf16, #tpu.memory_space<vmem>>, vector<1x32xbf16>
    %c5_540 = arith.constant 5 : index
    %c128_541 = arith.constant 128 : index
    %293 = vector.load %arg7[%c5_540, %c128_541] : memref<9x288xbf16, #tpu.memory_space<vmem>>, vector<1x32xbf16>
    tpu.vector_store %arg7[%c5_540, %c128_541], %292 {strides = array<i32>} : memref<9x288xbf16, #tpu.memory_space<vmem>>, vector<1x32xbf16>,
    %c27_542 = arith.constant 27 : index
    %c0_543 = arith.constant 0 : index
    %294 = vector.load %arg6[%c27_542, %c0_543] : memref<49x32xbf16, #tpu.memory_space<vmem>>, vector<1x32xbf16>
    %c5_544 = arith.constant 5 : index
    %c160_545 = arith.constant 160 : index
    %295 = vector.load %arg7[%c5_544, %c160_545] : memref<9x288xbf16, #tpu.memory_space<vmem>>, vector<1x32xbf16>
    tpu.vector_store %arg7[%c5_544, %c160_545], %294 {strides = array<i32>} : memref<9x288xbf16, #tpu.memory_space<vmem>>, vector<1x32xbf16>,
    %c32_546 = arith.constant 32 : index
    %c0_547 = arith.constant 0 : index
    %296 = vector.load %arg6[%c32_546, %c0_547] : memref<49x32xbf16, #tpu.memory_space<vmem>>, vector<1x32xbf16>
    %c5_548 = arith.constant 5 : index
    %c192_549 = arith.constant 192 : index
    %297 = vector.load %arg7[%c5_548, %c192_549] : memref<9x288xbf16, #tpu.memory_space<vmem>>, vector<1x32xbf16>
    tpu.vector_store %arg7[%c5_548, %c192_549], %296 {strides = array<i32>} : memref<9x288xbf16, #tpu.memory_space<vmem>>, vector<1x32xbf16>,
    %c33 = arith.constant 33 : index
    %c0_550 = arith.constant 0 : index
    %298 = vector.load %arg6[%c33, %c0_550] : memref<49x32xbf16, #tpu.memory_space<vmem>>, vector<1x32xbf16>
    %c5_551 = arith.constant 5 : index
    %c224_552 = arith.constant 224 : index
    %299 = vector.load %arg7[%c5_551, %c224_552] : memref<9x288xbf16, #tpu.memory_space<vmem>>, vector<1x32xbf16>
    tpu.vector_store %arg7[%c5_551, %c224_552], %298 {strides = array<i32>} : memref<9x288xbf16, #tpu.memory_space<vmem>>, vector<1x32xbf16>,
    %c34 = arith.constant 34 : index
    %c0_553 = arith.constant 0 : index
    %300 = vector.load %arg6[%c34, %c0_553] : memref<49x32xbf16, #tpu.memory_space<vmem>>, vector<1x32xbf16>
    %c5_554 = arith.constant 5 : index
    %c256_555 = arith.constant 256 : index
    %301 = vector.load %arg7[%c5_554, %c256_555] : memref<9x288xbf16, #tpu.memory_space<vmem>>, vector<1x32xbf16>
    tpu.vector_store %arg7[%c5_554, %c256_555], %300 {strides = array<i32>} : memref<9x288xbf16, #tpu.memory_space<vmem>>, vector<1x32xbf16>,
    %c28_556 = arith.constant 28 : index
    %c0_557 = arith.constant 0 : index
    %302 = vector.load %arg6[%c28_556, %c0_557] : memref<49x32xbf16, #tpu.memory_space<vmem>>, vector<1x32xbf16>
    %c6_558 = arith.constant 6 : index
    %c0_559 = arith.constant 0 : index
    %303 = vector.load %arg7[%c6_558, %c0_559] : memref<9x288xbf16, #tpu.memory_space<vmem>>, vector<1x32xbf16>
    tpu.vector_store %arg7[%c6_558, %c0_559], %302 {strides = array<i32>} : memref<9x288xbf16, #tpu.memory_space<vmem>>, vector<1x32xbf16>,
    %c29_560 = arith.constant 29 : index
    %c0_561 = arith.constant 0 : index
    %304 = vector.load %arg6[%c29_560, %c0_561] : memref<49x32xbf16, #tpu.memory_space<vmem>>, vector<1x32xbf16>
    %c6_562 = arith.constant 6 : index
    %c32_563 = arith.constant 32 : index
    %305 = vector.load %arg7[%c6_562, %c32_563] : memref<9x288xbf16, #tpu.memory_space<vmem>>, vector<1x32xbf16>
    tpu.vector_store %arg7[%c6_562, %c32_563], %304 {strides = array<i32>} : memref<9x288xbf16, #tpu.memory_space<vmem>>, vector<1x32xbf16>,
    %c30_564 = arith.constant 30 : index
    %c0_565 = arith.constant 0 : index
    %306 = vector.load %arg6[%c30_564, %c0_565] : memref<49x32xbf16, #tpu.memory_space<vmem>>, vector<1x32xbf16>
    %c6_566 = arith.constant 6 : index
    %c64_567 = arith.constant 64 : index
    %307 = vector.load %arg7[%c6_566, %c64_567] : memref<9x288xbf16, #tpu.memory_space<vmem>>, vector<1x32xbf16>
    tpu.vector_store %arg7[%c6_566, %c64_567], %306 {strides = array<i32>} : memref<9x288xbf16, #tpu.memory_space<vmem>>, vector<1x32xbf16>,
    %c35_568 = arith.constant 35 : index
    %c0_569 = arith.constant 0 : index
    %308 = vector.load %arg6[%c35_568, %c0_569] : memref<49x32xbf16, #tpu.memory_space<vmem>>, vector<1x32xbf16>
    %c6_570 = arith.constant 6 : index
    %c96_571 = arith.constant 96 : index
    %309 = vector.load %arg7[%c6_570, %c96_571] : memref<9x288xbf16, #tpu.memory_space<vmem>>, vector<1x32xbf16>
    tpu.vector_store %arg7[%c6_570, %c96_571], %308 {strides = array<i32>} : memref<9x288xbf16, #tpu.memory_space<vmem>>, vector<1x32xbf16>,
    %c36 = arith.constant 36 : index
    %c0_572 = arith.constant 0 : index
    %310 = vector.load %arg6[%c36, %c0_572] : memref<49x32xbf16, #tpu.memory_space<vmem>>, vector<1x32xbf16>
    %c6_573 = arith.constant 6 : index
    %c128_574 = arith.constant 128 : index
    %311 = vector.load %arg7[%c6_573, %c128_574] : memref<9x288xbf16, #tpu.memory_space<vmem>>, vector<1x32xbf16>
    tpu.vector_store %arg7[%c6_573, %c128_574], %310 {strides = array<i32>} : memref<9x288xbf16, #tpu.memory_space<vmem>>, vector<1x32xbf16>,
    %c37 = arith.constant 37 : index
    %c0_575 = arith.constant 0 : index
    %312 = vector.load %arg6[%c37, %c0_575] : memref<49x32xbf16, #tpu.memory_space<vmem>>, vector<1x32xbf16>
    %c6_576 = arith.constant 6 : index
    %c160_577 = arith.constant 160 : index
    %313 = vector.load %arg7[%c6_576, %c160_577] : memref<9x288xbf16, #tpu.memory_space<vmem>>, vector<1x32xbf16>
    tpu.vector_store %arg7[%c6_576, %c160_577], %312 {strides = array<i32>} : memref<9x288xbf16, #tpu.memory_space<vmem>>, vector<1x32xbf16>,
    %c42_578 = arith.constant 42 : index
    %c0_579 = arith.constant 0 : index
    %314 = vector.load %arg6[%c42_578, %c0_579] : memref<49x32xbf16, #tpu.memory_space<vmem>>, vector<1x32xbf16>
    %c6_580 = arith.constant 6 : index
    %c192_581 = arith.constant 192 : index
    %315 = vector.load %arg7[%c6_580, %c192_581] : memref<9x288xbf16, #tpu.memory_space<vmem>>, vector<1x32xbf16>
    tpu.vector_store %arg7[%c6_580, %c192_581], %314 {strides = array<i32>} : memref<9x288xbf16, #tpu.memory_space<vmem>>, vector<1x32xbf16>,
    %c43 = arith.constant 43 : index
    %c0_582 = arith.constant 0 : index
    %316 = vector.load %arg6[%c43, %c0_582] : memref<49x32xbf16, #tpu.memory_space<vmem>>, vector<1x32xbf16>
    %c6_583 = arith.constant 6 : index
    %c224_584 = arith.constant 224 : index
    %317 = vector.load %arg7[%c6_583, %c224_584] : memref<9x288xbf16, #tpu.memory_space<vmem>>, vector<1x32xbf16>
    tpu.vector_store %arg7[%c6_583, %c224_584], %316 {strides = array<i32>} : memref<9x288xbf16, #tpu.memory_space<vmem>>, vector<1x32xbf16>,
    %c44 = arith.constant 44 : index
    %c0_585 = arith.constant 0 : index
    %318 = vector.load %arg6[%c44, %c0_585] : memref<49x32xbf16, #tpu.memory_space<vmem>>, vector<1x32xbf16>
    %c6_586 = arith.constant 6 : index
    %c256_587 = arith.constant 256 : index
    %319 = vector.load %arg7[%c6_586, %c256_587] : memref<9x288xbf16, #tpu.memory_space<vmem>>, vector<1x32xbf16>
    tpu.vector_store %arg7[%c6_586, %c256_587], %318 {strides = array<i32>} : memref<9x288xbf16, #tpu.memory_space<vmem>>, vector<1x32xbf16>,
    %c30_588 = arith.constant 30 : index
    %c0_589 = arith.constant 0 : index
    %320 = vector.load %arg6[%c30_588, %c0_589] : memref<49x32xbf16, #tpu.memory_space<vmem>>, vector<1x32xbf16>
    %c7_590 = arith.constant 7 : index
    %c0_591 = arith.constant 0 : index
    %321 = vector.load %arg7[%c7_590, %c0_591] : memref<9x288xbf16, #tpu.memory_space<vmem>>, vector<1x32xbf16>
    tpu.vector_store %arg7[%c7_590, %c0_591], %320 {strides = array<i32>} : memref<9x288xbf16, #tpu.memory_space<vmem>>, vector<1x32xbf16>,
    %c31_592 = arith.constant 31 : index
    %c0_593 = arith.constant 0 : index
    %322 = vector.load %arg6[%c31_592, %c0_593] : memref<49x32xbf16, #tpu.memory_space<vmem>>, vector<1x32xbf16>
    %c7_594 = arith.constant 7 : index
    %c32_595 = arith.constant 32 : index
    %323 = vector.load %arg7[%c7_594, %c32_595] : memref<9x288xbf16, #tpu.memory_space<vmem>>, vector<1x32xbf16>
    tpu.vector_store %arg7[%c7_594, %c32_595], %322 {strides = array<i32>} : memref<9x288xbf16, #tpu.memory_space<vmem>>, vector<1x32xbf16>,
    %c32_596 = arith.constant 32 : index
    %c0_597 = arith.constant 0 : index
    %324 = vector.load %arg6[%c32_596, %c0_597] : memref<49x32xbf16, #tpu.memory_space<vmem>>, vector<1x32xbf16>
    %c7_598 = arith.constant 7 : index
    %c64_599 = arith.constant 64 : index
    %325 = vector.load %arg7[%c7_598, %c64_599] : memref<9x288xbf16, #tpu.memory_space<vmem>>, vector<1x32xbf16>
    tpu.vector_store %arg7[%c7_598, %c64_599], %324 {strides = array<i32>} : memref<9x288xbf16, #tpu.memory_space<vmem>>, vector<1x32xbf16>,
    %c37_600 = arith.constant 37 : index
    %c0_601 = arith.constant 0 : index
    %326 = vector.load %arg6[%c37_600, %c0_601] : memref<49x32xbf16, #tpu.memory_space<vmem>>, vector<1x32xbf16>
    %c7_602 = arith.constant 7 : index
    %c96_603 = arith.constant 96 : index
    %327 = vector.load %arg7[%c7_602, %c96_603] : memref<9x288xbf16, #tpu.memory_space<vmem>>, vector<1x32xbf16>
    tpu.vector_store %arg7[%c7_602, %c96_603], %326 {strides = array<i32>} : memref<9x288xbf16, #tpu.memory_space<vmem>>, vector<1x32xbf16>,
    %c38 = arith.constant 38 : index
    %c0_604 = arith.constant 0 : index
    %328 = vector.load %arg6[%c38, %c0_604] : memref<49x32xbf16, #tpu.memory_space<vmem>>, vector<1x32xbf16>
    %c7_605 = arith.constant 7 : index
    %c128_606 = arith.constant 128 : index
    %329 = vector.load %arg7[%c7_605, %c128_606] : memref<9x288xbf16, #tpu.memory_space<vmem>>, vector<1x32xbf16>
    tpu.vector_store %arg7[%c7_605, %c128_606], %328 {strides = array<i32>} : memref<9x288xbf16, #tpu.memory_space<vmem>>, vector<1x32xbf16>,
    %c39 = arith.constant 39 : index
    %c0_607 = arith.constant 0 : index
    %330 = vector.load %arg6[%c39, %c0_607] : memref<49x32xbf16, #tpu.memory_space<vmem>>, vector<1x32xbf16>
    %c7_608 = arith.constant 7 : index
    %c160_609 = arith.constant 160 : index
    %331 = vector.load %arg7[%c7_608, %c160_609] : memref<9x288xbf16, #tpu.memory_space<vmem>>, vector<1x32xbf16>
    tpu.vector_store %arg7[%c7_608, %c160_609], %330 {strides = array<i32>} : memref<9x288xbf16, #tpu.memory_space<vmem>>, vector<1x32xbf16>,
    %c44_610 = arith.constant 44 : index
    %c0_611 = arith.constant 0 : index
    %332 = vector.load %arg6[%c44_610, %c0_611] : memref<49x32xbf16, #tpu.memory_space<vmem>>, vector<1x32xbf16>
    %c7_612 = arith.constant 7 : index
    %c192_613 = arith.constant 192 : index
    %333 = vector.load %arg7[%c7_612, %c192_613] : memref<9x288xbf16, #tpu.memory_space<vmem>>, vector<1x32xbf16>
    tpu.vector_store %arg7[%c7_612, %c192_613], %332 {strides = array<i32>} : memref<9x288xbf16, #tpu.memory_space<vmem>>, vector<1x32xbf16>,
    %c45 = arith.constant 45 : index
    %c0_614 = arith.constant 0 : index
    %334 = vector.load %arg6[%c45, %c0_614] : memref<49x32xbf16, #tpu.memory_space<vmem>>, vector<1x32xbf16>
    %c7_615 = arith.constant 7 : index
    %c224_616 = arith.constant 224 : index
    %335 = vector.load %arg7[%c7_615, %c224_616] : memref<9x288xbf16, #tpu.memory_space<vmem>>, vector<1x32xbf16>
    tpu.vector_store %arg7[%c7_615, %c224_616], %334 {strides = array<i32>} : memref<9x288xbf16, #tpu.memory_space<vmem>>, vector<1x32xbf16>,
    %c46 = arith.constant 46 : index
    %c0_617 = arith.constant 0 : index
    %336 = vector.load %arg6[%c46, %c0_617] : memref<49x32xbf16, #tpu.memory_space<vmem>>, vector<1x32xbf16>
    %c7_618 = arith.constant 7 : index
    %c256_619 = arith.constant 256 : index
    %337 = vector.load %arg7[%c7_618, %c256_619] : memref<9x288xbf16, #tpu.memory_space<vmem>>, vector<1x32xbf16>
    tpu.vector_store %arg7[%c7_618, %c256_619], %336 {strides = array<i32>} : memref<9x288xbf16, #tpu.memory_space<vmem>>, vector<1x32xbf16>,
    %c32_620 = arith.constant 32 : index
    %c0_621 = arith.constant 0 : index
    %338 = vector.load %arg6[%c32_620, %c0_621] : memref<49x32xbf16, #tpu.memory_space<vmem>>, vector<1x32xbf16>
    %c8_622 = arith.constant 8 : index
    %c0_623 = arith.constant 0 : index
    %339 = vector.load %arg7[%c8_622, %c0_623] : memref<9x288xbf16, #tpu.memory_space<vmem>>, vector<1x32xbf16>
    tpu.vector_store %arg7[%c8_622, %c0_623], %338 {strides = array<i32>} : memref<9x288xbf16, #tpu.memory_space<vmem>>, vector<1x32xbf16>,
    %c33_624 = arith.constant 33 : index
    %c0_625 = arith.constant 0 : index
    %340 = vector.load %arg6[%c33_624, %c0_625] : memref<49x32xbf16, #tpu.memory_space<vmem>>, vector<1x32xbf16>
    %c8_626 = arith.constant 8 : index
    %c32_627 = arith.constant 32 : index
    %341 = vector.load %arg7[%c8_626, %c32_627] : memref<9x288xbf16, #tpu.memory_space<vmem>>, vector<1x32xbf16>
    tpu.vector_store %arg7[%c8_626, %c32_627], %340 {strides = array<i32>} : memref<9x288xbf16, #tpu.memory_space<vmem>>, vector<1x32xbf16>,
    %c34_628 = arith.constant 34 : index
    %c0_629 = arith.constant 0 : index
    %342 = vector.load %arg6[%c34_628, %c0_629] : memref<49x32xbf16, #tpu.memory_space<vmem>>, vector<1x32xbf16>
    %c8_630 = arith.constant 8 : index
    %c64_631 = arith.constant 64 : index
    %343 = vector.load %arg7[%c8_630, %c64_631] : memref<9x288xbf16, #tpu.memory_space<vmem>>, vector<1x32xbf16>
    tpu.vector_store %arg7[%c8_630, %c64_631], %342 {strides = array<i32>} : memref<9x288xbf16, #tpu.memory_space<vmem>>, vector<1x32xbf16>,
    %c39_632 = arith.constant 39 : index
    %c0_633 = arith.constant 0 : index
    %344 = vector.load %arg6[%c39_632, %c0_633] : memref<49x32xbf16, #tpu.memory_space<vmem>>, vector<1x32xbf16>
    %c8_634 = arith.constant 8 : index
    %c96_635 = arith.constant 96 : index
    %345 = vector.load %arg7[%c8_634, %c96_635] : memref<9x288xbf16, #tpu.memory_space<vmem>>, vector<1x32xbf16>
    tpu.vector_store %arg7[%c8_634, %c96_635], %344 {strides = array<i32>} : memref<9x288xbf16, #tpu.memory_space<vmem>>, vector<1x32xbf16>,
    %c40 = arith.constant 40 : index
    %c0_636 = arith.constant 0 : index
    %346 = vector.load %arg6[%c40, %c0_636] : memref<49x32xbf16, #tpu.memory_space<vmem>>, vector<1x32xbf16>
    %c8_637 = arith.constant 8 : index
    %c128_638 = arith.constant 128 : index
    %347 = vector.load %arg7[%c8_637, %c128_638] : memref<9x288xbf16, #tpu.memory_space<vmem>>, vector<1x32xbf16>
    tpu.vector_store %arg7[%c8_637, %c128_638], %346 {strides = array<i32>} : memref<9x288xbf16, #tpu.memory_space<vmem>>, vector<1x32xbf16>,
    %c41 = arith.constant 41 : index
    %c0_639 = arith.constant 0 : index
    %348 = vector.load %arg6[%c41, %c0_639] : memref<49x32xbf16, #tpu.memory_space<vmem>>, vector<1x32xbf16>
    %c8_640 = arith.constant 8 : index
    %c160_641 = arith.constant 160 : index
    %349 = vector.load %arg7[%c8_640, %c160_641] : memref<9x288xbf16, #tpu.memory_space<vmem>>, vector<1x32xbf16>
    tpu.vector_store %arg7[%c8_640, %c160_641], %348 {strides = array<i32>} : memref<9x288xbf16, #tpu.memory_space<vmem>>, vector<1x32xbf16>,
    %c46_642 = arith.constant 46 : index
    %c0_643 = arith.constant 0 : index
    %350 = vector.load %arg6[%c46_642, %c0_643] : memref<49x32xbf16, #tpu.memory_space<vmem>>, vector<1x32xbf16>
    %c8_644 = arith.constant 8 : index
    %c192_645 = arith.constant 192 : index
    %351 = vector.load %arg7[%c8_644, %c192_645] : memref<9x288xbf16, #tpu.memory_space<vmem>>, vector<1x32xbf16>
    tpu.vector_store %arg7[%c8_644, %c192_645], %350 {strides = array<i32>} : memref<9x288xbf16, #tpu.memory_space<vmem>>, vector<1x32xbf16>,
    %c47 = arith.constant 47 : index
    %c0_646 = arith.constant 0 : index
    %352 = vector.load %arg6[%c47, %c0_646] : memref<49x32xbf16, #tpu.memory_space<vmem>>, vector<1x32xbf16>
    %c8_647 = arith.constant 8 : index
    %c224_648 = arith.constant 224 : index
    %353 = vector.load %arg7[%c8_647, %c224_648] : memref<9x288xbf16, #tpu.memory_space<vmem>>, vector<1x32xbf16>
    tpu.vector_store %arg7[%c8_647, %c224_648], %352 {strides = array<i32>} : memref<9x288xbf16, #tpu.memory_space<vmem>>, vector<1x32xbf16>,
    %c48 = arith.constant 48 : index
    %c0_649 = arith.constant 0 : index
    %354 = vector.load %arg6[%c48, %c0_649] : memref<49x32xbf16, #tpu.memory_space<vmem>>, vector<1x32xbf16>
    %c8_650 = arith.constant 8 : index
    %c256_651 = arith.constant 256 : index
    %355 = vector.load %arg7[%c8_650, %c256_651] : memref<9x288xbf16, #tpu.memory_space<vmem>>, vector<1x32xbf16>
    tpu.vector_store %arg7[%c8_650, %c256_651], %354 {strides = array<i32>} : memref<9x288xbf16, #tpu.memory_space<vmem>>, vector<1x32xbf16>,
    %c0_652 = arith.constant 0 : index
    %c0_653 = arith.constant 0 : index
    %356 = vector.load %arg7[%c0_652, %c0_653] : memref<9x288xbf16, #tpu.memory_space<vmem>>, vector<9x288xbf16>
    %c0_654 = arith.constant 0 : index
    %c0_655 = arith.constant 0 : index
    %357 = vector.load %arg3[%c0_654, %c0_655] : memref<288x32xbf16, #tpu.memory_space<vmem>>, vector<288x32xbf16>
    %cst_656 = arith.constant dense<0.000000e+00> : vector<9x32xf32>
    %358 = tpu.matmul %356, %357, %cst_656 {dimension_numbers = #tpu.dot_dimension_numbers<[1], [0], [0], [1], [0, 0, 1, 1], [], []>} : vector<9x288xbf16>, vector<288x32xbf16>, vector<9x32xf32> -> vector<9x32xf32>
    %c0_657 = arith.constant 0 : index
    %c0_658 = arith.constant 0 : index
    %c0_659 = arith.constant 0 : index
    %359 = vector.load %arg4[%c0_657, %c0_658, %c0_659] : memref<1x9x32xf32, #tpu.memory_space<vmem>>, vector<1x9x32xf32>
    %360 = vector.shape_cast %359 : vector<1x9x32xf32> to vector<9x32xf32>
    %361 = vector.shape_cast %358 : vector<9x32xf32> to vector<1x9x32xf32>
    tpu.vector_store %arg4[%c0_657, %c0_658, %c0_659], %361 {strides = array<i32>} : memref<1x9x32xf32, #tpu.memory_space<vmem>>, vector<1x9x32xf32>,
    return
  }
  func.func @transform_0(%arg0: i32) -> (i32, i32, i32, i32) {
    %c0_i32 = arith.constant 0 : i32
    %c0_i32_0 = arith.constant 0 : i32
    %c0_i32_1 = arith.constant 0 : i32
    %c0_i32_2 = arith.constant 0 : i32
    return %arg0, %c0_i32, %c0_i32_0, %c0_i32_1 : i32, i32, i32, i32
  }
  func.func @transform_1(%arg0: i32) -> (i32, i32) {
    %c0_i32 = arith.constant 0 : i32
    %c0_i32_0 = arith.constant 0 : i32
    %c0_i32_1 = arith.constant 0 : i32
    return %c0_i32, %c0_i32_0 : i32, i32
  }
  func.func @transform_2(%arg0: i32) -> (i32, i32) {
    %c0_i32 = arith.constant 0 : i32
    %c0_i32_0 = arith.constant 0 : i32
    %c0_i32_1 = arith.constant 0 : i32
    return %c0_i32, %c0_i32_0 : i32, i32
  }
  func.func @transform_3(%arg0: i32) -> (i32, i32, i32) {
    %c0_i32 = arith.constant 0 : i32
    %c0_i32_0 = arith.constant 0 : i32
    %c0_i32_1 = arith.constant 0 : i32
    return %arg0, %c0_i32, %c0_i32_0 : i32, i32, i32
  }
}

</mosaic_0001>

<llo_original>
// kernel: a_call__.1
$region0: #{a_call__.1}
  #allocation0 [shape = 'u32[]', space=smem, size = 0x4, offset = 0x4, fixed_abs, tag = 'smem constant byte address 0x4 - core index']
  #allocation1 [shape = 'u32[72,128]{1,0:T(1,128)}', space=vmem, size = 0x9000, scoped, tag = 'internal scratch']
  #allocation2 [shape = 'bf16[49,27]{1,0:T(8,128)(2,1)}', space=vmem, size = 0x3800, scoped, tag = 'scratch operand']
  #allocation3 [shape = 'bf16[49,32]{1,0:T(8,128)(2,1)}', space=vmem, size = 0x3800, scoped, tag = 'scratch operand']
  #allocation4 [shape = 'bf16[9,288]{1,0:T(8,128)(2,1)}', space=vmem, size = 0x3000, scoped, tag = 'scratch operand']
  %s0 = inlined_call_operand.vmem [shape: bf16[2,32,8,3], index: 0, kind: input, shape index: {}]
  %s1 = inlined_call_operand.vmem [shape: bf16[27,32], index: 1, kind: input, shape index: {}]
  %s2 = inlined_call_operand.vmem [shape: bf16[288,32], index: 2, kind: input, shape index: {}]
  %s3 = inlined_call_operand.vmem [shape: f32[2,9,32], index: 3, kind: output, shape index: {}]
  %s4 = sld [smem:[#allocation0]]
  $region45: #{a_call__.1} parent=0
    _
  %s6 = ssub.s32 1, %s4
  %s7 = scalar_select 0, %s6, %s4
  loop: start=0, step=1, limit=4
  $region2: #{a_call__.1} parent=0 // loop_pre_header
    _
  $region3: #{a_call__.1} parent=0 // loop_header
    %s9 = sphi 0, %s13
    %p10 = scmp.ge.s32.totalorder %s9, 4
    %s19 = sphi 0, %s21
    %s22 = sphi 0, %s19
    %s23 = sphi 0, %s22
    %s39 = sphi 0, %s23
    %s43 = sphi 0, %s43
    %s45 = sphi 0, %s43
    %s46 = sphi 0, %s45
    %s60 = sphi 0, %s46
    %s64 = sphi 0, %s64
    %s66 = sphi 0, %s64
    %s67 = sphi 0, %s66
    %s81 = sphi 0, %s67
    %s87 = sphi 0, %s89
    %s90 = sphi 0, %s87
    %s91 = sphi 0, %s90
    %s107 = sphi 0, %s91
  $region4: #{a_call__.1} parent=0 // loop_header_branch
    %12 = sbr.rel (%p10) target = $region8
  $region5: #{a_call__.1} parent=0 // loop_body
    %s14 = ssub.s32 %s9, 1
    %s15 = ssub.s32 %s9, 2
    %s16 = sadd.s32 %s9, 1
    %s17 = ssub.s32 %s9, %s16
    %p18 = scmp.eq.s32.totalorder %s17, 0
    %s20 = sadd.s32 %s19, 1
    %s21 = scalar_select %p18, %s19, %s20
    %p24 = pneg %p18
    %p25 = scmp.eq.s32.totalorder %s9, 1
    %p26 = por %p24, %p25
    %p27 = scmp.ne.s32.totalorder %s19, %s22
    %p28 = scmp.eq.s32.totalorder %s9, 0
    %p29 = por %p27, %p28
    %p30 = scmp.ne.s32.totalorder %s19, %s22
    %p31 = scmp.eq.s32.totalorder %s14, 1
    %p32 = por %p30, %p31
    %p33 = scmp.ne.s32.totalorder %s22, %s23
    %p34 = scmp.eq.s32.totalorder %s14, 0
    %p35 = por %p33, %p34
    %p36 = scmp.ne.s32.totalorder %s22, %s23
    %p37 = scmp.eq.s32.totalorder %s15, 1
    %p38 = por %p36, %p37
    %p40 = scmp.ne.s32.totalorder %s23, %s39
    %p41 = scmp.eq.s32.totalorder %s15, 0
    %p42 = por %p40, %p41
    %s44 = sadd.s32 %s43, 1
    %p47 = scmp.eq.s32.totalorder %s9, 1
    %p48 = scmp.ne.s32.totalorder %s43, %s45
    %p49 = scmp.eq.s32.totalorder %s9, 0
    %p50 = por %p48, %p49
    %p51 = scmp.ne.s32.totalorder %s43, %s45
    %p52 = scmp.eq.s32.totalorder %s14, 1
    %p53 = por %p51, %p52
    %p54 = scmp.ne.s32.totalorder %s45, %s46
    %p55 = scmp.eq.s32.totalorder %s14, 0
    %p56 = por %p54, %p55
    %p57 = scmp.ne.s32.totalorder %s45, %s46
    %p58 = scmp.eq.s32.totalorder %s15, 1
    %p59 = por %p57, %p58
    %p61 = scmp.ne.s32.totalorder %s46, %s60
    %p62 = scmp.eq.s32.totalorder %s15, 0
    %p63 = por %p61, %p62
    %s65 = sadd.s32 %s64, 1
    %p68 = scmp.eq.s32.totalorder %s9, 1
    %p69 = scmp.ne.s32.totalorder %s64, %s66
    %p70 = scmp.eq.s32.totalorder %s9, 0
    %p71 = por %p69, %p70
    %p72 = scmp.ne.s32.totalorder %s64, %s66
    %p73 = scmp.eq.s32.totalorder %s14, 1
    %p74 = por %p72, %p73
    %p75 = scmp.ne.s32.totalorder %s66, %s67
    %p76 = scmp.eq.s32.totalorder %s14, 0
    %p77 = por %p75, %p76
    %p78 = scmp.ne.s32.totalorder %s66, %s67
    %p79 = scmp.eq.s32.totalorder %s15, 1
    %p80 = por %p78, %p79
    %p82 = scmp.ne.s32.totalorder %s67, %s81
    %p83 = scmp.eq.s32.totalorder %s15, 0
    %p84 = por %p82, %p83
    %s85 = ssub.s32 %s9, %s16
    %p86 = scmp.eq.s32.totalorder %s85, 0
    %s88 = sadd.s32 %s87, 1
    %s89 = scalar_select %p86, %s87, %s88
    %p92 = pneg %p86
    %p93 = scmp.eq.s32.totalorder %s9, 1
    %p94 = por %p92, %p93
    %p95 = scmp.ne.s32.totalorder %s87, %s90
    %p96 = scmp.eq.s32.totalorder %s9, 0
    %p97 = por %p95, %p96
    %p98 = scmp.ne.s32.totalorder %s87, %s90
    %p99 = scmp.eq.s32.totalorder %s14, 1
    %p100 = por %p98, %p99
    %p101 = scmp.ne.s32.totalorder %s90, %s91
    %p102 = scmp.eq.s32.totalorder %s14, 0
    %p103 = por %p101, %p102
    %p104 = scmp.ne.s32.totalorder %s90, %s91
    %p105 = scmp.eq.s32.totalorder %s15, 1
    %p106 = por %p104, %p105
    %p108 = scmp.ne.s32.totalorder %s91, %s107
    %p109 = scmp.eq.s32.totalorder %s15, 0
    %p110 = por %p108, %p109
    %p111 = scmp.le.s32.totalorder 1, %s9
    %p112 = scmp.lt.s32.totalorder %s9, 3
    %p113 = pnand %p111, %p112
    %p114 = pneg %p113
    // Predicated region
    $region9: #{a_call__.1} parent=5 // pred_check
      _
    $region10: #{a_call__.1} parent=5 // pred_check_branch
      %116 = sbr.rel (%p113) target = $region12
    $region11: #{a_call__.1} parent=5 // pred_region
      %s117 = ssub.s32 %s9, 1
      // Predicated region
      $region13: #{a_call__.1} parent=11 // pred_check
        %p118 = pneg %p56
      $region14: #{a_call__.1} parent=11 // pred_check_branch
        %120 = sbr.rel (%p118) target = $region16
      $region15: #{a_call__.1} parent=11 // pred_region
        _
      $region16: #{a_call__.1} parent=11 // pred_fallthru
        _
      // Predicated region
      $region17: #{a_call__.1} parent=11 // pred_check
        %p121 = pneg %p77
      $region18: #{a_call__.1} parent=11 // pred_check_branch
        %123 = sbr.rel (%p121) target = $region20
      $region19: #{a_call__.1} parent=11 // pred_region
        _
      $region20: #{a_call__.1} parent=11 // pred_fallthru
        _
    $region12: #{a_call__.1} parent=5 // pred_fallthru
      _
    %p124 = scmp.lt.s32.totalorder %s9, 2
    // Predicated region
    $region21: #{a_call__.1} parent=5 // pred_check
      %p125 = pneg %p124
    $region22: #{a_call__.1} parent=5 // pred_check_branch
      %127 = sbr.rel (%p125) target = $region24
    $region23: #{a_call__.1} parent=5 // pred_region
      // Predicated region
      $region25: #{a_call__.1} parent=23 // pred_check
        %p128 = pneg %p29
      $region26: #{a_call__.1} parent=23 // pred_check_branch
        %130 = sbr.rel (%p128) target = $region28
      $region27: #{a_call__.1} parent=23 // pred_region
        %p131 = scmp.lt.s32.totalorder %s9, 1
        %s132 = scalar_select %p131, %s9, 1
        %s133 = smul.addr %s132, 32
        %s134 = smul.addr %s133, 4
        %s135 = scalar_lea.vmem %s0, %s134
      $region28: #{a_call__.1} parent=23 // pred_fallthru
        _
    $region24: #{a_call__.1} parent=5 // pred_fallthru
      _
    %p136 = scmp.le.s32.totalorder 1, %s9
    %p137 = scmp.lt.s32.totalorder %s9, 3
    %p138 = pnand %p136, %p137
    %p139 = pneg %p138
    // Predicated region
    $region29: #{a_call__.1} parent=5 // pred_check
      _
    $region30: #{a_call__.1} parent=5 // pred_check_branch
      %141 = sbr.rel (%p138) target = $region32
    $region31: #{a_call__.1} parent=5 // pred_region
      %s142 = ssub.s32 %s9, 1
      %p143 = scmp.lt.s32.totalorder %s14, 1
      %s144 = scalar_select %p143, %s14, 1
      %s145 = smul.addr %s144, 32
      %s146 = smul.addr %s145, 4
      %s147 = scalar_lea.vmem %s0, %s146
      %p148 = pneg %p35
      %p149 = pneg %p32
      %p150 = pneg %p56
      %p151 = pneg %p53
      %p152 = pneg %p77
      %p153 = pneg %p74
      %p154 = pneg %p103
      %p155 = pneg %p100
      %p156 = scmp.lt.s32.totalorder %s14, 1
      %s157 = scalar_select %p156, %s14, 1
      %s158 = smul.addr %s157, 2
      %s159 = smul.addr %s158, 8
      %s160 = scalar_lea.vmem %s3, %s159
      %p161 = scmp.lt.s32.totalorder %s14, 1
      %s162 = scalar_select %p161, %s14, 1
      %s163 = smul.addr %s162, 32
      %s164 = smul.addr %s163, 4
      %s165 = scalar_lea.vmem %s0, %s164
      %p166 = scmp.lt.s32.totalorder %s14, 1
      %s167 = scalar_select %p166, %s14, 1
      %s168 = smul.addr %s167, 2
      %s169 = smul.addr %s168, 8
      %s170 = scalar_lea.vmem %s3, %s169
      %v172 = vld [vmem:[%s165] sm:$0xf]
      %vm173 = vcmask 19456
      %vm174 = vsmask.f32 3328
      %vm175 = vmand %vm173, %vm174
      %v176 = vld [vmem:[#allocation2] sm:$0xf]
      %v177 = vsel %vm175, %v172, %v176
      %178 = vst [vmem:[#allocation2] sm:$0xf] %v177
      %s179 = scalar_lea.vmem %s165, 32
      %v180 = vld [vmem:[%s179] sm:$0xf]
      %182 = vrot.lane.b32.xlu0 %v180, 3
      %v183 = vpop.permute.xlu0 %182
      %vm185 = vcmask 44056
      %vm186 = vmand %vm185, %vm174
      %v187 = vld [vmem:[#allocation2] sm:$0xf]
      %v188 = vsel %vm186, %v183, %v187
      %189 = vst [vmem:[#allocation2] sm:$0xf] %v188
      %v190 = vld [vmem:[%s165] sm:$0xf]
      %v192 = vshrl.u32 %v190, 16
      %v194 = vrot.slane %v192, 4
      %v195 = vshll.u32 %v190, 16
      %v197 = vrot.slane %v195, 5
      %v198 = vor.u32 %v194, %v197
      %v199 = vrot.slane %v198, 4
      %200 = vrot.lane.b32.xlu0 %v199, 6
      %v201 = vpop.permute.xlu0 %200
      %vm203 = vcmask 68656
      %vm204 = vmand %vm203, %vm174
      %v205 = vld [vmem:[#allocation2] sm:$0xf]
      %v206 = vsel %vm204, %v201, %v205
      %207 = vst [vmem:[#allocation2] sm:$0xf] %v206
      %s208 = scalar_lea.vmem %s165, 64
      %v209 = vld [vmem:[%s208] sm:$0xf]
      %211 = vrot.lane.b32.xlu0 %v209, 9
      %v212 = vpop.permute.xlu0 %211
      %vm214 = vcmask 93256
      %vm215 = vmand %vm214, %vm174
      %v216 = vld [vmem:[#allocation2] sm:$0xf]
      %v217 = vsel %vm215, %v212, %v216
      %218 = vst [vmem:[#allocation2] sm:$0xf] %v217
      %s219 = scalar_lea.vmem %s165, 96
      %v220 = vld [vmem:[%s219] sm:$0xf]
      %222 = vrot.lane.b32.xlu0 %v220, 12
      %v223 = vpop.permute.xlu0 %222
      %vm225 = vcmask 117856
      %vm226 = vmand %vm225, %vm174
      %v227 = vld [vmem:[#allocation2] sm:$0xf]
      %v228 = vsel %vm226, %v223, %v227
      %229 = vst [vmem:[#allocation2] sm:$0xf] %v228
      %v230 = vld [vmem:[%s208] sm:$0xf]
      %v232 = vshrl.u32 %v230, 16
      %v234 = vrot.slane %v232, 4
      %v235 = vshll.u32 %v230, 16
      %v237 = vrot.slane %v235, 5
      %v238 = vor.u32 %v234, %v237
      %v239 = vrot.slane %v238, 4
      %240 = vrot.lane.b32.xlu0 %v239, 15
      %v241 = vpop.permute.xlu0 %240
      %vm243 = vcmask 142456
      %vm244 = vmand %vm243, %vm174
      %v245 = vld [vmem:[#allocation2] sm:$0xf]
      %v246 = vsel %vm244, %v241, %v245
      %247 = vst [vmem:[#allocation2] sm:$0xf] %v246
      %s248 = scalar_lea.vmem %s165, 4
      %v249 = vld [vmem:[%s248] sm:$0xf]
      %251 = vrot.lane.b32.xlu0 %v249, 18
      %v252 = vpop.permute.xlu0 %251
      %vm254 = vcmask 167056
      %vm255 = vmand %vm254, %vm174
      %v256 = vld [vmem:[#allocation2] sm:$0xf]
      %v257 = vsel %vm255, %v252, %v256
      %258 = vst [vmem:[#allocation2] sm:$0xf] %v257
      %s259 = scalar_lea.vmem %s165, 36
      %v260 = vld [vmem:[%s259] sm:$0xf]
      %262 = vrot.lane.b32.xlu0 %v260, 21
      %v263 = vpop.permute.xlu0 %262
      %vm265 = vcmask 191656
      %vm266 = vmand %vm265, %vm174
      %v267 = vld [vmem:[#allocation2] sm:$0xf]
      %v268 = vsel %vm266, %v263, %v267
      %269 = vst [vmem:[#allocation2] sm:$0xf] %v268
      %v270 = vld [vmem:[%s248] sm:$0xf]
      %v272 = vshrl.u32 %v270, 16
      %v274 = vrot.slane %v272, 4
      %v275 = vshll.u32 %v270, 16
      %v277 = vrot.slane %v275, 5
      %v278 = vor.u32 %v274, %v277
      %v279 = vrot.slane %v278, 4
      %280 = vrot.lane.b32.xlu0 %v279, 24
      %v281 = vpop.permute.xlu0 %280
      %vm283 = vcmask 216256
      %vm284 = vmand %vm283, %vm174
      %v285 = vld [vmem:[#allocation2] sm:$0xf]
      %v286 = vsel %vm284, %v281, %v285
      %287 = vst [vmem:[#allocation2] sm:$0xf] %v286
      %v288 = vld [vmem:[%s248] sm:$0xf]
      %v290 = vshll.u32 %v288, 16
      %v292 = vrot.slane %v290, 5
      %v293 = vshrl.u32 %v288, 16
      %v295 = vrot.slane %v293, 4
      %v296 = vor.u32 %v295, %v292
      %v297 = vrot.slane %v296, 4
      %vm300 = vcmask 19459
      %vm301 = vsmask.f32 7950
      %vm302 = vmand %vm300, %vm301
      %v303 = vld [vmem:[#allocation2] sm:$0x8]
      %v304 = vsel %vm302, %v292, %v303
      %305 = vst [vmem:[#allocation2] sm:$0x8] %v304
      %vm306 = vcmask 18432
      %307 = vst.msk [vmem:[#allocation2 + $0x4] sm:$0x7] %vm306, %v297
      %v308 = vld [vmem:[%s259] sm:$0xf]
      %v310 = vshll.u32 %v308, 16
      %v312 = vrot.slane %v310, 5
      %v313 = vshrl.u32 %v308, 16
      %v315 = vrot.slane %v313, 4
      %v316 = vor.u32 %v315, %v312
      %v317 = vrot.slane %v316, 4
      %318 = vrot.lane.b32.xlu0 %v312, 3
      %v319 = vpop.permute.xlu0 %318
      %320 = vrot.lane.b32.xlu0 %v317, 3
      %v321 = vpop.permute.xlu0 %320
      %vm324 = vcmask 44059
      %vm325 = vmand %vm324, %vm301
      %v326 = vld [vmem:[#allocation2] sm:$0x8]
      %v327 = vsel %vm325, %v319, %v326
      %328 = vst [vmem:[#allocation2] sm:$0x8] %v327
      %vm329 = vcmask 43032
      %330 = vst.msk [vmem:[#allocation2 + $0x4] sm:$0x7] %vm329, %v321
      %v331 = vld [vmem:[%s248] sm:$0xf]
      %v333 = vrot.slane %v331, 5
      %v334 = vrot.slane %v333, 4
      %335 = vrot.lane.b32.xlu0 %v333, 6
      %v336 = vpop.permute.xlu0 %335
      %337 = vrot.lane.b32.xlu0 %v334, 6
      %v338 = vpop.permute.xlu0 %337
      %vm341 = vcmask 68659
      %vm342 = vmand %vm341, %vm301
      %v343 = vld [vmem:[#allocation2] sm:$0x8]
      %v344 = vsel %vm342, %v336, %v343
      %345 = vst [vmem:[#allocation2] sm:$0x8] %v344
      %vm346 = vcmask 67632
      %347 = vst.msk [vmem:[#allocation2 + $0x4] sm:$0x7] %vm346, %v338
      %s348 = scalar_lea.vmem %s165, 68
      %v349 = vld [vmem:[%s348] sm:$0xf]
      %v351 = vshll.u32 %v349, 16
      %v353 = vrot.slane %v351, 5
      %v354 = vshrl.u32 %v349, 16
      %v356 = vrot.slane %v354, 4
      %v357 = vor.u32 %v356, %v353
      %v358 = vrot.slane %v357, 4
      %359 = vrot.lane.b32.xlu0 %v353, 9
      %v360 = vpop.permute.xlu0 %359
      %361 = vrot.lane.b32.xlu0 %v358, 9
      %v362 = vpop.permute.xlu0 %361
      %vm365 = vcmask 93259
      %vm366 = vmand %vm365, %vm301
      %v367 = vld [vmem:[#allocation2] sm:$0x8]
      %v368 = vsel %vm366, %v360, %v367
      %369 = vst [vmem:[#allocation2] sm:$0x8] %v368
      %vm370 = vcmask 92232
      %371 = vst.msk [vmem:[#allocation2 + $0x4] sm:$0x7] %vm370, %v362
      %s372 = scalar_lea.vmem %s165, 100
      %v373 = vld [vmem:[%s372] sm:$0xf]
      %v375 = vshll.u32 %v373, 16
      %v377 = vrot.slane %v375, 5
      %v378 = vshrl.u32 %v373, 16
      %v380 = vrot.slane %v378, 4
      %v381 = vor.u32 %v380, %v377
      %v382 = vrot.slane %v381, 4
      %383 = vrot.lane.b32.xlu0 %v377, 12
      %v384 = vpop.permute.xlu0 %383
      %385 = vrot.lane.b32.xlu0 %v382, 12
      %v386 = vpop.permute.xlu0 %385
      %vm389 = vcmask 117859
      %vm390 = vmand %vm389, %vm301
      %v391 = vld [vmem:[#allocation2] sm:$0x8]
      %v392 = vsel %vm390, %v384, %v391
      %393 = vst [vmem:[#allocation2] sm:$0x8] %v392
      %vm394 = vcmask 116832
      %395 = vst.msk [vmem:[#allocation2 + $0x4] sm:$0x7] %vm394, %v386
      %v396 = vld [vmem:[%s348] sm:$0xf]
      %v398 = vrot.slane %v396, 5
      %v399 = vrot.slane %v398, 4
      %400 = vrot.lane.b32.xlu0 %v398, 15
      %v401 = vpop.permute.xlu0 %400
      %402 = vrot.lane.b32.xlu0 %v399, 15
      %v403 = vpop.permute.xlu0 %402
      %vm406 = vcmask 142459
      %vm407 = vmand %vm406, %vm301
      %v408 = vld [vmem:[#allocation2] sm:$0x8]
      %v409 = vsel %vm407, %v401, %v408
      %410 = vst [vmem:[#allocation2] sm:$0x8] %v409
      %vm411 = vcmask 141432
      %412 = vst.msk [vmem:[#allocation2 + $0x4] sm:$0x7] %vm411, %v403
      %s413 = scalar_lea.vmem %s165, 8
      %v414 = vld [vmem:[%s413] sm:$0xf]
      %v416 = vshll.u32 %v414, 16
      %v418 = vrot.slane %v416, 5
      %v419 = vshrl.u32 %v414, 16
      %v421 = vrot.slane %v419, 4
      %v422 = vor.u32 %v421, %v418
      %v423 = vrot.slane %v422, 4
      %424 = vrot.lane.b32.xlu0 %v418, 18
      %v425 = vpop.permute.xlu0 %424
      %426 = vrot.lane.b32.xlu0 %v423, 18
      %v427 = vpop.permute.xlu0 %426
      %vm430 = vcmask 167059
      %vm431 = vmand %vm430, %vm301
      %v432 = vld [vmem:[#allocation2] sm:$0x8]
      %v433 = vsel %vm431, %v425, %v432
      %434 = vst [vmem:[#allocation2] sm:$0x8] %v433
      %vm435 = vcmask 166032
      %436 = vst.msk [vmem:[#allocation2 + $0x4] sm:$0x7] %vm435, %v427
      %s437 = scalar_lea.vmem %s165, 40
      %v438 = vld [vmem:[%s437] sm:$0xf]
      %v440 = vshll.u32 %v438, 16
      %v442 = vrot.slane %v440, 5
      %v443 = vshrl.u32 %v438, 16
      %v445 = vrot.slane %v443, 4
      %v446 = vor.u32 %v445, %v442
      %v447 = vrot.slane %v446, 4
      %448 = vrot.lane.b32.xlu0 %v442, 21
      %v449 = vpop.permute.xlu0 %448
      %450 = vrot.lane.b32.xlu0 %v447, 21
      %v451 = vpop.permute.xlu0 %450
      %vm454 = vcmask 191659
      %vm455 = vmand %vm454, %vm301
      %v456 = vld [vmem:[#allocation2] sm:$0x8]
      %v457 = vsel %vm455, %v449, %v456
      %458 = vst [vmem:[#allocation2] sm:$0x8] %v457
      %vm459 = vcmask 190632
      %460 = vst.msk [vmem:[#allocation2 + $0x4] sm:$0x7] %vm459, %v451
      %v461 = vld [vmem:[%s413] sm:$0xf]
      %v463 = vrot.slane %v461, 5
      %v464 = vrot.slane %v463, 4
      %465 = vrot.lane.b32.xlu0 %v463, 24
      %v466 = vpop.permute.xlu0 %465
      %467 = vrot.lane.b32.xlu0 %v464, 24
      %v468 = vpop.permute.xlu0 %467
      %vm471 = vcmask 216259
      %vm472 = vmand %vm471, %vm301
      %v473 = vld [vmem:[#allocation2] sm:$0x8]
      %v474 = vsel %vm472, %v466, %v473
      %475 = vst [vmem:[#allocation2] sm:$0x8] %v474
      %vm476 = vcmask 215232
      %477 = vst.msk [vmem:[#allocation2 + $0x4] sm:$0x7] %vm476, %v468
      %v478 = vld [vmem:[%s413] sm:$0xf]
      %v480 = vrot.slane %v478, 5
      %v481 = vrot.slane %v480, 4
      %vm484 = vcmask 19459
      %485 = vst.msk [vmem:[#allocation2 + $0x4] sm:$0x8] %vm484, %v480
      %vm486 = vcmask 18432
      %vm487 = vsmask.f32 2304
      %vm488 = vmand %vm486, %vm487
      %v489 = vld [vmem:[#allocation2 + $0x8] sm:$0x7]
      %v490 = vsel %vm488, %v481, %v489
      %491 = vst [vmem:[#allocation2 + $0x8] sm:$0x7] %v490
      %v492 = vld [vmem:[%s437] sm:$0xf]
      %v494 = vrot.slane %v492, 5
      %v495 = vrot.slane %v494, 4
      %496 = vrot.lane.b32.xlu0 %v494, 3
      %v497 = vpop.permute.xlu0 %496
      %498 = vrot.lane.b32.xlu0 %v495, 3
      %v499 = vpop.permute.xlu0 %498
      %vm502 = vcmask 44059
      %503 = vst.msk [vmem:[#allocation2 + $0x4] sm:$0x8] %vm502, %v497
      %vm504 = vcmask 43032
      %vm505 = vmand %vm504, %vm487
      %v506 = vld [vmem:[#allocation2 + $0x8] sm:$0x7]
      %v507 = vsel %vm505, %v499, %v506
      %508 = vst [vmem:[#allocation2 + $0x8] sm:$0x7] %v507
      %v509 = vld [vmem:[%s413] sm:$0xf]
      %v511 = vshrl.u32 %v509, 16
      %v513 = vrot.slane %v511, 5
      %v514 = vshll.u32 %v509, 16
      %v516 = vrot.slane %v514, 6
      %v517 = vor.u32 %v513, %v516
      %v518 = vrot.slane %v517, 4
      %519 = vrot.lane.b32.xlu0 %v517, 6
      %v520 = vpop.permute.xlu0 %519
      %521 = vrot.lane.b32.xlu0 %v518, 6
      %v522 = vpop.permute.xlu0 %521
      %vm525 = vcmask 68659
      %526 = vst.msk [vmem:[#allocation2 + $0x4] sm:$0x8] %vm525, %v520
      %vm527 = vcmask 67632
      %vm528 = vmand %vm527, %vm487
      %v529 = vld [vmem:[#allocation2 + $0x8] sm:$0x7]
      %v530 = vsel %vm528, %v522, %v529
      %531 = vst [vmem:[#allocation2 + $0x8] sm:$0x7] %v530
      %s532 = scalar_lea.vmem %s165, 72
      %v533 = vld [vmem:[%s532] sm:$0xf]
      %v535 = vrot.slane %v533, 5
      %v536 = vrot.slane %v535, 4
      %537 = vrot.lane.b32.xlu0 %v535, 9
      %v538 = vpop.permute.xlu0 %537
      %539 = vrot.lane.b32.xlu0 %v536, 9
      %v540 = vpop.permute.xlu0 %539
      %vm543 = vcmask 93259
      %544 = vst.msk [vmem:[#allocation2 + $0x4] sm:$0x8] %vm543, %v538
      %vm545 = vcmask 92232
      %vm546 = vmand %vm545, %vm487
      %v547 = vld [vmem:[#allocation2 + $0x8] sm:$0x7]
      %v548 = vsel %vm546, %v540, %v547
      %549 = vst [vmem:[#allocation2 + $0x8] sm:$0x7] %v548
      %s550 = scalar_lea.vmem %s165, 104
      %v551 = vld [vmem:[%s550] sm:$0xf]
      %v553 = vrot.slane %v551, 5
      %v554 = vrot.slane %v553, 4
      %555 = vrot.lane.b32.xlu0 %v553, 12
      %v556 = vpop.permute.xlu0 %555
      %557 = vrot.lane.b32.xlu0 %v554, 12
      %v558 = vpop.permute.xlu0 %557
      %vm561 = vcmask 117859
      %562 = vst.msk [vmem:[#allocation2 + $0x4] sm:$0x8] %vm561, %v556
      %vm563 = vcmask 116832
      %vm564 = vmand %vm563, %vm487
      %v565 = vld [vmem:[#allocation2 + $0x8] sm:$0x7]
      %v566 = vsel %vm564, %v558, %v565
      %567 = vst [vmem:[#allocation2 + $0x8] sm:$0x7] %v566
      %v568 = vld [vmem:[%s532] sm:$0xf]
      %v570 = vshrl.u32 %v568, 16
      %v572 = vrot.slane %v570, 5
      %v573 = vshll.u32 %v568, 16
      %v575 = vrot.slane %v573, 6
      %v576 = vor.u32 %v572, %v575
      %v577 = vrot.slane %v576, 4
      %578 = vrot.lane.b32.xlu0 %v576, 15
      %v579 = vpop.permute.xlu0 %578
      %580 = vrot.lane.b32.xlu0 %v577, 15
      %v581 = vpop.permute.xlu0 %580
      %vm584 = vcmask 142459
      %585 = vst.msk [vmem:[#allocation2 + $0x4] sm:$0x8] %vm584, %v579
      %vm586 = vcmask 141432
      %vm587 = vmand %vm586, %vm487
      %v588 = vld [vmem:[#allocation2 + $0x8] sm:$0x7]
      %v589 = vsel %vm587, %v581, %v588
      %590 = vst [vmem:[#allocation2 + $0x8] sm:$0x7] %v589
      %s591 = scalar_lea.vmem %s165, 12
      %v592 = vld [vmem:[%s591] sm:$0xf]
      %v594 = vrot.slane %v592, 5
      %v595 = vrot.slane %v594, 4
      %596 = vrot.lane.b32.xlu0 %v594, 18
      %v597 = vpop.permute.xlu0 %596
      %598 = vrot.lane.b32.xlu0 %v595, 18
      %v599 = vpop.permute.xlu0 %598
      %vm602 = vcmask 167059
      %603 = vst.msk [vmem:[#allocation2 + $0x4] sm:$0x8] %vm602, %v597
      %vm604 = vcmask 166032
      %vm605 = vmand %vm604, %vm487
      %v606 = vld [vmem:[#allocation2 + $0x8] sm:$0x7]
      %v607 = vsel %vm605, %v599, %v606
      %608 = vst [vmem:[#allocation2 + $0x8] sm:$0x7] %v607
      %s609 = scalar_lea.vmem %s165, 44
      %v610 = vld [vmem:[%s609] sm:$0xf]
      %v612 = vrot.slane %v610, 5
      %v613 = vrot.slane %v612, 4
      %614 = vrot.lane.b32.xlu0 %v612, 21
      %v615 = vpop.permute.xlu0 %614
      %616 = vrot.lane.b32.xlu0 %v613, 21
      %v617 = vpop.permute.xlu0 %616
      %vm620 = vcmask 191659
      %621 = vst.msk [vmem:[#allocation2 + $0x4] sm:$0x8] %vm620, %v615
      %vm622 = vcmask 190632
      %vm623 = vmand %vm622, %vm487
      %v624 = vld [vmem:[#allocation2 + $0x8] sm:$0x7]
      %v625 = vsel %vm623, %v617, %v624
      %626 = vst [vmem:[#allocation2 + $0x8] sm:$0x7] %v625
      %v627 = vld [vmem:[%s591] sm:$0xf]
      %v629 = vshrl.u32 %v627, 16
      %v631 = vrot.slane %v629, 5
      %v632 = vshll.u32 %v627, 16
      %v634 = vrot.slane %v632, 6
      %v635 = vor.u32 %v631, %v634
      %v636 = vrot.slane %v635, 4
      %637 = vrot.lane.b32.xlu0 %v635, 24
      %v638 = vpop.permute.xlu0 %637
      %639 = vrot.lane.b32.xlu0 %v636, 24
      %v640 = vpop.permute.xlu0 %639
      %vm643 = vcmask 216259
      %644 = vst.msk [vmem:[#allocation2 + $0x4] sm:$0x8] %vm643, %v638
      %vm645 = vcmask 215232
      %vm646 = vmand %vm645, %vm487
      %v647 = vld [vmem:[#allocation2 + $0x8] sm:$0x7]
      %v648 = vsel %vm646, %v640, %v647
      %649 = vst [vmem:[#allocation2 + $0x8] sm:$0x7] %v648
      %v650 = vld [vmem:[%s591] sm:$0xf]
      %v652 = vshrl.u32 %v650, 16
      %v654 = vrot.slane %v652, 5
      %v655 = vshll.u32 %v650, 16
      %v657 = vrot.slane %v655, 6
      %v658 = vor.u32 %v654, %v657
      %v659 = vrot.slane %v658, 4
      %vm662 = vcmask 19458
      %vm663 = vsmask.f32 7946
      %vm664 = vmand %vm662, %vm663
      %v665 = vld [vmem:[#allocation2 + $0x8] sm:$0xc]
      %v666 = vsel %vm664, %v658, %v665
      %667 = vst [vmem:[#allocation2 + $0x8] sm:$0xc] %v666
      %vm668 = vcmask 17408
      %669 = vst.msk [vmem:[#allocation2 + $0xc] sm:$0x3] %vm668, %v659
      %v670 = vld [vmem:[%s609] sm:$0xf]
      %v672 = vshrl.u32 %v670, 16
      %v674 = vrot.slane %v672, 5
      %v675 = vshll.u32 %v670, 16
      %v677 = vrot.slane %v675, 6
      %v678 = vor.u32 %v674, %v677
      %v679 = vrot.slane %v678, 4
      %680 = vrot.lane.b32.xlu0 %v678, 3
      %v681 = vpop.permute.xlu0 %680
      %682 = vrot.lane.b32.xlu0 %v679, 3
      %v683 = vpop.permute.xlu0 %682
      %vm686 = vcmask 44058
      %vm687 = vmand %vm686, %vm663
      %v688 = vld [vmem:[#allocation2 + $0x8] sm:$0xc]
      %v689 = vsel %vm687, %v681, %v688
      %690 = vst [vmem:[#allocation2 + $0x8] sm:$0xc] %v689
      %vm691 = vcmask 42008
      %692 = vst.msk [vmem:[#allocation2 + $0xc] sm:$0x3] %vm691, %v683
      %v693 = vld [vmem:[%s591] sm:$0xf]
      %v695 = vrot.slane %v693, 6
      %v696 = vrot.slane %v695, 4
      %697 = vrot.lane.b32.xlu0 %v695, 6
      %v698 = vpop.permute.xlu0 %697
      %699 = vrot.lane.b32.xlu0 %v696, 6
      %v700 = vpop.permute.xlu0 %699
      %vm703 = vcmask 68658
      %vm704 = vmand %vm703, %vm663
      %v705 = vld [vmem:[#allocation2 + $0x8] sm:$0xc]
      %v706 = vsel %vm704, %v698, %v705
      %707 = vst [vmem:[#allocation2 + $0x8] sm:$0xc] %v706
      %vm708 = vcmask 66608
      %709 = vst.msk [vmem:[#allocation2 + $0xc] sm:$0x3] %vm708, %v700
      %s710 = scalar_lea.vmem %s165, 76
      %v711 = vld [vmem:[%s710] sm:$0xf]
      %v713 = vshrl.u32 %v711, 16
      %v715 = vrot.slane %v713, 5
      %v716 = vshll.u32 %v711, 16
      %v718 = vrot.slane %v716, 6
      %v719 = vor.u32 %v715, %v718
      %v720 = vrot.slane %v719, 4
      %721 = vrot.lane.b32.xlu0 %v719, 9
      %v722 = vpop.permute.xlu0 %721
      %723 = vrot.lane.b32.xlu0 %v720, 9
      %v724 = vpop.permute.xlu0 %723
      %vm727 = vcmask 93258
      %vm728 = vmand %vm727, %vm663
      %v729 = vld [vmem:[#allocation2 + $0x8] sm:$0xc]
      %v730 = vsel %vm728, %v722, %v729
      %731 = vst [vmem:[#allocation2 + $0x8] sm:$0xc] %v730
      %vm732 = vcmask 91208
      %733 = vst.msk [vmem:[#allocation2 + $0xc] sm:$0x3] %vm732, %v724
      %s734 = scalar_lea.vmem %s165, 108
      %v735 = vld [vmem:[%s734] sm:$0xf]
      %v737 = vshrl.u32 %v735, 16
      %v739 = vrot.slane %v737, 5
      %v740 = vshll.u32 %v735, 16
      %v742 = vrot.slane %v740, 6
      %v743 = vor.u32 %v739, %v742
      %v744 = vrot.slane %v743, 4
      %745 = vrot.lane.b32.xlu0 %v743, 12
      %v746 = vpop.permute.xlu0 %745
      %747 = vrot.lane.b32.xlu0 %v744, 12
      %v748 = vpop.permute.xlu0 %747
      %vm751 = vcmask 117858
      %vm752 = vmand %vm751, %vm663
      %v753 = vld [vmem:[#allocation2 + $0x8] sm:$0xc]
      %v754 = vsel %vm752, %v746, %v753
      %755 = vst [vmem:[#allocation2 + $0x8] sm:$0xc] %v754
      %vm756 = vcmask 115808
      %757 = vst.msk [vmem:[#allocation2 + $0xc] sm:$0x3] %vm756, %v748
      %v758 = vld [vmem:[%s710] sm:$0xf]
      %v760 = vrot.slane %v758, 6
      %v761 = vrot.slane %v760, 4
      %762 = vrot.lane.b32.xlu0 %v760, 15
      %v763 = vpop.permute.xlu0 %762
      %764 = vrot.lane.b32.xlu0 %v761, 15
      %v765 = vpop.permute.xlu0 %764
      %vm768 = vcmask 142458
      %vm769 = vmand %vm768, %vm663
      %v770 = vld [vmem:[#allocation2 + $0x8] sm:$0xc]
      %v771 = vsel %vm769, %v763, %v770
      %772 = vst [vmem:[#allocation2 + $0x8] sm:$0xc] %v771
      %vm773 = vcmask 140408
      %774 = vst.msk [vmem:[#allocation2 + $0xc] sm:$0x3] %vm773, %v765
      %s775 = scalar_lea.vmem %s165, 16
      %v776 = vld [vmem:[%s775] sm:$0xf]
      %v778 = vshrl.u32 %v776, 16
      %v780 = vrot.slane %v778, 5
      %v781 = vshll.u32 %v776, 16
      %v783 = vrot.slane %v781, 6
      %v784 = vor.u32 %v780, %v783
      %v785 = vrot.slane %v784, 4
      %786 = vrot.lane.b32.xlu0 %v784, 18
      %v787 = vpop.permute.xlu0 %786
      %788 = vrot.lane.b32.xlu0 %v785, 18
      %v789 = vpop.permute.xlu0 %788
      %vm792 = vcmask 167058
      %vm793 = vmand %vm792, %vm663
      %v794 = vld [vmem:[#allocation2 + $0x8] sm:$0xc]
      %v795 = vsel %vm793, %v787, %v794
      %796 = vst [vmem:[#allocation2 + $0x8] sm:$0xc] %v795
      %vm797 = vcmask 165008
      %798 = vst.msk [vmem:[#allocation2 + $0xc] sm:$0x3] %vm797, %v789
      %s799 = scalar_lea.vmem %s165, 48
      %v800 = vld [vmem:[%s799] sm:$0xf]
      %v802 = vshrl.u32 %v800, 16
      %v804 = vrot.slane %v802, 5
      %v805 = vshll.u32 %v800, 16
      %v807 = vrot.slane %v805, 6
      %v808 = vor.u32 %v804, %v807
      %v809 = vrot.slane %v808, 4
      %810 = vrot.lane.b32.xlu0 %v808, 21
      %v811 = vpop.permute.xlu0 %810
      %812 = vrot.lane.b32.xlu0 %v809, 21
      %v813 = vpop.permute.xlu0 %812
      %vm816 = vcmask 191658
      %vm817 = vmand %vm816, %vm663
      %v818 = vld [vmem:[#allocation2 + $0x8] sm:$0xc]
      %v819 = vsel %vm817, %v811, %v818
      %820 = vst [vmem:[#allocation2 + $0x8] sm:$0xc] %v819
      %vm821 = vcmask 189608
      %822 = vst.msk [vmem:[#allocation2 + $0xc] sm:$0x3] %vm821, %v813
      %v823 = vld [vmem:[%s775] sm:$0xf]
      %v825 = vrot.slane %v823, 6
      %v826 = vrot.slane %v825, 4
      %827 = vrot.lane.b32.xlu0 %v825, 24
      %v828 = vpop.permute.xlu0 %827
      %829 = vrot.lane.b32.xlu0 %v826, 24
      %v830 = vpop.permute.xlu0 %829
      %vm833 = vcmask 216258
      %vm834 = vmand %vm833, %vm663
      %v835 = vld [vmem:[#allocation2 + $0x8] sm:$0xc]
      %v836 = vsel %vm834, %v828, %v835
      %837 = vst [vmem:[#allocation2 + $0x8] sm:$0xc] %v836
      %vm838 = vcmask 214208
      %839 = vst.msk [vmem:[#allocation2 + $0xc] sm:$0x3] %vm838, %v830
      %v840 = vld [vmem:[%s775] sm:$0xf]
      %v842 = vrot.slane %v840, 6
      %v843 = vrot.slane %v842, 4
      %vm846 = vcmask 19458
      %847 = vst.msk [vmem:[#allocation2 + $0xc] sm:$0xc] %vm846, %v842
      %vm848 = vcmask 17408
      %vm849 = vsmask.f32 1280
      %vm850 = vmand %vm848, %vm849
      %v851 = vld [vmem:[#allocation2 + $0x10] sm:$0x3]
      %v852 = vsel %vm850, %v843, %v851
      %853 = vst [vmem:[#allocation2 + $0x10] sm:$0x3] %v852
      %v854 = vld [vmem:[%s799] sm:$0xf]
      %v856 = vrot.slane %v854, 6
      %v857 = vrot.slane %v856, 4
      %858 = vrot.lane.b32.xlu0 %v856, 3
      %v859 = vpop.permute.xlu0 %858
      %860 = vrot.lane.b32.xlu0 %v857, 3
      %v861 = vpop.permute.xlu0 %860
      %vm864 = vcmask 44058
      %865 = vst.msk [vmem:[#allocation2 + $0xc] sm:$0xc] %vm864, %v859
      %vm866 = vcmask 42008
      %vm867 = vmand %vm866, %vm849
      %v868 = vld [vmem:[#allocation2 + $0x10] sm:$0x3]
      %v869 = vsel %vm867, %v861, %v868
      %870 = vst [vmem:[#allocation2 + $0x10] sm:$0x3] %v869
      %v871 = vld [vmem:[%s775] sm:$0xf]
      %v873 = vshrl.u32 %v871, 16
      %v875 = vrot.slane %v873, 6
      %v876 = vshll.u32 %v871, 16
      %v878 = vrot.slane %v876, 7
      %v879 = vor.u32 %v875, %v878
      %v880 = vrot.slane %v879, 4
      %881 = vrot.lane.b32.xlu0 %v879, 6
      %v882 = vpop.permute.xlu0 %881
      %883 = vrot.lane.b32.xlu0 %v880, 6
      %v884 = vpop.permute.xlu0 %883
      %vm887 = vcmask 68658
      %888 = vst.msk [vmem:[#allocation2 + $0xc] sm:$0xc] %vm887, %v882
      %vm889 = vcmask 66608
      %vm890 = vmand %vm889, %vm849
      %v891 = vld [vmem:[#allocation2 + $0x10] sm:$0x3]
      %v892 = vsel %vm890, %v884, %v891
      %893 = vst [vmem:[#allocation2 + $0x10] sm:$0x3] %v892
      %s894 = scalar_lea.vmem %s165, 80
      %v895 = vld [vmem:[%s894] sm:$0xf]
      %v897 = vrot.slane %v895, 6
      %v898 = vrot.slane %v897, 4
      %899 = vrot.lane.b32.xlu0 %v897, 9
      %v900 = vpop.permute.xlu0 %899
      %901 = vrot.lane.b32.xlu0 %v898, 9
      %v902 = vpop.permute.xlu0 %901
      %vm905 = vcmask 93258
      %906 = vst.msk [vmem:[#allocation2 + $0xc] sm:$0xc] %vm905, %v900
      %vm907 = vcmask 91208
      %vm908 = vmand %vm907, %vm849
      %v909 = vld [vmem:[#allocation2 + $0x10] sm:$0x3]
      %v910 = vsel %vm908, %v902, %v909
      %911 = vst [vmem:[#allocation2 + $0x10] sm:$0x3] %v910
      %s912 = scalar_lea.vmem %s165, 112
      %v913 = vld [vmem:[%s912] sm:$0xf]
      %v915 = vrot.slane %v913, 6
      %v916 = vrot.slane %v915, 4
      %917 = vrot.lane.b32.xlu0 %v915, 12
      %v918 = vpop.permute.xlu0 %917
      %919 = vrot.lane.b32.xlu0 %v916, 12
      %v920 = vpop.permute.xlu0 %919
      %vm923 = vcmask 117858
      %924 = vst.msk [vmem:[#allocation2 + $0xc] sm:$0xc] %vm923, %v918
      %vm925 = vcmask 115808
      %vm926 = vmand %vm925, %vm849
      %v927 = vld [vmem:[#allocation2 + $0x10] sm:$0x3]
      %v928 = vsel %vm926, %v920, %v927
      %929 = vst [vmem:[#allocation2 + $0x10] sm:$0x3] %v928
      %v930 = vld [vmem:[%s894] sm:$0xf]
      %v932 = vshrl.u32 %v930, 16
      %v934 = vrot.slane %v932, 6
      %v935 = vshll.u32 %v930, 16
      %v937 = vrot.slane %v935, 7
      %v938 = vor.u32 %v934, %v937
      %v939 = vrot.slane %v938, 4
      %940 = vrot.lane.b32.xlu0 %v938, 15
      %v941 = vpop.permute.xlu0 %940
      %942 = vrot.lane.b32.xlu0 %v939, 15
      %v943 = vpop.permute.xlu0 %942
      %vm946 = vcmask 142458
      %947 = vst.msk [vmem:[#allocation2 + $0xc] sm:$0xc] %vm946, %v941
      %vm948 = vcmask 140408
      %vm949 = vmand %vm948, %vm849
      %v950 = vld [vmem:[#allocation2 + $0x10] sm:$0x3]
      %v951 = vsel %vm949, %v943, %v950
      %952 = vst [vmem:[#allocation2 + $0x10] sm:$0x3] %v951
      %s953 = scalar_lea.vmem %s165, 20
      %v954 = vld [vmem:[%s953] sm:$0xf]
      %v956 = vrot.slane %v954, 6
      %v957 = vrot.slane %v956, 4
      %958 = vrot.lane.b32.xlu0 %v956, 18
      %v959 = vpop.permute.xlu0 %958
      %960 = vrot.lane.b32.xlu0 %v957, 18
      %v961 = vpop.permute.xlu0 %960
      %vm964 = vcmask 167058
      %965 = vst.msk [vmem:[#allocation2 + $0xc] sm:$0xc] %vm964, %v959
      %vm966 = vcmask 165008
      %vm967 = vmand %vm966, %vm849
      %v968 = vld [vmem:[#allocation2 + $0x10] sm:$0x3]
      %v969 = vsel %vm967, %v961, %v968
      %970 = vst [vmem:[#allocation2 + $0x10] sm:$0x3] %v969
      %s971 = scalar_lea.vmem %s165, 52
      %v972 = vld [vmem:[%s971] sm:$0xf]
      %v974 = vrot.slane %v972, 6
      %v975 = vrot.slane %v974, 4
      %976 = vrot.lane.b32.xlu0 %v974, 21
      %v977 = vpop.permute.xlu0 %976
      %978 = vrot.lane.b32.xlu0 %v975, 21
      %v979 = vpop.permute.xlu0 %978
      %vm982 = vcmask 191658
      %983 = vst.msk [vmem:[#allocation2 + $0xc] sm:$0xc] %vm982, %v977
      %vm984 = vcmask 189608
      %vm985 = vmand %vm984, %vm849
      %v986 = vld [vmem:[#allocation2 + $0x10] sm:$0x3]
      %v987 = vsel %vm985, %v979, %v986
      %988 = vst [vmem:[#allocation2 + $0x10] sm:$0x3] %v987
      %v989 = vld [vmem:[%s953] sm:$0xf]
      %v991 = vshrl.u32 %v989, 16
      %v993 = vrot.slane %v991, 6
      %v994 = vshll.u32 %v989, 16
      %v996 = vrot.slane %v994, 7
      %v997 = vor.u32 %v993, %v996
      %v998 = vrot.slane %v997, 4
      %999 = vrot.lane.b32.xlu0 %v997, 24
      %v1000 = vpop.permute.xlu0 %999
      %1001 = vrot.lane.b32.xlu0 %v998, 24
      %v1002 = vpop.permute.xlu0 %1001
      %vm1005 = vcmask 216258
      %1006 = vst.msk [vmem:[#allocation2 + $0xc] sm:$0xc] %vm1005, %v1000
      %vm1007 = vcmask 214208
      %vm1008 = vmand %vm1007, %vm849
      %v1009 = vld [vmem:[#allocation2 + $0x10] sm:$0x3]
      %v1010 = vsel %vm1008, %v1002, %v1009
      %1011 = vst [vmem:[#allocation2 + $0x10] sm:$0x3] %v1010
      %v1012 = vld [vmem:[%s953] sm:$0xf]
      %v1014 = vshrl.u32 %v1012, 16
      %v1016 = vrot.slane %v1014, 6
      %v1017 = vshll.u32 %v1012, 16
      %v1019 = vrot.slane %v1017, 7
      %v1020 = vor.u32 %v1016, %v1019
      %v1021 = vrot.slane %v1020, 4
      %vm1024 = vcmask 19457
      %vm1025 = vsmask.f32 7942
      %vm1026 = vmand %vm1024, %vm1025
      %v1027 = vld [vmem:[#allocation2 + $0x10] sm:$0xe]
      %v1028 = vsel %vm1026, %v1020, %v1027
      %1029 = vst [vmem:[#allocation2 + $0x10] sm:$0xe] %v1028
      %vm1030 = vcmask 16384
      %1031 = vst.msk [vmem:[#allocation2 + $0x14] sm:$0x1] %vm1030, %v1021
      %v1032 = vld [vmem:[%s971] sm:$0xf]
      %v1034 = vshrl.u32 %v1032, 16
      %v1036 = vrot.slane %v1034, 6
      %v1037 = vshll.u32 %v1032, 16
      %v1039 = vrot.slane %v1037, 7
      %v1040 = vor.u32 %v1036, %v1039
      %v1041 = vrot.slane %v1040, 4
      %1042 = vrot.lane.b32.xlu0 %v1040, 3
      %v1043 = vpop.permute.xlu0 %1042
      %1044 = vrot.lane.b32.xlu0 %v1041, 3
      %v1045 = vpop.permute.xlu0 %1044
      %vm1048 = vcmask 44057
      %vm1049 = vmand %vm1048, %vm1025
      %v1050 = vld [vmem:[#allocation2 + $0x10] sm:$0xe]
      %v1051 = vsel %vm1049, %v1043, %v1050
      %1052 = vst [vmem:[#allocation2 + $0x10] sm:$0xe] %v1051
      %vm1053 = vcmask 40984
      %1054 = vst.msk [vmem:[#allocation2 + $0x14] sm:$0x1] %vm1053, %v1045
      %v1055 = vld [vmem:[%s953] sm:$0xf]
      %v1057 = vrot.slane %v1055, 7
      %v1058 = vrot.slane %v1057, 4
      %1059 = vrot.lane.b32.xlu0 %v1057, 6
      %v1060 = vpop.permute.xlu0 %1059
      %1061 = vrot.lane.b32.xlu0 %v1058, 6
      %v1062 = vpop.permute.xlu0 %1061
      %vm1065 = vcmask 68657
      %vm1066 = vmand %vm1065, %vm1025
      %v1067 = vld [vmem:[#allocation2 + $0x10] sm:$0xe]
      %v1068 = vsel %vm1066, %v1060, %v1067
      %1069 = vst [vmem:[#allocation2 + $0x10] sm:$0xe] %v1068
      %vm1070 = vcmask 65584
      %1071 = vst.msk [vmem:[#allocation2 + $0x14] sm:$0x1] %vm1070, %v1062
      %s1072 = scalar_lea.vmem %s165, 84
      %v1073 = vld [vmem:[%s1072] sm:$0xf]
      %v1075 = vshrl.u32 %v1073, 16
      %v1077 = vrot.slane %v1075, 6
      %v1078 = vshll.u32 %v1073, 16
      %v1080 = vrot.slane %v1078, 7
      %v1081 = vor.u32 %v1077, %v1080
      %v1082 = vrot.slane %v1081, 4
      %1083 = vrot.lane.b32.xlu0 %v1081, 9
      %v1084 = vpop.permute.xlu0 %1083
      %1085 = vrot.lane.b32.xlu0 %v1082, 9
      %v1086 = vpop.permute.xlu0 %1085
      %vm1089 = vcmask 93257
      %vm1090 = vmand %vm1089, %vm1025
      %v1091 = vld [vmem:[#allocation2 + $0x10] sm:$0xe]
      %v1092 = vsel %vm1090, %v1084, %v1091
      %1093 = vst [vmem:[#allocation2 + $0x10] sm:$0xe] %v1092
      %vm1094 = vcmask 90184
      %1095 = vst.msk [vmem:[#allocation2 + $0x14] sm:$0x1] %vm1094, %v1086
      %s1096 = scalar_lea.vmem %s165, 116
      %v1097 = vld [vmem:[%s1096] sm:$0xf]
      %v1099 = vshrl.u32 %v1097, 16
      %v1101 = vrot.slane %v1099, 6
      %v1102 = vshll.u32 %v1097, 16
      %v1104 = vrot.slane %v1102, 7
      %v1105 = vor.u32 %v1101, %v1104
      %v1106 = vrot.slane %v1105, 4
      %1107 = vrot.lane.b32.xlu0 %v1105, 12
      %v1108 = vpop.permute.xlu0 %1107
      %1109 = vrot.lane.b32.xlu0 %v1106, 12
      %v1110 = vpop.permute.xlu0 %1109
      %vm1113 = vcmask 117857
      %vm1114 = vmand %vm1113, %vm1025
      %v1115 = vld [vmem:[#allocation2 + $0x10] sm:$0xe]
      %v1116 = vsel %vm1114, %v1108, %v1115
      %1117 = vst [vmem:[#allocation2 + $0x10] sm:$0xe] %v1116
      %vm1118 = vcmask 114784
      %1119 = vst.msk [vmem:[#allocation2 + $0x14] sm:$0x1] %vm1118, %v1110
      %v1120 = vld [vmem:[%s1072] sm:$0xf]
      %v1122 = vrot.slane %v1120, 7
      %v1123 = vrot.slane %v1122, 4
      %1124 = vrot.lane.b32.xlu0 %v1122, 15
      %v1125 = vpop.permute.xlu0 %1124
      %1126 = vrot.lane.b32.xlu0 %v1123, 15
      %v1127 = vpop.permute.xlu0 %1126
      %vm1130 = vcmask 142457
      %vm1131 = vmand %vm1130, %vm1025
      %v1132 = vld [vmem:[#allocation2 + $0x10] sm:$0xe]
      %v1133 = vsel %vm1131, %v1125, %v1132
      %1134 = vst [vmem:[#allocation2 + $0x10] sm:$0xe] %v1133
      %vm1135 = vcmask 139384
      %1136 = vst.msk [vmem:[#allocation2 + $0x14] sm:$0x1] %vm1135, %v1127
      %s1137 = scalar_lea.vmem %s165, 24
      %v1138 = vld [vmem:[%s1137] sm:$0xf]
      %v1140 = vshrl.u32 %v1138, 16
      %v1142 = vrot.slane %v1140, 6
      %v1143 = vshll.u32 %v1138, 16
      %v1145 = vrot.slane %v1143, 7
      %v1146 = vor.u32 %v1142, %v1145
      %v1147 = vrot.slane %v1146, 4
      %1148 = vrot.lane.b32.xlu0 %v1146, 18
      %v1149 = vpop.permute.xlu0 %1148
      %1150 = vrot.lane.b32.xlu0 %v1147, 18
      %v1151 = vpop.permute.xlu0 %1150
      %vm1154 = vcmask 167057
      %vm1155 = vmand %vm1154, %vm1025
      %v1156 = vld [vmem:[#allocation2 + $0x10] sm:$0xe]
      %v1157 = vsel %vm1155, %v1149, %v1156
      %1158 = vst [vmem:[#allocation2 + $0x10] sm:$0xe] %v1157
      %vm1159 = vcmask 163984
      %1160 = vst.msk [vmem:[#allocation2 + $0x14] sm:$0x1] %vm1159, %v1151
      %s1161 = scalar_lea.vmem %s165, 56
      %v1162 = vld [vmem:[%s1161] sm:$0xf]
      %v1164 = vshrl.u32 %v1162, 16
      %v1166 = vrot.slane %v1164, 6
      %v1167 = vshll.u32 %v1162, 16
      %v1169 = vrot.slane %v1167, 7
      %v1170 = vor.u32 %v1166, %v1169
      %v1171 = vrot.slane %v1170, 4
      %1172 = vrot.lane.b32.xlu0 %v1170, 21
      %v1173 = vpop.permute.xlu0 %1172
      %1174 = vrot.lane.b32.xlu0 %v1171, 21
      %v1175 = vpop.permute.xlu0 %1174
      %vm1178 = vcmask 191657
      %vm1179 = vmand %vm1178, %vm1025
      %v1180 = vld [vmem:[#allocation2 + $0x10] sm:$0xe]
      %v1181 = vsel %vm1179, %v1173, %v1180
      %1182 = vst [vmem:[#allocation2 + $0x10] sm:$0xe] %v1181
      %vm1183 = vcmask 188584
      %1184 = vst.msk [vmem:[#allocation2 + $0x14] sm:$0x1] %vm1183, %v1175
      %v1185 = vld [vmem:[%s1137] sm:$0xf]
      %v1187 = vrot.slane %v1185, 7
      %v1188 = vrot.slane %v1187, 4
      %1189 = vrot.lane.b32.xlu0 %v1187, 24
      %v1190 = vpop.permute.xlu0 %1189
      %1191 = vrot.lane.b32.xlu0 %v1188, 24
      %v1192 = vpop.permute.xlu0 %1191
      %vm1195 = vcmask 216257
      %vm1196 = vmand %vm1195, %vm1025
      %v1197 = vld [vmem:[#allocation2 + $0x10] sm:$0xe]
      %v1198 = vsel %vm1196, %v1190, %v1197
      %1199 = vst [vmem:[#allocation2 + $0x10] sm:$0xe] %v1198
      %vm1200 = vcmask 213184
      %1201 = vst.msk [vmem:[#allocation2 + $0x14] sm:$0x1] %vm1200, %v1192
      %v1202 = vld [vmem:[%s1137] sm:$0xf]
      %v1204 = vrot.slane %v1202, 7
      %v1205 = vrot.slane %v1204, 4
      %vm1208 = vcmask 19457
      %1209 = vst.msk [vmem:[#allocation2 + $0x14] sm:$0xe] %vm1208, %v1204
      %vm1210 = vcmask 16384
      %vm1211 = vsmask.f32 256
      %vm1212 = vmand %vm1210, %vm1211
      %v1213 = vld [vmem:[#allocation2 + $0x18] sm:$0x1]
      %v1214 = vsel %vm1212, %v1205, %v1213
      %1215 = vst [vmem:[#allocation2 + $0x18] sm:$0x1] %v1214
      %v1216 = vld [vmem:[%s1161] sm:$0xf]
      %v1218 = vrot.slane %v1216, 7
      %v1219 = vrot.slane %v1218, 4
      %1220 = vrot.lane.b32.xlu0 %v1218, 3
      %v1221 = vpop.permute.xlu0 %1220
      %1222 = vrot.lane.b32.xlu0 %v1219, 3
      %v1223 = vpop.permute.xlu0 %1222
      %vm1226 = vcmask 44057
      %1227 = vst.msk [vmem:[#allocation2 + $0x14] sm:$0xe] %vm1226, %v1221
      %vm1228 = vcmask 40984
      %vm1229 = vmand %vm1228, %vm1211
      %v1230 = vld [vmem:[#allocation2 + $0x18] sm:$0x1]
      %v1231 = vsel %vm1229, %v1223, %v1230
      %1232 = vst [vmem:[#allocation2 + $0x18] sm:$0x1] %v1231
      %v1233 = vld [vmem:[%s1137] sm:$0xf]
      %v1235 = vshrl.u32 %v1233, 16
      %v1237 = vrot.slane %v1235, 7
      %v1238 = vshll.u32 %v1233, 16
      %v1240 = vor.u32 %v1237, %v1238
      %v1241 = vrot.slane %v1237, 4
      %1242 = vrot.lane.b32.xlu0 %v1240, 6
      %v1243 = vpop.permute.xlu0 %1242
      %1244 = vrot.lane.b32.xlu0 %v1241, 6
      %v1245 = vpop.permute.xlu0 %1244
      %vm1248 = vcmask 68657
      %1249 = vst.msk [vmem:[#allocation2 + $0x14] sm:$0xe] %vm1248, %v1243
      %vm1250 = vcmask 65584
      %vm1251 = vmand %vm1250, %vm1211
      %v1252 = vld [vmem:[#allocation2 + $0x18] sm:$0x1]
      %v1253 = vsel %vm1251, %v1245, %v1252
      %1254 = vst [vmem:[#allocation2 + $0x18] sm:$0x1] %v1253
      %s1255 = scalar_lea.vmem %s165, 88
      %v1256 = vld [vmem:[%s1255] sm:$0xf]
      %v1258 = vrot.slane %v1256, 7
      %v1259 = vrot.slane %v1258, 4
      %1260 = vrot.lane.b32.xlu0 %v1258, 9
      %v1261 = vpop.permute.xlu0 %1260
      %1262 = vrot.lane.b32.xlu0 %v1259, 9
      %v1263 = vpop.permute.xlu0 %1262
      %vm1266 = vcmask 93257
      %1267 = vst.msk [vmem:[#allocation2 + $0x14] sm:$0xe] %vm1266, %v1261
      %vm1268 = vcmask 90184
      %vm1269 = vmand %vm1268, %vm1211
      %v1270 = vld [vmem:[#allocation2 + $0x18] sm:$0x1]
      %v1271 = vsel %vm1269, %v1263, %v1270
      %1272 = vst [vmem:[#allocation2 + $0x18] sm:$0x1] %v1271
      %s1273 = scalar_lea.vmem %s165, 120
      %v1274 = vld [vmem:[%s1273] sm:$0xf]
      %v1276 = vrot.slane %v1274, 7
      %v1277 = vrot.slane %v1276, 4
      %1278 = vrot.lane.b32.xlu0 %v1276, 12
      %v1279 = vpop.permute.xlu0 %1278
      %1280 = vrot.lane.b32.xlu0 %v1277, 12
      %v1281 = vpop.permute.xlu0 %1280
      %vm1284 = vcmask 117857
      %1285 = vst.msk [vmem:[#allocation2 + $0x14] sm:$0xe] %vm1284, %v1279
      %vm1286 = vcmask 114784
      %vm1287 = vmand %vm1286, %vm1211
      %v1288 = vld [vmem:[#allocation2 + $0x18] sm:$0x1]
      %v1289 = vsel %vm1287, %v1281, %v1288
      %1290 = vst [vmem:[#allocation2 + $0x18] sm:$0x1] %v1289
      %v1291 = vld [vmem:[%s1255] sm:$0xf]
      %v1293 = vshrl.u32 %v1291, 16
      %v1295 = vrot.slane %v1293, 7
      %v1296 = vshll.u32 %v1291, 16
      %v1298 = vor.u32 %v1295, %v1296
      %v1299 = vrot.slane %v1295, 4
      %1300 = vrot.lane.b32.xlu0 %v1298, 15
      %v1301 = vpop.permute.xlu0 %1300
      %1302 = vrot.lane.b32.xlu0 %v1299, 15
      %v1303 = vpop.permute.xlu0 %1302
      %vm1306 = vcmask 142457
      %1307 = vst.msk [vmem:[#allocation2 + $0x14] sm:$0xe] %vm1306, %v1301
      %vm1308 = vcmask 139384
      %vm1309 = vmand %vm1308, %vm1211
      %v1310 = vld [vmem:[#allocation2 + $0x18] sm:$0x1]
      %v1311 = vsel %vm1309, %v1303, %v1310
      %1312 = vst [vmem:[#allocation2 + $0x18] sm:$0x1] %v1311
      %s1313 = scalar_lea.vmem %s165, 28
      %v1314 = vld [vmem:[%s1313] sm:$0xf]
      %v1316 = vrot.slane %v1314, 7
      %v1317 = vrot.slane %v1316, 4
      %1318 = vrot.lane.b32.xlu0 %v1316, 18
      %v1319 = vpop.permute.xlu0 %1318
      %1320 = vrot.lane.b32.xlu0 %v1317, 18
      %v1321 = vpop.permute.xlu0 %1320
      %vm1324 = vcmask 167057
      %1325 = vst.msk [vmem:[#allocation2 + $0x14] sm:$0xe] %vm1324, %v1319
      %vm1326 = vcmask 163984
      %vm1327 = vmand %vm1326, %vm1211
      %v1328 = vld [vmem:[#allocation2 + $0x18] sm:$0x1]
      %v1329 = vsel %vm1327, %v1321, %v1328
      %1330 = vst [vmem:[#allocation2 + $0x18] sm:$0x1] %v1329
      %s1331 = scalar_lea.vmem %s165, 60
      %v1332 = vld [vmem:[%s1331] sm:$0xf]
      %v1334 = vrot.slane %v1332, 7
      %v1335 = vrot.slane %v1334, 4
      %1336 = vrot.lane.b32.xlu0 %v1334, 21
      %v1337 = vpop.permute.xlu0 %1336
      %1338 = vrot.lane.b32.xlu0 %v1335, 21
      %v1339 = vpop.permute.xlu0 %1338
      %vm1342 = vcmask 191657
      %1343 = vst.msk [vmem:[#allocation2 + $0x14] sm:$0xe] %vm1342, %v1337
      %vm1344 = vcmask 188584
      %vm1345 = vmand %vm1344, %vm1211
      %v1346 = vld [vmem:[#allocation2 + $0x18] sm:$0x1]
      %v1347 = vsel %vm1345, %v1339, %v1346
      %1348 = vst [vmem:[#allocation2 + $0x18] sm:$0x1] %v1347
      %v1349 = vld [vmem:[%s1313] sm:$0xf]
      %v1351 = vshrl.u32 %v1349, 16
      %v1353 = vrot.slane %v1351, 7
      %v1354 = vshll.u32 %v1349, 16
      %v1356 = vor.u32 %v1353, %v1354
      %v1357 = vrot.slane %v1353, 4
      %1358 = vrot.lane.b32.xlu0 %v1356, 24
      %v1359 = vpop.permute.xlu0 %1358
      %1360 = vrot.lane.b32.xlu0 %v1357, 24
      %v1361 = vpop.permute.xlu0 %1360
      %vm1364 = vcmask 216257
      %1365 = vst.msk [vmem:[#allocation2 + $0x14] sm:$0xe] %vm1364, %v1359
      %vm1366 = vcmask 213184
      %vm1367 = vmand %vm1366, %vm1211
      %v1368 = vld [vmem:[#allocation2 + $0x18] sm:$0x1]
      %v1369 = vsel %vm1367, %v1361, %v1368
      %1370 = vst [vmem:[#allocation2 + $0x18] sm:$0x1] %v1369
      %v1371 = vld [vmem:[#allocation2] sm:$0xf]
      %v1372 = vld [vmem:[#allocation2 + $0x4] sm:$0xf]
      %v1373 = vld [vmem:[#allocation2 + $0x8] sm:$0xf]
      %v1374 = vld [vmem:[#allocation2 + $0xc] sm:$0xf]
      %v1375 = vld [vmem:[#allocation2 + $0x10] sm:$0xf]
      %v1376 = vld [vmem:[#allocation2 + $0x14] sm:$0xf]
      %v1377 = vld [vmem:[#allocation2 + $0x18] sm:$0x1]
      %v1378 = vld [vmem:[%s1] sm:$0xf]
      %v1379 = vld [vmem:[%s1 + $0x4] sm:$0xf]
      %v1380 = vld [vmem:[%s1 + $0x8] sm:$0xf]
      %v1381 = vld [vmem:[%s1 + $0xc] sm:$0x3]
      %v1389 = vunpack.c.l.b16 %v1371
      %v1390 = vunpack.c.l.b16 %v1372
      %v1391 = vunpack.c.l.b16 %v1373
      %v1392 = vunpack.c.l.b16 %v1374
      %v1393 = vunpack.c.l.b16 %v1375
      %v1394 = vunpack.c.l.b16 %v1376
      %v1395 = vunpack.c.l.b16 %v1377
      %v1396 = vpack.c.b16 %v1390, %v1389
      %v1397 = vpack.c.b16 %v1392, %v1391
      %v1398 = vpack.c.b16 %v1394, %v1393
      %v1399 = vpack.c.b16 %v1395, %v1395
      %v1404 = vunpack.c.l.b16 %v1378
      %v1405 = vunpack.c.l.b16 %v1379
      %v1406 = vunpack.c.l.b16 %v1380
      %v1407 = vunpack.c.l.b16 %v1381
      %v1408 = vpack.c.b16 %v1405, %v1404
      %v1409 = vpack.c.b16 %v1407, %v1406
      %vm1411 = vcmask 220160
      %v1413 = vsel %vm1411, %v1396, 0
      %v1416 = vsel %vm1411, %v1397, 0
      %v1419 = vsel %vm1411, %v1398, 0
      %v1422 = vsel %vm1411, %v1399, 0
      %vm1424 = vcmask 1044480
      %vm1425 = vcmask 1045504
      %v1426 = vsel %vm1424, 4294967295, 65535
      %v1427 = vsel %vm1425, %v1426, 0
      %v1429 = vand.u32 %v1409, %v1427
      %1431 = vmatpush.bf16.msra.mxu0 0
      %1432 = vmatpush.bf16.msra.mxu0 0
      %1433 = vmatpush.bf16.msra.mxu0 0
      %1434 = vmatpush.bf16.msra.mxu0 0
      %1435 = vmatpush.bf16.msra.mxu0 0
      %1436 = vmatpush.bf16.msra.mxu0 0
      %1437 = vmatpush.bf16.msra.mxu0 %v1429
      %1438 = vmatpush.bf16.msra.mxu0 %v1408
      %1439 = vmatmul.bf16.gmra.mxu0 %v1413
      %v1440 = vpop.f32.mrf.mxu0
      %v1441 = vadd.f32 0.0, %v1440
      %v1442 = vpop.f32.mrf.mxu0
      %v1443 = vadd.f32 0.0, %v1442
      %1444 = vmatmul.bf16.gmra.mxu0 %v1416
      %v1445 = vpop.f32.mrf.mxu0
      %v1446 = vadd.f32 0.0, %v1445
      %v1447 = vpop.f32.mrf.mxu0
      %v1448 = vadd.f32 0.0, %v1447
      %1449 = vmatmul.bf16.gmra.mxu0 %v1419
      %v1450 = vpop.f32.mrf.mxu0
      %v1451 = vadd.f32 0.0, %v1450
      %v1452 = vpop.f32.mrf.mxu0
      %v1453 = vadd.f32 0.0, %v1452
      %1454 = vmatmul.bf16.gmra.mxu0 %v1422
      %v1455 = vpop.f32.mrf.mxu0
      %v1456 = vadd.f32 0.0, %v1455
      %v1457 = vpop.f32.mrf.mxu0
      %1458 = vdwg.mxu0
      %v1459 = vpack.c.bf16 %v1441, %v1441
      %v1460 = vpack.c.bf16 %v1443, %v1443
      %v1461 = vpack.c.bf16 %v1446, %v1446
      %v1462 = vpack.c.bf16 %v1448, %v1448
      %v1463 = vpack.c.bf16 %v1451, %v1451
      %v1464 = vpack.c.bf16 %v1453, %v1453
      %v1465 = vpack.c.bf16 %v1456, %v1456
      %vm1466 = vcmask 257024
      %1467 = vst.msk [vmem:[#allocation3] sm:$0xf] %vm1466, %v1459
      %1468 = vst.msk [vmem:[#allocation3 + $0x4] sm:$0xf] %vm1466, %v1460
      %1469 = vst.msk [vmem:[#allocation3 + $0x8] sm:$0xf] %vm1466, %v1461
      %1470 = vst.msk [vmem:[#allocation3 + $0xc] sm:$0xf] %vm1466, %v1462
      %1471 = vst.msk [vmem:[#allocation3 + $0x10] sm:$0xf] %vm1466, %v1463
      %1472 = vst.msk [vmem:[#allocation3 + $0x14] sm:$0xf] %vm1466, %v1464
      %vm1473 = vcmask 253952
      %vm1474 = vmand %vm1473, %vm1211
      %v1475 = vld [vmem:[#allocation3 + $0x18] sm:$0x1]
      %v1476 = vsel %vm1474, %v1465, %v1475
      %1477 = vst [vmem:[#allocation3 + $0x18] sm:$0x1] %v1476
      %v1478 = vld [vmem:[#allocation3] sm:$0x1]
      %v1479 = vld [vmem:[#allocation4] sm:$0x1]
      %v1480 = vsel %vm1474, %v1478, %v1479
      %1481 = vst [vmem:[#allocation4] sm:$0x1] %v1480
      %v1482 = vld [vmem:[#allocation3] sm:$0x1]
      %v1484 = vshrl.u32 %v1482, 16
      %v1486 = vrot.slane %v1484, 4
      %v1487 = vrot.slane %v1486, 4
      %1488 = vrot.lane.b32.xlu0 %v1487, 32
      %v1489 = vpop.permute.xlu0 %1488
      %vm1491 = vcmask 516352
      %vm1492 = vmand %vm1491, %vm1211
      %v1493 = vld [vmem:[#allocation4] sm:$0x1]
      %v1494 = vsel %vm1492, %v1489, %v1493
      %1495 = vst [vmem:[#allocation4] sm:$0x1] %v1494
      %v1496 = vld [vmem:[#allocation3] sm:$0x2]
      %v1498 = vrot.slane %v1496, 5
      %v1499 = vrot.slane %v1498, 4
      %1500 = vrot.lane.b32.xlu0 %v1499, 64
      %v1501 = vpop.permute.xlu0 %1500
      %vm1503 = vcmask 778752
      %vm1504 = vmand %vm1503, %vm1211
      %v1505 = vld [vmem:[#allocation4] sm:$0x1]
      %v1506 = vsel %vm1504, %v1501, %v1505
      %1507 = vst [vmem:[#allocation4] sm:$0x1] %v1506
      %v1508 = vld [vmem:[#allocation3] sm:$0x8]
      %v1510 = vshrl.u32 %v1508, 16
      %v1512 = vrot.slane %v1510, 7
      %v1513 = vrot.slane %v1512, 4
      %1514 = vrot.lane.b32.xlu0 %v1513, 96
      %v1515 = vpop.permute.xlu0 %1514
      %vm1517 = vcmask 1041152
      %vm1518 = vmand %vm1517, %vm1211
      %v1519 = vld [vmem:[#allocation4] sm:$0x1]
      %v1520 = vsel %vm1518, %v1515, %v1519
      %1521 = vst [vmem:[#allocation4] sm:$0x1] %v1520
      %v1522 = vld [vmem:[#allocation3 + $0x4] sm:$0x1]
      %v1523 = vld [vmem:[#allocation4 + $0x4] sm:$0x1]
      %v1524 = vsel %vm1474, %v1522, %v1523
      %1525 = vst [vmem:[#allocation4 + $0x4] sm:$0x1] %v1524
      %v1526 = vld [vmem:[#allocation3 + $0x4] sm:$0x1]
      %v1528 = vshrl.u32 %v1526, 16
      %v1530 = vrot.slane %v1528, 4
      %v1531 = vrot.slane %v1530, 4
      %1532 = vrot.lane.b32.xlu0 %v1531, 32
      %v1533 = vpop.permute.xlu0 %1532
      %v1535 = vld [vmem:[#allocation4 + $0x4] sm:$0x1]
      %v1536 = vsel %vm1492, %v1533, %v1535
      %1537 = vst [vmem:[#allocation4 + $0x4] sm:$0x1] %v1536
      %v1538 = vld [vmem:[#allocation3 + $0x4] sm:$0x8]
      %v1540 = vrot.slane %v1538, 7
      %v1541 = vrot.slane %v1540, 4
      %1542 = vrot.lane.b32.xlu0 %v1541, 64
      %v1543 = vpop.permute.xlu0 %1542
      %v1545 = vld [vmem:[#allocation4 + $0x4] sm:$0x1]
      %v1546 = vsel %vm1504, %v1543, %v1545
      %1547 = vst [vmem:[#allocation4 + $0x4] sm:$0x1] %v1546
      %v1548 = vld [vmem:[#allocation3 + $0x4] sm:$0x8]
      %v1550 = vshrl.u32 %v1548, 16
      %v1552 = vrot.slane %v1550, 7
      %v1553 = vrot.slane %v1552, 4
      %1554 = vrot.lane.b32.xlu0 %v1553, 96
      %v1555 = vpop.permute.xlu0 %1554
      %v1557 = vld [vmem:[#allocation4 + $0x4] sm:$0x1]
      %v1558 = vsel %vm1518, %v1555, %v1557
      %1559 = vst [vmem:[#allocation4 + $0x4] sm:$0x1] %v1558
      %v1560 = vld [vmem:[#allocation3 + $0x8] sm:$0x1]
      %v1561 = vld [vmem:[#allocation4 + $0x8] sm:$0x1]
      %v1562 = vsel %vm1474, %v1560, %v1561
      %1563 = vst [vmem:[#allocation4 + $0x8] sm:$0x1] %v1562
      %v1564 = vld [vmem:[#allocation3] sm:$0x2]
      %v1566 = vshll.u32 %v1564, 16
      %v1568 = vrot.slane %v1566, 5
      %v1569 = vrot.slane %v1568, 4
      %vm1571 = vsmask.f32 7938
      %vm1572 = vmand %vm1473, %vm1571
      %v1573 = vld [vmem:[#allocation4] sm:$0x1]
      %v1574 = vsel %vm1572, %v1569, %v1573
      %1575 = vst [vmem:[#allocation4] sm:$0x1] %v1574
      %v1576 = vld [vmem:[#allocation3] sm:$0x2]
      %v1578 = vrot.slane %v1576, 5
      %v1579 = vrot.slane %v1578, 4
      %1580 = vrot.lane.b32.xlu0 %v1579, 32
      %v1581 = vpop.permute.xlu0 %1580
      %vm1583 = vmand %vm1491, %vm1571
      %v1584 = vld [vmem:[#allocation4] sm:$0x1]
      %v1585 = vsel %vm1583, %v1581, %v1584
      %1586 = vst [vmem:[#allocation4] sm:$0x1] %v1585
      %v1587 = vld [vmem:[#allocation3] sm:$0x4]
      %v1589 = vshll.u32 %v1587, 16
      %v1591 = vrot.slane %v1589, 6
      %v1592 = vrot.slane %v1591, 4
      %1593 = vrot.lane.b32.xlu0 %v1592, 64
      %v1594 = vpop.permute.xlu0 %1593
      %vm1596 = vmand %vm1503, %vm1571
      %v1597 = vld [vmem:[#allocation4] sm:$0x1]
      %v1598 = vsel %vm1596, %v1594, %v1597
      %1599 = vst [vmem:[#allocation4] sm:$0x1] %v1598
      %v1600 = vld [vmem:[#allocation3 + $0x4] sm:$0x1]
      %1602 = vrot.lane.b32.xlu0 %v1600, 96
      %v1603 = vpop.permute.xlu0 %1602
      %vm1605 = vmand %vm1517, %vm1571
      %v1606 = vld [vmem:[#allocation4] sm:$0x1]
      %v1607 = vsel %vm1605, %v1603, %v1606
      %1608 = vst [vmem:[#allocation4] sm:$0x1] %v1607
      %v1609 = vld [vmem:[#allocation3 + $0x4] sm:$0x2]
      %v1611 = vshll.u32 %v1609, 16
      %v1613 = vrot.slane %v1611, 5
      %v1614 = vrot.slane %v1613, 4
      %v1616 = vld [vmem:[#allocation4 + $0x4] sm:$0x1]
      %v1617 = vsel %vm1572, %v1614, %v1616
      %1618 = vst [vmem:[#allocation4 + $0x4] sm:$0x1] %v1617
      %v1619 = vld [vmem:[#allocation3 + $0x4] sm:$0x2]
      %v1621 = vrot.slane %v1619, 5
      %v1622 = vrot.slane %v1621, 4
      %1623 = vrot.lane.b32.xlu0 %v1622, 32
      %v1624 = vpop.permute.xlu0 %1623
      %v1626 = vld [vmem:[#allocation4 + $0x4] sm:$0x1]
      %v1627 = vsel %vm1583, %v1624, %v1626
      %1628 = vst [vmem:[#allocation4 + $0x4] sm:$0x1] %v1627
      %v1629 = vld [vmem:[#allocation3 + $0x8] sm:$0x1]
      %v1631 = vshll.u32 %v1629, 16
      %1633 = vrot.lane.b32.xlu0 %v1631, 64
      %v1634 = vpop.permute.xlu0 %1633
      %v1636 = vld [vmem:[#allocation4 + $0x4] sm:$0x1]
      %v1637 = vsel %vm1596, %v1634, %v1636
      %1638 = vst [vmem:[#allocation4 + $0x4] sm:$0x1] %v1637
      %v1639 = vld [vmem:[#allocation3 + $0x8] sm:$0x1]
      %1641 = vrot.lane.b32.xlu0 %v1639, 96
      %v1642 = vpop.permute.xlu0 %1641
      %v1644 = vld [vmem:[#allocation4 + $0x4] sm:$0x1]
      %v1645 = vsel %vm1605, %v1642, %v1644
      %1646 = vst [vmem:[#allocation4 + $0x4] sm:$0x1] %v1645
      %v1647 = vld [vmem:[#allocation3 + $0x8] sm:$0x2]
      %v1649 = vshll.u32 %v1647, 16
      %v1651 = vrot.slane %v1649, 5
      %v1652 = vrot.slane %v1651, 4
      %v1654 = vld [vmem:[#allocation4 + $0x8] sm:$0x1]
      %v1655 = vsel %vm1572, %v1652, %v1654
      %1656 = vst [vmem:[#allocation4 + $0x8] sm:$0x1] %v1655
      %v1657 = vld [vmem:[#allocation3] sm:$0x4]
      %v1659 = vrot.slane %v1657, 5
      %v1660 = vrot.slane %v1659, 4
      %vm1662 = vcmask 254977
      %vm1663 = vmand %vm1662, %vm849
      %v1664 = vld [vmem:[#allocation4] sm:$0x2]
      %v1665 = vsel %vm1663, %v1660, %v1664
      %1666 = vst [vmem:[#allocation4] sm:$0x2] %v1665
      %v1667 = vld [vmem:[#allocation3] sm:$0x4]
      %v1669 = vshrl.u32 %v1667, 16
      %v1671 = vrot.slane %v1669, 5
      %v1672 = vrot.slane %v1671, 4
      %1673 = vrot.lane.b32.xlu0 %v1672, 32
      %v1674 = vpop.permute.xlu0 %1673
      %vm1676 = vcmask 517377
      %vm1677 = vmand %vm1676, %vm849
      %v1678 = vld [vmem:[#allocation4] sm:$0x2]
      %v1679 = vsel %vm1677, %v1674, %v1678
      %1680 = vst [vmem:[#allocation4] sm:$0x2] %v1679
      %v1681 = vld [vmem:[#allocation3] sm:$0x8]
      %v1683 = vrot.slane %v1681, 6
      %v1684 = vrot.slane %v1683, 4
      %1685 = vrot.lane.b32.xlu0 %v1684, 64
      %v1686 = vpop.permute.xlu0 %1685
      %vm1688 = vcmask 779777
      %vm1689 = vmand %vm1688, %vm849
      %v1690 = vld [vmem:[#allocation4] sm:$0x2]
      %v1691 = vsel %vm1689, %v1686, %v1690
      %1692 = vst [vmem:[#allocation4] sm:$0x2] %v1691
      %v1693 = vld [vmem:[#allocation3 + $0x4] sm:$0x2]
      %v1695 = vshrl.u32 %v1693, 16
      %v1697 = vrot.slane %v1695, 4
      %v1698 = vrot.slane %v1697, 4
      %1699 = vrot.lane.b32.xlu0 %v1698, 96
      %v1700 = vpop.permute.xlu0 %1699
      %vm1702 = vcmask 1042177
      %vm1703 = vmand %vm1702, %vm849
      %v1704 = vld [vmem:[#allocation4] sm:$0x2]
      %v1705 = vsel %vm1703, %v1700, %v1704
      %1706 = vst [vmem:[#allocation4] sm:$0x2] %v1705
      %v1707 = vld [vmem:[#allocation3 + $0x4] sm:$0x4]
      %v1709 = vrot.slane %v1707, 5
      %v1710 = vrot.slane %v1709, 4
      %v1712 = vld [vmem:[#allocation4 + $0x4] sm:$0x2]
      %v1713 = vsel %vm1663, %v1710, %v1712
      %1714 = vst [vmem:[#allocation4 + $0x4] sm:$0x2] %v1713
      %v1715 = vld [vmem:[#allocation3 + $0x4] sm:$0x4]
      %v1717 = vshrl.u32 %v1715, 16
      %v1719 = vrot.slane %v1717, 5
      %v1720 = vrot.slane %v1719, 4
      %1721 = vrot.lane.b32.xlu0 %v1720, 32
      %v1722 = vpop.permute.xlu0 %1721
      %v1724 = vld [vmem:[#allocation4 + $0x4] sm:$0x2]
      %v1725 = vsel %vm1677, %v1722, %v1724
      %1726 = vst [vmem:[#allocation4 + $0x4] sm:$0x2] %v1725
      %v1727 = vld [vmem:[#allocation3 + $0x8] sm:$0x2]
      %1729 = vrot.lane.b32.xlu0 %v1727, 64
      %v1730 = vpop.permute.xlu0 %1729
      %v1732 = vld [vmem:[#allocation4 + $0x4] sm:$0x2]
      %v1733 = vsel %vm1689, %v1730, %v1732
      %1734 = vst [vmem:[#allocation4 + $0x4] sm:$0x2] %v1733
      %v1735 = vld [vmem:[#allocation3 + $0x8] sm:$0x2]
      %v1737 = vshrl.u32 %v1735, 16
      %v1739 = vrot.slane %v1737, 4
      %v1740 = vrot.slane %v1739, 4
      %1741 = vrot.lane.b32.xlu0 %v1740, 96
      %v1742 = vpop.permute.xlu0 %1741
      %v1744 = vld [vmem:[#allocation4 + $0x4] sm:$0x2]
      %v1745 = vsel %vm1703, %v1742, %v1744
      %1746 = vst [vmem:[#allocation4 + $0x4] sm:$0x2] %v1745
      %v1747 = vld [vmem:[#allocation3 + $0x8] sm:$0x4]
      %v1749 = vrot.slane %v1747, 5
      %v1750 = vrot.slane %v1749, 4
      %v1752 = vld [vmem:[#allocation4 + $0x8] sm:$0x2]
      %v1753 = vsel %vm1663, %v1750, %v1752
      %1754 = vst [vmem:[#allocation4 + $0x8] sm:$0x2] %v1753
      %v1755 = vld [vmem:[#allocation3 + $0x4] sm:$0x8]
      %v1757 = vshll.u32 %v1755, 16
      %v1759 = vrot.slane %v1757, 6
      %v1760 = vrot.slane %v1759, 4
      %vm1762 = vmand %vm1662, %vm1025
      %v1763 = vld [vmem:[#allocation4] sm:$0x2]
      %v1764 = vsel %vm1762, %v1760, %v1763
      %1765 = vst [vmem:[#allocation4] sm:$0x2] %v1764
      %v1766 = vld [vmem:[#allocation3 + $0x4] sm:$0x8]
      %v1768 = vrot.slane %v1766, 6
      %v1769 = vrot.slane %v1768, 4
      %1770 = vrot.lane.b32.xlu0 %v1769, 32
      %v1771 = vpop.permute.xlu0 %1770
      %vm1773 = vmand %vm1676, %vm1025
      %v1774 = vld [vmem:[#allocation4] sm:$0x2]
      %v1775 = vsel %vm1773, %v1771, %v1774
      %1776 = vst [vmem:[#allocation4] sm:$0x2] %v1775
      %v1777 = vld [vmem:[#allocation3 + $0x8] sm:$0x1]
      %v1779 = vshll.u32 %v1777, 16
      %v1781 = vrot.slane %v1779, 7
      %1782 = vrot.lane.b32.xlu0 %v1781, 64
      %v1783 = vpop.permute.xlu0 %1782
      %vm1785 = vmand %vm1688, %vm1025
      %v1786 = vld [vmem:[#allocation4] sm:$0x2]
      %v1787 = vsel %vm1785, %v1783, %v1786
      %1788 = vst [vmem:[#allocation4] sm:$0x2] %v1787
      %v1789 = vld [vmem:[#allocation3 + $0x8] sm:$0x4]
      %v1791 = vrot.slane %v1789, 5
      %v1792 = vrot.slane %v1791, 4
      %1793 = vrot.lane.b32.xlu0 %v1792, 96
      %v1794 = vpop.permute.xlu0 %1793
      %vm1796 = vmand %vm1702, %vm1025
      %v1797 = vld [vmem:[#allocation4] sm:$0x2]
      %v1798 = vsel %vm1796, %v1794, %v1797
      %1799 = vst [vmem:[#allocation4] sm:$0x2] %v1798
      %v1800 = vld [vmem:[#allocation3 + $0x8] sm:$0x8]
      %v1802 = vshll.u32 %v1800, 16
      %v1804 = vrot.slane %v1802, 6
      %v1805 = vrot.slane %v1804, 4
      %v1807 = vld [vmem:[#allocation4 + $0x4] sm:$0x2]
      %v1808 = vsel %vm1762, %v1805, %v1807
      %1809 = vst [vmem:[#allocation4 + $0x4] sm:$0x2] %v1808
      %v1810 = vld [vmem:[#allocation3 + $0x8] sm:$0x8]
      %v1812 = vrot.slane %v1810, 6
      %v1813 = vrot.slane %v1812, 4
      %1814 = vrot.lane.b32.xlu0 %v1813, 32
      %v1815 = vpop.permute.xlu0 %1814
      %v1817 = vld [vmem:[#allocation4 + $0x4] sm:$0x2]
      %v1818 = vsel %vm1773, %v1815, %v1817
      %1819 = vst [vmem:[#allocation4 + $0x4] sm:$0x2] %v1818
      %v1820 = vld [vmem:[#allocation3 + $0xc] sm:$0x4]
      %v1822 = vshll.u32 %v1820, 16
      %v1824 = vrot.slane %v1822, 5
      %v1825 = vrot.slane %v1824, 4
      %1826 = vrot.lane.b32.xlu0 %v1825, 64
      %v1827 = vpop.permute.xlu0 %1826
      %v1829 = vld [vmem:[#allocation4 + $0x4] sm:$0x2]
      %v1830 = vsel %vm1785, %v1827, %v1829
      %1831 = vst [vmem:[#allocation4 + $0x4] sm:$0x2] %v1830
      %v1832 = vld [vmem:[#allocation3 + $0xc] sm:$0x4]
      %v1834 = vrot.slane %v1832, 5
      %v1835 = vrot.slane %v1834, 4
      %1836 = vrot.lane.b32.xlu0 %v1835, 96
      %v1837 = vpop.permute.xlu0 %1836
      %v1839 = vld [vmem:[#allocation4 + $0x4] sm:$0x2]
      %v1840 = vsel %vm1796, %v1837, %v1839
      %1841 = vst [vmem:[#allocation4 + $0x4] sm:$0x2] %v1840
      %v1842 = vld [vmem:[#allocation3 + $0xc] sm:$0x8]
      %v1844 = vshll.u32 %v1842, 16
      %v1846 = vrot.slane %v1844, 6
      %v1847 = vrot.slane %v1846, 4
      %v1849 = vld [vmem:[#allocation4 + $0x8] sm:$0x2]
      %v1850 = vsel %vm1762, %v1847, %v1849
      %1851 = vst [vmem:[#allocation4 + $0x8] sm:$0x2] %v1850
      %v1852 = vld [vmem:[#allocation3 + $0x8] sm:$0x1]
      %v1854 = vrot.slane %v1852, 6
      %vm1856 = vcmask 256002
      %vm1857 = vmand %vm1856, %vm487
      %v1858 = vld [vmem:[#allocation4] sm:$0x4]
      %v1859 = vsel %vm1857, %v1854, %v1858
      %1860 = vst [vmem:[#allocation4] sm:$0x4] %v1859
      %v1861 = vld [vmem:[#allocation3 + $0x8] sm:$0x1]
      %v1863 = vshrl.u32 %v1861, 16
      %v1865 = vrot.slane %v1863, 6
      %1866 = vrot.lane.b32.xlu0 %v1865, 32
      %v1867 = vpop.permute.xlu0 %1866
      %vm1869 = vcmask 518402
      %vm1870 = vmand %vm1869, %vm487
      %v1871 = vld [vmem:[#allocation4] sm:$0x4]
      %v1872 = vsel %vm1870, %v1867, %v1871
      %1873 = vst [vmem:[#allocation4] sm:$0x4] %v1872
      %v1874 = vld [vmem:[#allocation3 + $0x8] sm:$0x2]
      %v1876 = vrot.slane %v1874, 7
      %1877 = vrot.lane.b32.xlu0 %v1876, 64
      %v1878 = vpop.permute.xlu0 %1877
      %vm1880 = vcmask 780802
      %vm1881 = vmand %vm1880, %vm487
      %v1882 = vld [vmem:[#allocation4] sm:$0x4]
      %v1883 = vsel %vm1881, %v1878, %v1882
      %1884 = vst [vmem:[#allocation4] sm:$0x4] %v1883
      %v1885 = vld [vmem:[#allocation3 + $0x8] sm:$0x8]
      %v1887 = vshrl.u32 %v1885, 16
      %v1889 = vrot.slane %v1887, 5
      %v1890 = vrot.slane %v1889, 4
      %1891 = vrot.lane.b32.xlu0 %v1890, 96
      %v1892 = vpop.permute.xlu0 %1891
      %vm1894 = vcmask 1043202
      %vm1895 = vmand %vm1894, %vm487
      %v1896 = vld [vmem:[#allocation4] sm:$0x4]
      %v1897 = vsel %vm1895, %v1892, %v1896
      %1898 = vst [vmem:[#allocation4] sm:$0x4] %v1897
      %v1899 = vld [vmem:[#allocation3 + $0xc] sm:$0x1]
      %v1901 = vrot.slane %v1899, 6
      %v1903 = vld [vmem:[#allocation4 + $0x4] sm:$0x4]
      %v1904 = vsel %vm1857, %v1901, %v1903
      %1905 = vst [vmem:[#allocation4 + $0x4] sm:$0x4] %v1904
      %v1906 = vld [vmem:[#allocation3 + $0xc] sm:$0x1]
      %v1908 = vshrl.u32 %v1906, 16
      %v1910 = vrot.slane %v1908, 6
      %1911 = vrot.lane.b32.xlu0 %v1910, 32
      %v1912 = vpop.permute.xlu0 %1911
      %v1914 = vld [vmem:[#allocation4 + $0x4] sm:$0x4]
      %v1915 = vsel %vm1870, %v1912, %v1914
      %1916 = vst [vmem:[#allocation4 + $0x4] sm:$0x4] %v1915
      %v1917 = vld [vmem:[#allocation3 + $0xc] sm:$0x8]
      %v1919 = vrot.slane %v1917, 5
      %v1920 = vrot.slane %v1919, 4
      %1921 = vrot.lane.b32.xlu0 %v1920, 64
      %v1922 = vpop.permute.xlu0 %1921
      %v1924 = vld [vmem:[#allocation4 + $0x4] sm:$0x4]
      %v1925 = vsel %vm1881, %v1922, %v1924
      %1926 = vst [vmem:[#allocation4 + $0x4] sm:$0x4] %v1925
      %v1927 = vld [vmem:[#allocation3 + $0xc] sm:$0x8]
      %v1929 = vshrl.u32 %v1927, 16
      %v1931 = vrot.slane %v1929, 5
      %v1932 = vrot.slane %v1931, 4
      %1933 = vrot.lane.b32.xlu0 %v1932, 96
      %v1934 = vpop.permute.xlu0 %1933
      %v1936 = vld [vmem:[#allocation4 + $0x4] sm:$0x4]
      %v1937 = vsel %vm1895, %v1934, %v1936
      %1938 = vst [vmem:[#allocation4 + $0x4] sm:$0x4] %v1937
      %v1939 = vld [vmem:[#allocation3 + $0x10] sm:$0x1]
      %v1941 = vrot.slane %v1939, 6
      %v1943 = vld [vmem:[#allocation4 + $0x8] sm:$0x4]
      %v1944 = vsel %vm1857, %v1941, %v1943
      %1945 = vst [vmem:[#allocation4 + $0x8] sm:$0x4] %v1944
      %v1946 = vld [vmem:[#allocation3 + $0x8] sm:$0x2]
      %v1948 = vshll.u32 %v1946, 16
      %v1950 = vrot.slane %v1948, 7
      %vm1952 = vmand %vm1856, %vm663
      %v1953 = vld [vmem:[#allocation4] sm:$0x4]
      %v1954 = vsel %vm1952, %v1950, %v1953
      %1955 = vst [vmem:[#allocation4] sm:$0x4] %v1954
      %v1956 = vld [vmem:[#allocation3 + $0x8] sm:$0x2]
      %v1958 = vrot.slane %v1956, 7
      %1959 = vrot.lane.b32.xlu0 %v1958, 32
      %v1960 = vpop.permute.xlu0 %1959
      %vm1962 = vmand %vm1869, %vm663
      %v1963 = vld [vmem:[#allocation4] sm:$0x4]
      %v1964 = vsel %vm1962, %v1960, %v1963
      %1965 = vst [vmem:[#allocation4] sm:$0x4] %v1964
      %v1966 = vld [vmem:[#allocation3 + $0x8] sm:$0x4]
      %v1968 = vshll.u32 %v1966, 16
      %1970 = vrot.lane.b32.xlu0 %v1968, 64
      %v1971 = vpop.permute.xlu0 %1970
      %vm1973 = vmand %vm1880, %vm663
      %v1974 = vld [vmem:[#allocation4] sm:$0x4]
      %v1975 = vsel %vm1973, %v1971, %v1974
      %1976 = vst [vmem:[#allocation4] sm:$0x4] %v1975
      %v1977 = vld [vmem:[#allocation3 + $0xc] sm:$0x1]
      %v1979 = vrot.slane %v1977, 6
      %1980 = vrot.lane.b32.xlu0 %v1979, 96
      %v1981 = vpop.permute.xlu0 %1980
      %vm1983 = vmand %vm1894, %vm663
      %v1984 = vld [vmem:[#allocation4] sm:$0x4]
      %v1985 = vsel %vm1983, %v1981, %v1984
      %1986 = vst [vmem:[#allocation4] sm:$0x4] %v1985
      %v1987 = vld [vmem:[#allocation3 + $0xc] sm:$0x2]
      %v1989 = vshll.u32 %v1987, 16
      %v1991 = vrot.slane %v1989, 7
      %v1993 = vld [vmem:[#allocation4 + $0x4] sm:$0x4]
      %v1994 = vsel %vm1952, %v1991, %v1993
      %1995 = vst [vmem:[#allocation4 + $0x4] sm:$0x4] %v1994
      %v1996 = vld [vmem:[#allocation3 + $0xc] sm:$0x2]
      %v1998 = vrot.slane %v1996, 7
      %1999 = vrot.lane.b32.xlu0 %v1998, 32
      %v2000 = vpop.permute.xlu0 %1999
      %v2002 = vld [vmem:[#allocation4 + $0x4] sm:$0x4]
      %v2003 = vsel %vm1962, %v2000, %v2002
      %2004 = vst [vmem:[#allocation4 + $0x4] sm:$0x4] %v2003
      %v2005 = vld [vmem:[#allocation3 + $0x10] sm:$0x1]
      %v2007 = vshll.u32 %v2005, 16
      %v2009 = vrot.slane %v2007, 6
      %2010 = vrot.lane.b32.xlu0 %v2009, 64
      %v2011 = vpop.permute.xlu0 %2010
      %v2013 = vld [vmem:[#allocation4 + $0x4] sm:$0x4]
      %v2014 = vsel %vm1973, %v2011, %v2013
      %2015 = vst [vmem:[#allocation4 + $0x4] sm:$0x4] %v2014
      %v2016 = vld [vmem:[#allocation3 + $0x10] sm:$0x1]
      %v2018 = vrot.slane %v2016, 6
      %2019 = vrot.lane.b32.xlu0 %v2018, 96
      %v2020 = vpop.permute.xlu0 %2019
      %v2022 = vld [vmem:[#allocation4 + $0x4] sm:$0x4]
      %v2023 = vsel %vm1983, %v2020, %v2022
      %2024 = vst [vmem:[#allocation4 + $0x4] sm:$0x4] %v2023
      %v2025 = vld [vmem:[#allocation3 + $0x10] sm:$0x2]
      %v2027 = vshll.u32 %v2025, 16
      %v2029 = vrot.slane %v2027, 7
      %v2031 = vld [vmem:[#allocation4 + $0x8] sm:$0x4]
      %v2032 = vsel %vm1952, %v2029, %v2031
      %2033 = vst [vmem:[#allocation4 + $0x8] sm:$0x4] %v2032
      %v2034 = vld [vmem:[#allocation3 + $0xc] sm:$0x4]
      %v2036 = vrot.slane %v2034, 7
      %vm2038 = vcmask 257027
      %vm2039 = vmand %vm2038, %vm174
      %v2040 = vld [vmem:[#allocation4] sm:$0x8]
      %v2041 = vsel %vm2039, %v2036, %v2040
      %2042 = vst [vmem:[#allocation4] sm:$0x8] %v2041
      %v2043 = vld [vmem:[#allocation3 + $0xc] sm:$0x4]
      %v2045 = vshrl.u32 %v2043, 16
      %v2047 = vrot.slane %v2045, 7
      %2048 = vrot.lane.b32.xlu0 %v2047, 32
      %v2049 = vpop.permute.xlu0 %2048
      %vm2051 = vcmask 519427
      %vm2052 = vmand %vm2051, %vm174
      %v2053 = vld [vmem:[#allocation4] sm:$0x8]
      %v2054 = vsel %vm2052, %v2049, %v2053
      %2055 = vst [vmem:[#allocation4] sm:$0x8] %v2054
      %v2056 = vld [vmem:[#allocation3 + $0xc] sm:$0x8]
      %2058 = vrot.lane.b32.xlu0 %v2056, 64
      %v2059 = vpop.permute.xlu0 %2058
      %vm2061 = vcmask 781827
      %vm2062 = vmand %vm2061, %vm174
      %v2063 = vld [vmem:[#allocation4] sm:$0x8]
      %v2064 = vsel %vm2062, %v2059, %v2063
      %2065 = vst [vmem:[#allocation4] sm:$0x8] %v2064
      %v2066 = vld [vmem:[#allocation3 + $0x10] sm:$0x2]
      %v2068 = vshrl.u32 %v2066, 16
      %v2070 = vrot.slane %v2068, 6
      %2071 = vrot.lane.b32.xlu0 %v2070, 96
      %v2072 = vpop.permute.xlu0 %2071
      %vm2074 = vcmask 1044227
      %vm2075 = vmand %vm2074, %vm174
      %v2076 = vld [vmem:[#allocation4] sm:$0x8]
      %v2077 = vsel %vm2075, %v2072, %v2076
      %2078 = vst [vmem:[#allocation4] sm:$0x8] %v2077
      %v2079 = vld [vmem:[#allocation3 + $0x10] sm:$0x4]
      %v2081 = vrot.slane %v2079, 7
      %v2083 = vld [vmem:[#allocation4 + $0x4] sm:$0x8]
      %v2084 = vsel %vm2039, %v2081, %v2083
      %2085 = vst [vmem:[#allocation4 + $0x4] sm:$0x8] %v2084
      %v2086 = vld [vmem:[#allocation3 + $0x10] sm:$0x4]
      %v2088 = vshrl.u32 %v2086, 16
      %v2090 = vrot.slane %v2088, 7
      %2091 = vrot.lane.b32.xlu0 %v2090, 32
      %v2092 = vpop.permute.xlu0 %2091
      %v2094 = vld [vmem:[#allocation4 + $0x4] sm:$0x8]
      %v2095 = vsel %vm2052, %v2092, %v2094
      %2096 = vst [vmem:[#allocation4 + $0x4] sm:$0x8] %v2095
      %v2097 = vld [vmem:[#allocation3 + $0x14] sm:$0x2]
      %v2099 = vrot.slane %v2097, 6
      %2100 = vrot.lane.b32.xlu0 %v2099, 64
      %v2101 = vpop.permute.xlu0 %2100
      %v2103 = vld [vmem:[#allocation4 + $0x4] sm:$0x8]
      %v2104 = vsel %vm2062, %v2101, %v2103
      %2105 = vst [vmem:[#allocation4 + $0x4] sm:$0x8] %v2104
      %v2106 = vld [vmem:[#allocation3 + $0x14] sm:$0x2]
      %v2108 = vshrl.u32 %v2106, 16
      %v2110 = vrot.slane %v2108, 6
      %2111 = vrot.lane.b32.xlu0 %v2110, 96
      %v2112 = vpop.permute.xlu0 %2111
      %v2114 = vld [vmem:[#allocation4 + $0x4] sm:$0x8]
      %v2115 = vsel %vm2075, %v2112, %v2114
      %2116 = vst [vmem:[#allocation4 + $0x4] sm:$0x8] %v2115
      %v2117 = vld [vmem:[#allocation3 + $0x14] sm:$0x4]
      %v2119 = vrot.slane %v2117, 7
      %v2121 = vld [vmem:[#allocation4 + $0x8] sm:$0x8]
      %v2122 = vsel %vm2039, %v2119, %v2121
      %2123 = vst [vmem:[#allocation4 + $0x8] sm:$0x8] %v2122
      %v2124 = vld [vmem:[#allocation3 + $0xc] sm:$0x8]
      %v2126 = vshll.u32 %v2124, 16
      %vm2129 = vmand %vm2038, %vm301
      %v2130 = vld [vmem:[#allocation4] sm:$0x8]
      %v2131 = vsel %vm2129, %v2126, %v2130
      %2132 = vst [vmem:[#allocation4] sm:$0x8] %v2131
      %v2133 = vld [vmem:[#allocation3 + $0xc] sm:$0x8]
      %2135 = vrot.lane.b32.xlu0 %v2133, 32
      %v2136 = vpop.permute.xlu0 %2135
      %vm2138 = vmand %vm2051, %vm301
      %v2139 = vld [vmem:[#allocation4] sm:$0x8]
      %v2140 = vsel %vm2138, %v2136, %v2139
      %2141 = vst [vmem:[#allocation4] sm:$0x8] %v2140
      %v2142 = vld [vmem:[#allocation3 + $0x10] sm:$0x1]
      %v2144 = vshll.u32 %v2142, 16
      %v2146 = vrot.slane %v2144, 5
      %2147 = vrot.lane.b32.xlu0 %v2146, 64
      %v2148 = vpop.permute.xlu0 %2147
      %vm2150 = vmand %vm2061, %vm301
      %v2151 = vld [vmem:[#allocation4] sm:$0x8]
      %v2152 = vsel %vm2150, %v2148, %v2151
      %2153 = vst [vmem:[#allocation4] sm:$0x8] %v2152
      %v2154 = vld [vmem:[#allocation3 + $0x10] sm:$0x4]
      %v2156 = vrot.slane %v2154, 7
      %2157 = vrot.lane.b32.xlu0 %v2156, 96
      %v2158 = vpop.permute.xlu0 %2157
      %vm2160 = vmand %vm2074, %vm301
      %v2161 = vld [vmem:[#allocation4] sm:$0x8]
      %v2162 = vsel %vm2160, %v2158, %v2161
      %2163 = vst [vmem:[#allocation4] sm:$0x8] %v2162
      %v2164 = vld [vmem:[#allocation3 + $0x10] sm:$0x8]
      %v2166 = vshll.u32 %v2164, 16
      %v2169 = vld [vmem:[#allocation4 + $0x4] sm:$0x8]
      %v2170 = vsel %vm2129, %v2166, %v2169
      %2171 = vst [vmem:[#allocation4 + $0x4] sm:$0x8] %v2170
      %v2172 = vld [vmem:[#allocation3 + $0x10] sm:$0x8]
      %2174 = vrot.lane.b32.xlu0 %v2172, 32
      %v2175 = vpop.permute.xlu0 %2174
      %v2177 = vld [vmem:[#allocation4 + $0x4] sm:$0x8]
      %v2178 = vsel %vm2138, %v2175, %v2177
      %2179 = vst [vmem:[#allocation4 + $0x4] sm:$0x8] %v2178
      %v2180 = vld [vmem:[#allocation3 + $0x14] sm:$0x4]
      %v2182 = vshll.u32 %v2180, 16
      %v2184 = vrot.slane %v2182, 7
      %2185 = vrot.lane.b32.xlu0 %v2184, 64
      %v2186 = vpop.permute.xlu0 %2185
      %v2188 = vld [vmem:[#allocation4 + $0x4] sm:$0x8]
      %v2189 = vsel %vm2150, %v2186, %v2188
      %2190 = vst [vmem:[#allocation4 + $0x4] sm:$0x8] %v2189
      %v2191 = vld [vmem:[#allocation3 + $0x14] sm:$0x4]
      %v2193 = vrot.slane %v2191, 7
      %2194 = vrot.lane.b32.xlu0 %v2193, 96
      %v2195 = vpop.permute.xlu0 %2194
      %v2197 = vld [vmem:[#allocation4 + $0x4] sm:$0x8]
      %v2198 = vsel %vm2160, %v2195, %v2197
      %2199 = vst [vmem:[#allocation4 + $0x4] sm:$0x8] %v2198
      %v2200 = vld [vmem:[#allocation3 + $0x14] sm:$0x8]
      %v2202 = vshll.u32 %v2200, 16
      %v2205 = vld [vmem:[#allocation4 + $0x8] sm:$0x8]
      %v2206 = vsel %vm2129, %v2202, %v2205
      %2207 = vst [vmem:[#allocation4 + $0x8] sm:$0x8] %v2206
      %v2208 = vld [vmem:[#allocation3 + $0x10] sm:$0x1]
      %v2209 = vld [vmem:[#allocation4 + $0xc] sm:$0x1]
      %v2210 = vsel %vm1474, %v2208, %v2209
      %2211 = vst [vmem:[#allocation4 + $0xc] sm:$0x1] %v2210
      %v2212 = vld [vmem:[#allocation3 + $0x10] sm:$0x1]
      %v2214 = vshrl.u32 %v2212, 16
      %v2216 = vrot.slane %v2214, 4
      %v2217 = vrot.slane %v2216, 4
      %2218 = vrot.lane.b32.xlu0 %v2217, 32
      %v2219 = vpop.permute.xlu0 %2218
      %v2221 = vld [vmem:[#allocation4 + $0xc] sm:$0x1]
      %v2222 = vsel %vm1492, %v2219, %v2221
      %2223 = vst [vmem:[#allocation4 + $0xc] sm:$0x1] %v2222
      %v2224 = vld [vmem:[#allocation3 + $0x10] sm:$0x2]
      %v2226 = vrot.slane %v2224, 5
      %v2227 = vrot.slane %v2226, 4
      %2228 = vrot.lane.b32.xlu0 %v2227, 64
      %v2229 = vpop.permute.xlu0 %2228
      %v2231 = vld [vmem:[#allocation4 + $0xc] sm:$0x1]
      %v2232 = vsel %vm1504, %v2229, %v2231
      %2233 = vst [vmem:[#allocation4 + $0xc] sm:$0x1] %v2232
      %v2234 = vld [vmem:[#allocation3 + $0x10] sm:$0x8]
      %v2236 = vshrl.u32 %v2234, 16
      %v2238 = vrot.slane %v2236, 7
      %v2239 = vrot.slane %v2238, 4
      %2240 = vrot.lane.b32.xlu0 %v2239, 96
      %v2241 = vpop.permute.xlu0 %2240
      %v2243 = vld [vmem:[#allocation4 + $0xc] sm:$0x1]
      %v2244 = vsel %vm1518, %v2241, %v2243
      %2245 = vst [vmem:[#allocation4 + $0xc] sm:$0x1] %v2244
      %v2246 = vld [vmem:[#allocation3 + $0x14] sm:$0x1]
      %v2247 = vld [vmem:[#allocation4 + $0x10] sm:$0x1]
      %v2248 = vsel %vm1474, %v2246, %v2247
      %2249 = vst [vmem:[#allocation4 + $0x10] sm:$0x1] %v2248
      %v2250 = vld [vmem:[#allocation3 + $0x14] sm:$0x1]
      %v2252 = vshrl.u32 %v2250, 16
      %v2254 = vrot.slane %v2252, 4
      %v2255 = vrot.slane %v2254, 4
      %2256 = vrot.lane.b32.xlu0 %v2255, 32
      %v2257 = vpop.permute.xlu0 %2256
      %v2259 = vld [vmem:[#allocation4 + $0x10] sm:$0x1]
      %v2260 = vsel %vm1492, %v2257, %v2259
      %2261 = vst [vmem:[#allocation4 + $0x10] sm:$0x1] %v2260
      %v2262 = vld [vmem:[#allocation3 + $0x14] sm:$0x8]
      %v2264 = vrot.slane %v2262, 7
      %v2265 = vrot.slane %v2264, 4
      %2266 = vrot.lane.b32.xlu0 %v2265, 64
      %v2267 = vpop.permute.xlu0 %2266
      %v2269 = vld [vmem:[#allocation4 + $0x10] sm:$0x1]
      %v2270 = vsel %vm1504, %v2267, %v2269
      %2271 = vst [vmem:[#allocation4 + $0x10] sm:$0x1] %v2270
      %v2272 = vld [vmem:[#allocation3 + $0x14] sm:$0x8]
      %v2274 = vshrl.u32 %v2272, 16
      %v2276 = vrot.slane %v2274, 7
      %v2277 = vrot.slane %v2276, 4
      %2278 = vrot.lane.b32.xlu0 %v2277, 96
      %v2279 = vpop.permute.xlu0 %2278
      %v2281 = vld [vmem:[#allocation4 + $0x10] sm:$0x1]
      %v2282 = vsel %vm1518, %v2279, %v2281
      %2283 = vst [vmem:[#allocation4 + $0x10] sm:$0x1] %v2282
      %v2284 = vld [vmem:[#allocation3 + $0x18] sm:$0x1]
      %v2285 = vld [vmem:[#allocation4 + $0x14] sm:$0x1]
      %v2286 = vsel %vm1474, %v2284, %v2285
      %2287 = vst [vmem:[#allocation4 + $0x14] sm:$0x1] %v2286
      %v2288 = vld [vmem:[#allocation4] sm:$0xff]
      %v2289 = vld [vmem:[#allocation4 + $0x8] sm:$0xf]
      %v2290 = vld [vmem:[#allocation4 + $0xc] sm:$0x11]
      %v2291 = vld [vmem:[#allocation4 + $0x14] sm:$0x1]
      %v2292 = vld [vmem:[%s2] sm:$0xf]
      %v2293 = vld [vmem:[%s2 + $0x4] sm:$0xf]
      %v2294 = vld [vmem:[%s2 + $0x8] sm:$0xf]
      %v2295 = vld [vmem:[%s2 + $0xc] sm:$0xf]
      %v2296 = vld [vmem:[%s2 + $0x10] sm:$0xf]
      %v2297 = vld [vmem:[%s2 + $0x14] sm:$0xf]
      %v2298 = vld [vmem:[%s2 + $0x18] sm:$0xf]
      %v2299 = vld [vmem:[%s2 + $0x1c] sm:$0xf]
      %v2300 = vld [vmem:[%s2 + $0x20] sm:$0xf]
      %v2301 = vld [vmem:[%s2 + $0x24] sm:$0xf]
      %v2302 = vld [vmem:[%s2 + $0x28] sm:$0xf]
      %v2303 = vld [vmem:[%s2 + $0x2c] sm:$0xf]
      %v2304 = vld [vmem:[%s2 + $0x30] sm:$0xf]
      %v2305 = vld [vmem:[%s2 + $0x34] sm:$0xf]
      %v2306 = vld [vmem:[%s2 + $0x38] sm:$0xf]
      %v2307 = vld [vmem:[%s2 + $0x3c] sm:$0xf]
      %v2308 = vld [vmem:[%s2 + $0x40] sm:$0xf]
      %v2309 = vld [vmem:[%s2 + $0x44] sm:$0xf]
      %v2310 = vld [vmem:[%s2 + $0x48] sm:$0xf]
      %v2311 = vld [vmem:[%s2 + $0x4c] sm:$0xf]
      %v2312 = vld [vmem:[%s2 + $0x50] sm:$0xf]
      %v2313 = vld [vmem:[%s2 + $0x54] sm:$0xf]
      %v2314 = vld [vmem:[%s2 + $0x58] sm:$0xf]
      %v2315 = vld [vmem:[%s2 + $0x5c] sm:$0xf]
      %v2316 = vld [vmem:[%s2 + $0x60] sm:$0xf]
      %v2317 = vld [vmem:[%s2 + $0x64] sm:$0xf]
      %v2318 = vld [vmem:[%s2 + $0x68] sm:$0xf]
      %v2319 = vld [vmem:[%s2 + $0x6c] sm:$0xf]
      %v2320 = vld [vmem:[%s2 + $0x70] sm:$0xf]
      %v2321 = vld [vmem:[%s2 + $0x74] sm:$0xf]
      %v2322 = vld [vmem:[%s2 + $0x78] sm:$0xf]
      %v2323 = vld [vmem:[%s2 + $0x7c] sm:$0xf]
      %v2324 = vld [vmem:[%s2 + $0x80] sm:$0xf]
      %v2325 = vld [vmem:[%s2 + $0x84] sm:$0xf]
      %v2326 = vld [vmem:[%s2 + $0x88] sm:$0xf]
      %v2327 = vld [vmem:[%s2 + $0x8c] sm:$0xf]
      %v2332 = vunpack.c.l.b16 %v2288
      %v2333 = vunpack.c.h.b16 %v2288
      %v2334 = vunpack.c.l.b16 %v2289
      %v2335 = vunpack.c.l.b16 %v2290
      %v2336 = vunpack.c.h.b16 %v2290
      %v2337 = vunpack.c.l.b16 %v2291
      %v2338 = vpack.c.b16 %v2335, %v2332
      %v2339 = vpack.c.b16 %v2336, %v2333
      %v2340 = vpack.c.b16 %v2337, %v2334
      %v2379 = vunpack.c.l.b16 %v2292
      %v2380 = vunpack.c.l.b16 %v2293
      %v2381 = vunpack.c.l.b16 %v2294
      %v2382 = vunpack.c.l.b16 %v2295
      %v2383 = vunpack.c.l.b16 %v2296
      %v2384 = vunpack.c.l.b16 %v2297
      %v2385 = vunpack.c.l.b16 %v2298
      %v2386 = vunpack.c.l.b16 %v2299
      %v2387 = vunpack.c.l.b16 %v2300
      %v2388 = vunpack.c.l.b16 %v2301
      %v2389 = vunpack.c.l.b16 %v2302
      %v2390 = vunpack.c.l.b16 %v2303
      %v2391 = vunpack.c.l.b16 %v2304
      %v2392 = vunpack.c.l.b16 %v2305
      %v2393 = vunpack.c.l.b16 %v2306
      %v2394 = vunpack.c.l.b16 %v2307
      %v2395 = vunpack.c.l.b16 %v2308
      %v2396 = vunpack.c.l.b16 %v2309
      %v2397 = vunpack.c.l.b16 %v2310
      %v2398 = vunpack.c.l.b16 %v2311
      %v2399 = vunpack.c.l.b16 %v2312
      %v2400 = vunpack.c.l.b16 %v2313
      %v2401 = vunpack.c.l.b16 %v2314
      %v2402 = vunpack.c.l.b16 %v2315
      %v2403 = vunpack.c.l.b16 %v2316
      %v2404 = vunpack.c.l.b16 %v2317
      %v2405 = vunpack.c.l.b16 %v2318
      %v2406 = vunpack.c.l.b16 %v2319
      %v2407 = vunpack.c.l.b16 %v2320
      %v2408 = vunpack.c.l.b16 %v2321
      %v2409 = vunpack.c.l.b16 %v2322
      %v2410 = vunpack.c.l.b16 %v2323
      %v2411 = vunpack.c.l.b16 %v2324
      %v2412 = vunpack.c.l.b16 %v2325
      %v2413 = vunpack.c.l.b16 %v2326
      %v2414 = vunpack.c.l.b16 %v2327
      %v2415 = vpack.c.b16 %v2380, %v2379
      %v2416 = vpack.c.b16 %v2382, %v2381
      %v2417 = vpack.c.b16 %v2384, %v2383
      %v2418 = vpack.c.b16 %v2386, %v2385
      %v2419 = vpack.c.b16 %v2388, %v2387
      %v2420 = vpack.c.b16 %v2390, %v2389
      %v2421 = vpack.c.b16 %v2392, %v2391
      %v2422 = vpack.c.b16 %v2394, %v2393
      %v2423 = vpack.c.b16 %v2396, %v2395
      %v2424 = vpack.c.b16 %v2398, %v2397
      %v2425 = vpack.c.b16 %v2400, %v2399
      %v2426 = vpack.c.b16 %v2402, %v2401
      %v2427 = vpack.c.b16 %v2404, %v2403
      %v2428 = vpack.c.b16 %v2406, %v2405
      %v2429 = vpack.c.b16 %v2408, %v2407
      %v2430 = vpack.c.b16 %v2410, %v2409
      %v2431 = vpack.c.b16 %v2412, %v2411
      %v2432 = vpack.c.b16 %v2414, %v2413
      %vm2451 = vcmask 261120
      %v2453 = vsel %vm2451, %v2340, 0
      %2455 = vmatpush.bf16.msra.mxu0 %v2422
      %2456 = vmatpush.bf16.msra.mxu0 %v2421
      %2457 = vmatpush.bf16.msra.mxu0 %v2420
      %2458 = vmatpush.bf16.msra.mxu0 %v2419
      %2459 = vmatpush.bf16.msra.mxu0 %v2418
      %2460 = vmatpush.bf16.msra.mxu0 %v2417
      %2461 = vmatpush.bf16.msra.mxu0 %v2416
      %2462 = vmatpush.bf16.msra.mxu0 %v2415
      %2463 = vmatmul.bf16.gmra.mxu0 %v2338
      %v2464 = vpop.f32.mrf.mxu0
      %v2465 = vadd.f32 0.0, %v2464
      %v2466 = vpop.f32.mrf.mxu0
      %v2467 = vadd.f32 0.0, %v2466
      %2468 = vdwg.mxu0
      %2469 = vmatpush.bf16.msra.mxu0 %v2430
      %2470 = vmatpush.bf16.msra.mxu0 %v2429
      %2471 = vmatpush.bf16.msra.mxu0 %v2428
      %2472 = vmatpush.bf16.msra.mxu0 %v2427
      %2473 = vmatpush.bf16.msra.mxu0 %v2426
      %2474 = vmatpush.bf16.msra.mxu0 %v2425
      %2475 = vmatpush.bf16.msra.mxu0 %v2424
      %2476 = vmatpush.bf16.msra.mxu0 %v2423
      %2477 = vmatmul.bf16.gmra.mxu0 %v2339
      %v2478 = vpop.f32.mrf.mxu0
      %v2479 = vadd.f32 %v2465, %v2478
      %v2480 = vpop.f32.mrf.mxu0
      %v2481 = vadd.f32 %v2467, %v2480
      %2482 = vdwg.mxu0
      %2483 = vmatpush.bf16.msra.mxu0 0
      %2484 = vmatpush.bf16.msra.mxu0 0
      %2485 = vmatpush.bf16.msra.mxu0 0
      %2486 = vmatpush.bf16.msra.mxu0 0
      %2487 = vmatpush.bf16.msra.mxu0 0
      %2488 = vmatpush.bf16.msra.mxu0 0
      %2489 = vmatpush.bf16.msra.mxu0 %v2432
      %2490 = vmatpush.bf16.msra.mxu0 %v2431
      %2491 = vmatmul.bf16.gmra.mxu0 %v2453
      %v2492 = vpop.f32.mrf.mxu0
      %v2493 = vadd.f32 %v2479, %v2492
      %v2494 = vpop.f32.mrf.mxu0
      %v2495 = vadd.f32 %v2481, %v2494
      %2496 = vdwg.mxu0
      %2497 = vst.msk [vmem:[%s170] sm:$0xff] %vm2451, %v2493
      %vm2498 = vcmask 253952
      %2499 = vst.msk [vmem:[%s170 + $0x8] sm:$0x1] %vm2498, %v2495
      %p2500 = scmp.lt.s32.totalorder %s14, 1
      %s2501 = scalar_select %p2500, %s14, 1
      %s2502 = smul.addr %s2501, 2
      %s2503 = smul.addr %s2502, 8
      %s2504 = scalar_lea.vmem %s3, %s2503
      // Predicated region
      $region33: #{a_call__.1} parent=31 // pred_check
        %p2505 = pneg %p100
      $region34: #{a_call__.1} parent=31 // pred_check_branch
        %2507 = sbr.rel (%p2505) target = $region36
      $region35: #{a_call__.1} parent=31 // pred_region
        _
      $region36: #{a_call__.1} parent=31 // pred_fallthru
        _
    $region32: #{a_call__.1} parent=5 // pred_fallthru
      _
    %p2508 = scmp.le.s32.totalorder 2, %s9
    // Predicated region
    $region37: #{a_call__.1} parent=5 // pred_check
      %p2509 = pneg %p2508
    $region38: #{a_call__.1} parent=5 // pred_check_branch
      %2511 = sbr.rel (%p2509) target = $region40
    $region39: #{a_call__.1} parent=5 // pred_region
      %s2512 = ssub.s32 %s9, 2
      // Predicated region
      $region41: #{a_call__.1} parent=39 // pred_check
        %p2513 = pneg %p106
      $region42: #{a_call__.1} parent=39 // pred_check_branch
        %2515 = sbr.rel (%p2513) target = $region44
      $region43: #{a_call__.1} parent=39 // pred_region
        %p2516 = scmp.lt.s32.totalorder %s15, 1
        %s2517 = scalar_select %p2516, %s15, 1
        %s2518 = smul.addr %s2517, 2
        %s2519 = smul.addr %s2518, 8
        %s2520 = scalar_lea.vmem %s3, %s2519
      $region44: #{a_call__.1} parent=39 // pred_fallthru
        _
    $region40: #{a_call__.1} parent=5 // pred_fallthru
      _
  $region6: #{a_call__.1} parent=0 // loop_footer
    %s13 = sadd.s32 1, %s9
  $region7: #{a_call__.1} parent=0 // loop_footer_branch
    %8 = sbr.rel target = $region3
  $region8: #{a_call__.1} parent=0 // loop_exit
    _

</llo_original>
